<compile_context>
chip_gen: v5e
topology: v5e:2x2
jax: 0.10.0
libtpu: 0.0.40
codegen_flags: <defaults>
</compile_context>

<pallas_src>
import math
import numpy as np

import jax
import jax.numpy as jnp
from jax import lax
from jax.experimental import pallas as pl
from jax.experimental.pallas import tpu as pltpu  # noqa: F401  (kept for optional CompilerParams)

# ---------------- model config (small, consistent with the module) -------------
B = 2            # batch
D_VOCAB = 32
D_SEQ = 8
D_EMB = 32
H = 4
D_K = D_EMB // H
D_FF = D_EMB * 2          # expansion_factor = 2
NUM_LAYERS = 2
LN_EPS = 1e-5


# ============================== in-kernel helpers ===============================

def _layernorm(x, g, b):
    mu = jnp.mean(x, axis=-1, keepdims=True)
    var = jnp.mean((x - mu) ** 2, axis=-1, keepdims=True)
    return (x - mu) * lax.rsqrt(var + LN_EPS) * g + b


def _mha(q_in, k_in, v_in, wqkv, bqkv, wo_t, bo):
    """Multi-head attention on flattened (B*S, E) activations.

    wqkv: (E, 3E) block-diagonal fused per-head weights, column order [q|k|v].
    bqkv: (1, 3E) head-tiled biases in the same order.
    wo_t: (E, E) pre-transposed output projection.  bo: (1, E).
    Softmax is over the head axis (replicating the PyTorch `dim=1` quirk).

    The `is` checks are trace-time: they pick the most fused projection matmul
    when key/query/value share the same traced input (self-attention or the
    decoder's key==query==enc case) without changing the math.
    """
    E = D_EMB
    if (q_in is k_in) and (k_in is v_in):
        qkv = jnp.dot(v_in, wqkv, preferred_element_type=jnp.float32) + bqkv
        q_all, k_all, v_all = qkv[:, 0:E], qkv[:, E:2 * E], qkv[:, 2 * E:3 * E]
    elif q_in is k_in:
        qk = (jnp.dot(q_in, wqkv[:, 0:2 * E], preferred_element_type=jnp.float32)
              + bqkv[:, 0:2 * E])
        q_all, k_all = qk[:, 0:E], qk[:, E:2 * E]
        v_all = (jnp.dot(v_in, wqkv[:, 2 * E:3 * E],
                         preferred_element_type=jnp.float32) + bqkv[:, 2 * E:3 * E])
    else:
        q_all = jnp.dot(q_in, wqkv[:, 0:E],
                        preferred_element_type=jnp.float32) + bqkv[:, 0:E]
        k_all = jnp.dot(k_in, wqkv[:, E:2 * E],
                        preferred_element_type=jnp.float32) + bqkv[:, E:2 * E]
        v_all = jnp.dot(v_in, wqkv[:, 2 * E:3 * E],
                        preferred_element_type=jnp.float32) + bqkv[:, 2 * E:3 * E]

    inv_sqrt_dk = 1.0 / math.sqrt(D_K)
    ctx_rows = []
    for b in range(B):                                   # B=2, static unroll
        rows = slice(b * D_SEQ, (b + 1) * D_SEQ)
        qb, kb, vb = q_all[rows], k_all[rows], v_all[rows]

        # per-head (S,S) score maps
        scores = []
        for h in range(H):
            cols = slice(h * D_K, (h + 1) * D_K)
            s_h = lax.dot_general(qb[:, cols], kb[:, cols],
                                  (((1,), (1,)), ((), ())),
                                  preferred_element_type=jnp.float32) * inv_sqrt_dk
            scores.append(s_h)

        # softmax across heads: one exp over a (S, H*S) tile, one approx recip
        m = scores[0]
        for h in range(1, H):
            m = jnp.maximum(m, scores[h])
        e_cat = jnp.exp(jnp.concatenate([s - m for s in scores], axis=-1))
        denom = e_cat[:, 0:D_SEQ]
        for h in range(1, H):
            denom = denom + e_cat[:, h * D_SEQ:(h + 1) * D_SEQ]
        inv = pl.reciprocal(denom, approx=True)          # (S, S)

        # per-head weighted values, concatenated over heads -> (S, E)
        head_outs = []
        for h in range(H):
            p_h = e_cat[:, h * D_SEQ:(h + 1) * D_SEQ] * inv
            head_outs.append(jnp.dot(p_h, vb[:, h * D_K:(h + 1) * D_K],
                                     preferred_element_type=jnp.float32))
        ctx_rows.append(jnp.concatenate(head_outs, axis=-1))

    concat = jnp.concatenate(ctx_rows, axis=0)           # (B*S, E)
    return jnp.dot(concat, wo_t, preferred_element_type=jnp.float32) + bo


# ================================ fused kernel ==================================

def decoder_fused_kernel(
    enc_ref, xemb_ref, pe_ref,
    wqkv_ref, bqkv_ref, wo_ref, bo_ref,
    lng_ref, lnb_ref,
    fw1_ref, fb1_ref, fw2_ref, fb2_ref,
    fcw_ref, fcb_ref,
    out_ref,
):
    enc = enc_ref[...]                                            # (B*S, E)
    # positional embedding:  x *= sqrt(E); x += pe
    x = xemb_ref[...] * math.sqrt(D_EMB) + pe_ref[...]            # (B*S, E)

    for l in range(NUM_LAYERS):                                   # static unroll
        # DecoderBlock: attention(key=enc, query=enc, value=x); mask is a no-op.
        attn1 = _mha(enc, enc, x,
                     wqkv_ref[2 * l], bqkv_ref[2 * l], wo_ref[2 * l], bo_ref[2 * l])
        out1 = _layernorm(attn1 + x, lng_ref[3 * l], lnb_ref[3 * l])

        # TransformerBlock(out1, out1, out1)
        attn2 = _mha(out1, out1, out1,
                     wqkv_ref[2 * l + 1], bqkv_ref[2 * l + 1],
                     wo_ref[2 * l + 1], bo_ref[2 * l + 1])
        t1 = _layernorm(attn2 + out1, lng_ref[3 * l + 1], lnb_ref[3 * l + 1])

        hidden = jnp.maximum(
            jnp.dot(t1, fw1_ref[l], preferred_element_type=jnp.float32) + fb1_ref[l],
            0.0)
        ff = jnp.dot(hidden, fw2_ref[l],
                     preferred_element_type=jnp.float32) + fb2_ref[l]
        x = _layernorm(ff + t1, lng_ref[3 * l + 2], lnb_ref[3 * l + 2])

    out_ref[...] = (jnp.dot(x, fcw_ref[...],
                            preferred_element_type=jnp.float32) + fcb_ref[...])


# ================================== wrapper =====================================

def decoder_forward_pallas(enc_out, token_ids, params):
    pk = params["packed"]
    # TODO(synk): embedding gather stays in plain JAX (pure indexing glue).
    x_emb = params["emb"][token_ids]                               # (B, S, E)
    x_emb_f = x_emb.reshape(B * D_SEQ, D_EMB)
    enc_f = enc_out.reshape(B * D_SEQ, D_EMB)

    out = pl.pallas_call(
        decoder_fused_kernel,
        out_shape=jax.ShapeDtypeStruct((B * D_SEQ, D_VOCAB), jnp.float32),
        # No grid / specs: single invocation, every operand resident in VMEM.
    )(enc_f, x_emb_f, pk["pe"],
      pk["wqkv"], pk["bqkv"], pk["wo_t"], pk["bo"],
      pk["ln_g"], pk["ln_b"],
      pk["fw1_t"], pk["fb1"], pk["fw2_t"], pk["fb2"],
      pk["fc_w_t"], pk["fc_b"])
    return out.reshape(B, D_SEQ, D_VOCAB)


# ======================= deterministic parameter init ===========================

def init_linear(key, out_dim, in_dim):
    kw, kb = jax.random.split(key)
    bound = 1.0 / math.sqrt(in_dim)
    w = jax.random.uniform(kw, (out_dim, in_dim), jnp.float32, -bound, bound)
    b = jax.random.uniform(kb, (out_dim,), jnp.float32, -bound, bound)
    return w, b


def init_mha(key):
    ks = jax.random.split(key, 4)
    wq, bq = init_linear(ks[0], D_K, D_K)
    wk, bk = init_linear(ks[1], D_K, D_K)
    wv, bv = init_linear(ks[2], D_K, D_K)
    wo, bo = init_linear(ks[3], D_EMB, D_EMB)
    return dict(wq=wq, bq=bq, wk=wk, bk=bk, wv=wv, bv=bv, wo=wo, bo=bo)


def init_decoder_layer(key):
    ks = jax.random.split(key, 4)
    mha1 = init_mha(ks[0])
    mha2 = init_mha(ks[1])
    fw1, fb1 = init_linear(ks[2], D_FF, D_EMB)
    fw2, fb2 = init_linear(ks[3], D_EMB, D_FF)
    ones = jnp.ones((D_EMB,), jnp.float32)
    zeros = jnp.zeros((D_EMB,), jnp.float32)
    return dict(mha1=mha1, mha2=mha2, fw1=fw1, fb1=fb1, fw2=fw2, fb2=fb2,
                g0=ones, b0=zeros, g1=ones, b1=zeros, g2=ones, b2=zeros)


def make_positional_encoding():
    pe = np.zeros((D_SEQ, D_EMB), dtype=np.float32)
    for pos in range(D_SEQ):
        for i in range(0, D_EMB, 2):
            pe[pos, i] = math.sin(pos / 10000 ** (2 * i / D_EMB))
            pe[pos, i + 1] = math.cos(pos / 10000 ** (2 * (i + 1) / D_EMB))
    return jnp.asarray(pe)


# ---- one-time packing: fuse per-head weights, stack layers, pre-transpose ------

def _pack_mha(m):
    eye = jnp.eye(H, dtype=jnp.float32)
    wq_bd = jnp.kron(eye, m["wq"].T)                     # (E, E) block-diag
    wk_bd = jnp.kron(eye, m["wk"].T)
    wv_bd = jnp.kron(eye, m["wv"].T)
    wqkv = jnp.concatenate([wq_bd, wk_bd, wv_bd], axis=1)          # (E, 3E)
    bqkv = jnp.concatenate([jnp.tile(m["bq"], H), jnp.tile(m["bk"], H),
                            jnp.tile(m["bv"], H)]).reshape(1, 3 * D_EMB)
    return wqkv, bqkv, m["wo"].T, m["bo"].reshape(1, D_EMB)


def pack_params(layers, fc_w, fc_b, pe):
    wqkv, bqkv, wo_t, bo = [], [], [], []
    ln_g, ln_b = [], []
    fw1_t, fb1, fw2_t, fb2 = [], [], [], []
    for lp in layers:
        for m in (lp["mha1"], lp["mha2"]):
            w, bq, wo, bo_ = _pack_mha(m)
            wqkv.append(w); bqkv.append(bq); wo_t.append(wo); bo.append(bo_)
        for g, bb in ((lp["g0"], lp["b0"]), (lp["g1"], lp["b1"]),
                      (lp["g2"], lp["b2"])):
            ln_g.append(g.reshape(1, -1)); ln_b.append(bb.reshape(1, -1))
        fw1_t.append(lp["fw1"].T); fb1.append(lp["fb1"].reshape(1, -1))
        fw2_t.append(lp["fw2"].T); fb2.append(lp["fb2"].reshape(1, -1))
    return dict(
        pe=jnp.tile(pe, (B, 1)),                         # (B*S, E)
        wqkv=jnp.stack(wqkv),                            # (2L, E, 3E)
        bqkv=jnp.stack(bqkv),                            # (2L, 1, 3E)
        wo_t=jnp.stack(wo_t),                            # (2L, E, E)
        bo=jnp.stack(bo),                                # (2L, 1, E)
        ln_g=jnp.stack(ln_g),                            # (3L, 1, E)
        ln_b=jnp.stack(ln_b),                            # (3L, 1, E)
        fw1_t=jnp.stack(fw1_t),                          # (L, E, F)
        fb1=jnp.stack(fb1),                              # (L, 1, F)
        fw2_t=jnp.stack(fw2_t),                          # (L, F, E)
        fb2=jnp.stack(fb2),                              # (L, 1, E)
        fc_w_t=fc_w.T,                                   # (E, V)  (hoisted transpose)
        fc_b=fc_b.reshape(1, -1),                        # (1, V)
    )


# ============================= pure-JAX reference ===============================

def _mha_ref(key, query, value, m):
    bsz, S, E = key.shape
    def proj(t, w, b):
        t = t.reshape(bsz, S, H, D_K)
        return jnp.einsum('bshd,od->bsho', t, w) + b
    k = jnp.transpose(proj(key, m["wk"], m["bk"]), (0, 2, 1, 3))
    q = jnp.transpose(proj(query, m["wq"], m["bq"]), (0, 2, 1, 3))
    v = jnp.transpose(proj(value, m["wv"], m["bv"]), (0, 2, 1, 3))
    prod = jnp.einsum('bhqd,bhkd->bhqk', q, k) / math.sqrt(D_K)
    prod = jax.nn.softmax(prod, axis=1)      # over the head axis, like torch dim=1
    score = jnp.einsum('bhqk,bhkd->bhqd', prod, v)
    concat = jnp.transpose(score, (0, 2, 1, 3)).reshape(bsz, S, E)
    return jnp.einsum('bse,oe->bso', concat, m["wo"]) + m["bo"]


def _ln_ref(x, g, b):
    mu = jnp.mean(x, axis=-1, keepdims=True)
    var = jnp.mean((x - mu) ** 2, axis=-1, keepdims=True)
    return (x - mu) / jnp.sqrt(var + LN_EPS) * g + b


def decoder_forward_ref(enc_out, token_ids, params):
    x = params["emb"][token_ids]
    x = x * math.sqrt(D_EMB) + params["pe"][None, :, :]
    for lp in params["layers"]:
        attn = _mha_ref(enc_out, enc_out, x, lp["mha1"])
        out1 = _ln_ref(attn + x, lp["g0"], lp["b0"])
        attn2 = _mha_ref(out1, out1, out1, lp["mha2"])
        t1 = _ln_ref(attn2 + out1, lp["g1"], lp["b1"])
        hidden = jnp.maximum(jnp.einsum('bse,oe->bso', t1, lp["fw1"]) + lp["fb1"], 0.0)
        ff = jnp.einsum('bsf,of->bso', hidden, lp["fw2"]) + lp["fb2"]
        x = _ln_ref(ff + t1, lp["g2"], lp["b2"])
    return jnp.einsum('bse,oe->bso', x, params["fc_w"]) + params["fc_b"]


# ==================================== main ======================================

if __name__ == "__main__":
    root = jax.random.PRNGKey(0)
    k_emb, k_fc, k_layers, k_enc, k_ids = jax.random.split(root, 5)

    emb = jax.random.normal(k_emb, (D_VOCAB, D_EMB), jnp.float32)
    fc_w, fc_b = init_linear(k_fc, D_VOCAB, D_EMB)
    layers = [init_decoder_layer(k) for k in jax.random.split(k_layers, NUM_LAYERS)]
    pe = make_positional_encoding()

    params = dict(
        emb=emb,
        pe=pe,
        fc_w=fc_w,
        fc_b=fc_b,
        layers=layers,
        packed=pack_params(layers, fc_w, fc_b, pe),
    )

    enc_out = jax.random.normal(k_enc, (B, D_SEQ, D_EMB), jnp.float32)
    token_ids = jax.random.randint(k_ids, (B, D_SEQ), 0, D_VOCAB)
    # mask is accepted by the torch module but has no effect (masked_fill result
    # is discarded), so it is not an input to the kernel.

    fwd = jax.jit(decoder_forward_pallas)
    out = fwd(enc_out, token_ids, params)
    out = jax.block_until_ready(out)
    assert out.shape == (B, D_SEQ, D_VOCAB)

    ref = decoder_forward_ref(enc_out, token_ids, params)
    # 5e-3 tolerance: everything is f32 with f32 MXU accumulation; the only
    # deliberate approximation is pl.reciprocal(approx=True) in the softmax.
    if not jnp.allclose(out, ref, atol=5e-3, rtol=5e-3):
        raise AssertionError("Pallas output does not match JAX reference")

    print("KERNEL_OK")
</pallas_src>

<mosaic_0001>
module attributes {stable_mosaic.version = 11 : i64} {
  func.func @decoder_fused_kernel(%arg0: memref<16x32xf32, #tpu.memory_space<vmem>>, %arg1: memref<16x32xf32, #tpu.memory_space<vmem>>, %arg2: memref<16x32xf32, #tpu.memory_space<vmem>>, %arg3: memref<4x32x96xf32, #tpu.memory_space<vmem>>, %arg4: memref<4x1x96xf32, #tpu.memory_space<vmem>>, %arg5: memref<4x32x32xf32, #tpu.memory_space<vmem>>, %arg6: memref<4x1x32xf32, #tpu.memory_space<vmem>>, %arg7: memref<6x1x32xf32, #tpu.memory_space<vmem>>, %arg8: memref<6x1x32xf32, #tpu.memory_space<vmem>>, %arg9: memref<2x32x64xf32, #tpu.memory_space<vmem>>, %arg10: memref<2x1x64xf32, #tpu.memory_space<vmem>>, %arg11: memref<2x64x32xf32, #tpu.memory_space<vmem>>, %arg12: memref<2x1x32xf32, #tpu.memory_space<vmem>>, %arg13: memref<32x32xf32, #tpu.memory_space<vmem>>, %arg14: memref<1x32xf32, #tpu.memory_space<vmem>>, %arg15: memref<16x32xf32, #tpu.memory_space<vmem>>) attributes {dimension_semantics = [], scalar_prefetch = 0 : i64, scratch_operands = 0 : i64, tpu.core_type = #tpu.core_type<tc>} {
    %c0 = arith.constant 0 : index
    %c0_0 = arith.constant 0 : index
    %0 = vector.load %arg0[%c0, %c0_0] : memref<16x32xf32, #tpu.memory_space<vmem>>, vector<16x32xf32>
    %c0_1 = arith.constant 0 : index
    %c0_2 = arith.constant 0 : index
    %1 = vector.load %arg1[%c0_1, %c0_2] : memref<16x32xf32, #tpu.memory_space<vmem>>, vector<16x32xf32>
    %cst = arith.constant 5.65685415 : f32
    %2 = vector.broadcast %cst : f32 to vector<16x32xf32>
    %3 = arith.mulf %1, %2 : vector<16x32xf32>
    %c0_3 = arith.constant 0 : index
    %c0_4 = arith.constant 0 : index
    %4 = vector.load %arg2[%c0_3, %c0_4] : memref<16x32xf32, #tpu.memory_space<vmem>>, vector<16x32xf32>
    %5 = arith.addf %3, %4 : vector<16x32xf32>
    %c0_5 = arith.constant 0 : index
    %c0_6 = arith.constant 0 : index
    %c0_7 = arith.constant 0 : index
    %6 = vector.load %arg3[%c0_5, %c0_6, %c0_7] : memref<4x32x96xf32, #tpu.memory_space<vmem>>, vector<1x32x96xf32>
    %7 = vector.shape_cast %6 : vector<1x32x96xf32> to vector<32x96xf32>
    %c0_8 = arith.constant 0 : index
    %c0_9 = arith.constant 0 : index
    %c0_10 = arith.constant 0 : index
    %8 = vector.load %arg4[%c0_8, %c0_9, %c0_10] : memref<4x1x96xf32, #tpu.memory_space<vmem>>, vector<1x1x96xf32>
    %9 = vector.shape_cast %8 : vector<1x1x96xf32> to vector<1x96xf32>
    %c0_11 = arith.constant 0 : index
    %c0_12 = arith.constant 0 : index
    %c0_13 = arith.constant 0 : index
    %10 = vector.load %arg5[%c0_11, %c0_12, %c0_13] : memref<4x32x32xf32, #tpu.memory_space<vmem>>, vector<1x32x32xf32>
    %11 = vector.shape_cast %10 : vector<1x32x32xf32> to vector<32x32xf32>
    %c0_14 = arith.constant 0 : index
    %c0_15 = arith.constant 0 : index
    %c0_16 = arith.constant 0 : index
    %12 = vector.load %arg6[%c0_14, %c0_15, %c0_16] : memref<4x1x32xf32, #tpu.memory_space<vmem>>, vector<1x1x32xf32>
    %13 = vector.shape_cast %12 : vector<1x1x32xf32> to vector<1x32xf32>
    %14 = vector.extract_strided_slice %7 {offsets = [0, 0], sizes = [32, 64], strides = [1, 1]} : vector<32x96xf32> to vector<32x64xf32>
    %cst_17 = arith.constant dense<0.000000e+00> : vector<16x64xf32>
    %15 = tpu.matmul %0, %14, %cst_17 {dimension_numbers = #tpu.dot_dimension_numbers<[1], [0], [0], [1], [0, 0, 1, 1], [], []>} : vector<16x32xf32>, vector<32x64xf32>, vector<16x64xf32> -> vector<16x64xf32>
    %16 = vector.extract_strided_slice %9 {offsets = [0, 0], sizes = [1, 64], strides = [1, 1]} : vector<1x96xf32> to vector<1x64xf32>
    %17 = vector.broadcast %16 : vector<1x64xf32> to vector<16x64xf32>
    %18 = arith.addf %15, %17 : vector<16x64xf32>
    %19 = vector.extract_strided_slice %18 {offsets = [0, 0], sizes = [16, 32], strides = [1, 1]} : vector<16x64xf32> to vector<16x32xf32>
    %20 = vector.extract_strided_slice %18 {offsets = [0, 32], sizes = [16, 32], strides = [1, 1]} : vector<16x64xf32> to vector<16x32xf32>
    %21 = vector.extract_strided_slice %7 {offsets = [0, 64], sizes = [32, 32], strides = [1, 1]} : vector<32x96xf32> to vector<32x32xf32>
    %cst_18 = arith.constant dense<0.000000e+00> : vector<16x32xf32>
    %22 = tpu.matmul %5, %21, %cst_18 {dimension_numbers = #tpu.dot_dimension_numbers<[1], [0], [0], [1], [0, 0, 1, 1], [], []>} : vector<16x32xf32>, vector<32x32xf32>, vector<16x32xf32> -> vector<16x32xf32>
    %23 = vector.extract_strided_slice %9 {offsets = [0, 64], sizes = [1, 32], strides = [1, 1]} : vector<1x96xf32> to vector<1x32xf32>
    %24 = vector.broadcast %23 : vector<1x32xf32> to vector<16x32xf32>
    %25 = arith.addf %22, %24 : vector<16x32xf32>
    %26 = vector.extract_strided_slice %19 {offsets = [0, 0], sizes = [8, 32], strides = [1, 1]} : vector<16x32xf32> to vector<8x32xf32>
    %27 = vector.extract_strided_slice %20 {offsets = [0, 0], sizes = [8, 32], strides = [1, 1]} : vector<16x32xf32> to vector<8x32xf32>
    %28 = vector.extract_strided_slice %25 {offsets = [0, 0], sizes = [8, 32], strides = [1, 1]} : vector<16x32xf32> to vector<8x32xf32>
    %29 = vector.extract_strided_slice %26 {offsets = [0, 0], sizes = [8, 8], strides = [1, 1]} : vector<8x32xf32> to vector<8x8xf32>
    %30 = vector.extract_strided_slice %27 {offsets = [0, 0], sizes = [8, 8], strides = [1, 1]} : vector<8x32xf32> to vector<8x8xf32>
    %cst_19 = arith.constant dense<0.000000e+00> : vector<8x8xf32>
    %31 = tpu.matmul %29, %30, %cst_19 {dimension_numbers = #tpu.dot_dimension_numbers<[1], [1], [0], [0], [0, 0, 1, 0], [], []>} : vector<8x8xf32>, vector<8x8xf32>, vector<8x8xf32> -> vector<8x8xf32>
    %cst_20 = arith.constant 0.353553385 : f32
    %32 = vector.broadcast %cst_20 : f32 to vector<8x8xf32>
    %33 = arith.mulf %31, %32 : vector<8x8xf32>
    %34 = vector.extract_strided_slice %26 {offsets = [0, 8], sizes = [8, 8], strides = [1, 1]} : vector<8x32xf32> to vector<8x8xf32>
    %35 = vector.extract_strided_slice %27 {offsets = [0, 8], sizes = [8, 8], strides = [1, 1]} : vector<8x32xf32> to vector<8x8xf32>
    %cst_21 = arith.constant dense<0.000000e+00> : vector<8x8xf32>
    %36 = tpu.matmul %34, %35, %cst_21 {dimension_numbers = #tpu.dot_dimension_numbers<[1], [1], [0], [0], [0, 0, 1, 0], [], []>} : vector<8x8xf32>, vector<8x8xf32>, vector<8x8xf32> -> vector<8x8xf32>
    %cst_22 = arith.constant 0.353553385 : f32
    %37 = vector.broadcast %cst_22 : f32 to vector<8x8xf32>
    %38 = arith.mulf %36, %37 : vector<8x8xf32>
    %39 = vector.extract_strided_slice %26 {offsets = [0, 16], sizes = [8, 8], strides = [1, 1]} : vector<8x32xf32> to vector<8x8xf32>
    %40 = vector.extract_strided_slice %27 {offsets = [0, 16], sizes = [8, 8], strides = [1, 1]} : vector<8x32xf32> to vector<8x8xf32>
    %cst_23 = arith.constant dense<0.000000e+00> : vector<8x8xf32>
    %41 = tpu.matmul %39, %40, %cst_23 {dimension_numbers = #tpu.dot_dimension_numbers<[1], [1], [0], [0], [0, 0, 1, 0], [], []>} : vector<8x8xf32>, vector<8x8xf32>, vector<8x8xf32> -> vector<8x8xf32>
    %cst_24 = arith.constant 0.353553385 : f32
    %42 = vector.broadcast %cst_24 : f32 to vector<8x8xf32>
    %43 = arith.mulf %41, %42 : vector<8x8xf32>
    %44 = vector.extract_strided_slice %26 {offsets = [0, 24], sizes = [8, 8], strides = [1, 1]} : vector<8x32xf32> to vector<8x8xf32>
    %45 = vector.extract_strided_slice %27 {offsets = [0, 24], sizes = [8, 8], strides = [1, 1]} : vector<8x32xf32> to vector<8x8xf32>
    %cst_25 = arith.constant dense<0.000000e+00> : vector<8x8xf32>
    %46 = tpu.matmul %44, %45, %cst_25 {dimension_numbers = #tpu.dot_dimension_numbers<[1], [1], [0], [0], [0, 0, 1, 0], [], []>} : vector<8x8xf32>, vector<8x8xf32>, vector<8x8xf32> -> vector<8x8xf32>
    %cst_26 = arith.constant 0.353553385 : f32
    %47 = vector.broadcast %cst_26 : f32 to vector<8x8xf32>
    %48 = arith.mulf %46, %47 : vector<8x8xf32>
    %49 = arith.maximumf %33, %38 : vector<8x8xf32>
    %50 = arith.maximumf %49, %43 : vector<8x8xf32>
    %51 = arith.maximumf %50, %48 : vector<8x8xf32>
    %52 = arith.subf %33, %51 : vector<8x8xf32>
    %53 = arith.subf %38, %51 : vector<8x8xf32>
    %54 = arith.subf %43, %51 : vector<8x8xf32>
    %55 = arith.subf %48, %51 : vector<8x8xf32>
    %56 = tpu.concatenate %52, %53, %54, %55 in 1 : vector<8x8xf32>, vector<8x8xf32>, vector<8x8xf32>, vector<8x8xf32> -> vector<8x32xf32>
    %57 = math.exp %56 : vector<8x32xf32>
    %58 = vector.extract_strided_slice %57 {offsets = [0, 0], sizes = [8, 8], strides = [1, 1]} : vector<8x32xf32> to vector<8x8xf32>
    %59 = vector.extract_strided_slice %57 {offsets = [0, 8], sizes = [8, 8], strides = [1, 1]} : vector<8x32xf32> to vector<8x8xf32>
    %60 = arith.addf %58, %59 : vector<8x8xf32>
    %61 = vector.extract_strided_slice %57 {offsets = [0, 16], sizes = [8, 8], strides = [1, 1]} : vector<8x32xf32> to vector<8x8xf32>
    %62 = arith.addf %60, %61 : vector<8x8xf32>
    %63 = vector.extract_strided_slice %57 {offsets = [0, 24], sizes = [8, 8], strides = [1, 1]} : vector<8x32xf32> to vector<8x8xf32>
    %64 = arith.addf %62, %63 : vector<8x8xf32>
    %65 = tpu.reciprocal %64 {approx = true} : vector<8x8xf32> -> vector<8x8xf32>
    %66 = vector.extract_strided_slice %57 {offsets = [0, 0], sizes = [8, 8], strides = [1, 1]} : vector<8x32xf32> to vector<8x8xf32>
    %67 = arith.mulf %66, %65 : vector<8x8xf32>
    %68 = vector.extract_strided_slice %28 {offsets = [0, 0], sizes = [8, 8], strides = [1, 1]} : vector<8x32xf32> to vector<8x8xf32>
    %cst_27 = arith.constant dense<0.000000e+00> : vector<8x8xf32>
    %69 = tpu.matmul %67, %68, %cst_27 {dimension_numbers = #tpu.dot_dimension_numbers<[1], [0], [0], [1], [0, 0, 1, 1], [], []>} : vector<8x8xf32>, vector<8x8xf32>, vector<8x8xf32> -> vector<8x8xf32>
    %70 = vector.extract_strided_slice %57 {offsets = [0, 8], sizes = [8, 8], strides = [1, 1]} : vector<8x32xf32> to vector<8x8xf32>
    %71 = arith.mulf %70, %65 : vector<8x8xf32>
    %72 = vector.extract_strided_slice %28 {offsets = [0, 8], sizes = [8, 8], strides = [1, 1]} : vector<8x32xf32> to vector<8x8xf32>
    %cst_28 = arith.constant dense<0.000000e+00> : vector<8x8xf32>
    %73 = tpu.matmul %71, %72, %cst_28 {dimension_numbers = #tpu.dot_dimension_numbers<[1], [0], [0], [1], [0, 0, 1, 1], [], []>} : vector<8x8xf32>, vector<8x8xf32>, vector<8x8xf32> -> vector<8x8xf32>
    %74 = vector.extract_strided_slice %57 {offsets = [0, 16], sizes = [8, 8], strides = [1, 1]} : vector<8x32xf32> to vector<8x8xf32>
    %75 = arith.mulf %74, %65 : vector<8x8xf32>
    %76 = vector.extract_strided_slice %28 {offsets = [0, 16], sizes = [8, 8], strides = [1, 1]} : vector<8x32xf32> to vector<8x8xf32>
    %cst_29 = arith.constant dense<0.000000e+00> : vector<8x8xf32>
    %77 = tpu.matmul %75, %76, %cst_29 {dimension_numbers = #tpu.dot_dimension_numbers<[1], [0], [0], [1], [0, 0, 1, 1], [], []>} : vector<8x8xf32>, vector<8x8xf32>, vector<8x8xf32> -> vector<8x8xf32>
    %78 = vector.extract_strided_slice %57 {offsets = [0, 24], sizes = [8, 8], strides = [1, 1]} : vector<8x32xf32> to vector<8x8xf32>
    %79 = arith.mulf %78, %65 : vector<8x8xf32>
    %80 = vector.extract_strided_slice %28 {offsets = [0, 24], sizes = [8, 8], strides = [1, 1]} : vector<8x32xf32> to vector<8x8xf32>
    %cst_30 = arith.constant dense<0.000000e+00> : vector<8x8xf32>
    %81 = tpu.matmul %79, %80, %cst_30 {dimension_numbers = #tpu.dot_dimension_numbers<[1], [0], [0], [1], [0, 0, 1, 1], [], []>} : vector<8x8xf32>, vector<8x8xf32>, vector<8x8xf32> -> vector<8x8xf32>
    %82 = tpu.concatenate %69, %73, %77, %81 in 1 : vector<8x8xf32>, vector<8x8xf32>, vector<8x8xf32>, vector<8x8xf32> -> vector<8x32xf32>
    %83 = vector.extract_strided_slice %19 {offsets = [8, 0], sizes = [8, 32], strides = [1, 1]} : vector<16x32xf32> to vector<8x32xf32>
    %84 = vector.extract_strided_slice %20 {offsets = [8, 0], sizes = [8, 32], strides = [1, 1]} : vector<16x32xf32> to vector<8x32xf32>
    %85 = vector.extract_strided_slice %25 {offsets = [8, 0], sizes = [8, 32], strides = [1, 1]} : vector<16x32xf32> to vector<8x32xf32>
    %86 = vector.extract_strided_slice %83 {offsets = [0, 0], sizes = [8, 8], strides = [1, 1]} : vector<8x32xf32> to vector<8x8xf32>
    %87 = vector.extract_strided_slice %84 {offsets = [0, 0], sizes = [8, 8], strides = [1, 1]} : vector<8x32xf32> to vector<8x8xf32>
    %cst_31 = arith.constant dense<0.000000e+00> : vector<8x8xf32>
    %88 = tpu.matmul %86, %87, %cst_31 {dimension_numbers = #tpu.dot_dimension_numbers<[1], [1], [0], [0], [0, 0, 1, 0], [], []>} : vector<8x8xf32>, vector<8x8xf32>, vector<8x8xf32> -> vector<8x8xf32>
    %cst_32 = arith.constant 0.353553385 : f32
    %89 = vector.broadcast %cst_32 : f32 to vector<8x8xf32>
    %90 = arith.mulf %88, %89 : vector<8x8xf32>
    %91 = vector.extract_strided_slice %83 {offsets = [0, 8], sizes = [8, 8], strides = [1, 1]} : vector<8x32xf32> to vector<8x8xf32>
    %92 = vector.extract_strided_slice %84 {offsets = [0, 8], sizes = [8, 8], strides = [1, 1]} : vector<8x32xf32> to vector<8x8xf32>
    %cst_33 = arith.constant dense<0.000000e+00> : vector<8x8xf32>
    %93 = tpu.matmul %91, %92, %cst_33 {dimension_numbers = #tpu.dot_dimension_numbers<[1], [1], [0], [0], [0, 0, 1, 0], [], []>} : vector<8x8xf32>, vector<8x8xf32>, vector<8x8xf32> -> vector<8x8xf32>
    %cst_34 = arith.constant 0.353553385 : f32
    %94 = vector.broadcast %cst_34 : f32 to vector<8x8xf32>
    %95 = arith.mulf %93, %94 : vector<8x8xf32>
    %96 = vector.extract_strided_slice %83 {offsets = [0, 16], sizes = [8, 8], strides = [1, 1]} : vector<8x32xf32> to vector<8x8xf32>
    %97 = vector.extract_strided_slice %84 {offsets = [0, 16], sizes = [8, 8], strides = [1, 1]} : vector<8x32xf32> to vector<8x8xf32>
    %cst_35 = arith.constant dense<0.000000e+00> : vector<8x8xf32>
    %98 = tpu.matmul %96, %97, %cst_35 {dimension_numbers = #tpu.dot_dimension_numbers<[1], [1], [0], [0], [0, 0, 1, 0], [], []>} : vector<8x8xf32>, vector<8x8xf32>, vector<8x8xf32> -> vector<8x8xf32>
    %cst_36 = arith.constant 0.353553385 : f32
    %99 = vector.broadcast %cst_36 : f32 to vector<8x8xf32>
    %100 = arith.mulf %98, %99 : vector<8x8xf32>
    %101 = vector.extract_strided_slice %83 {offsets = [0, 24], sizes = [8, 8], strides = [1, 1]} : vector<8x32xf32> to vector<8x8xf32>
    %102 = vector.extract_strided_slice %84 {offsets = [0, 24], sizes = [8, 8], strides = [1, 1]} : vector<8x32xf32> to vector<8x8xf32>
    %cst_37 = arith.constant dense<0.000000e+00> : vector<8x8xf32>
    %103 = tpu.matmul %101, %102, %cst_37 {dimension_numbers = #tpu.dot_dimension_numbers<[1], [1], [0], [0], [0, 0, 1, 0], [], []>} : vector<8x8xf32>, vector<8x8xf32>, vector<8x8xf32> -> vector<8x8xf32>
    %cst_38 = arith.constant 0.353553385 : f32
    %104 = vector.broadcast %cst_38 : f32 to vector<8x8xf32>
    %105 = arith.mulf %103, %104 : vector<8x8xf32>
    %106 = arith.maximumf %90, %95 : vector<8x8xf32>
    %107 = arith.maximumf %106, %100 : vector<8x8xf32>
    %108 = arith.maximumf %107, %105 : vector<8x8xf32>
    %109 = arith.subf %90, %108 : vector<8x8xf32>
    %110 = arith.subf %95, %108 : vector<8x8xf32>
    %111 = arith.subf %100, %108 : vector<8x8xf32>
    %112 = arith.subf %105, %108 : vector<8x8xf32>
    %113 = tpu.concatenate %109, %110, %111, %112 in 1 : vector<8x8xf32>, vector<8x8xf32>, vector<8x8xf32>, vector<8x8xf32> -> vector<8x32xf32>
    %114 = math.exp %113 : vector<8x32xf32>
    %115 = vector.extract_strided_slice %114 {offsets = [0, 0], sizes = [8, 8], strides = [1, 1]} : vector<8x32xf32> to vector<8x8xf32>
    %116 = vector.extract_strided_slice %114 {offsets = [0, 8], sizes = [8, 8], strides = [1, 1]} : vector<8x32xf32> to vector<8x8xf32>
    %117 = arith.addf %115, %116 : vector<8x8xf32>
    %118 = vector.extract_strided_slice %114 {offsets = [0, 16], sizes = [8, 8], strides = [1, 1]} : vector<8x32xf32> to vector<8x8xf32>
    %119 = arith.addf %117, %118 : vector<8x8xf32>
    %120 = vector.extract_strided_slice %114 {offsets = [0, 24], sizes = [8, 8], strides = [1, 1]} : vector<8x32xf32> to vector<8x8xf32>
    %121 = arith.addf %119, %120 : vector<8x8xf32>
    %122 = tpu.reciprocal %121 {approx = true} : vector<8x8xf32> -> vector<8x8xf32>
    %123 = vector.extract_strided_slice %114 {offsets = [0, 0], sizes = [8, 8], strides = [1, 1]} : vector<8x32xf32> to vector<8x8xf32>
    %124 = arith.mulf %123, %122 : vector<8x8xf32>
    %125 = vector.extract_strided_slice %85 {offsets = [0, 0], sizes = [8, 8], strides = [1, 1]} : vector<8x32xf32> to vector<8x8xf32>
    %cst_39 = arith.constant dense<0.000000e+00> : vector<8x8xf32>
    %126 = tpu.matmul %124, %125, %cst_39 {dimension_numbers = #tpu.dot_dimension_numbers<[1], [0], [0], [1], [0, 0, 1, 1], [], []>} : vector<8x8xf32>, vector<8x8xf32>, vector<8x8xf32> -> vector<8x8xf32>
    %127 = vector.extract_strided_slice %114 {offsets = [0, 8], sizes = [8, 8], strides = [1, 1]} : vector<8x32xf32> to vector<8x8xf32>
    %128 = arith.mulf %127, %122 : vector<8x8xf32>
    %129 = vector.extract_strided_slice %85 {offsets = [0, 8], sizes = [8, 8], strides = [1, 1]} : vector<8x32xf32> to vector<8x8xf32>
    %cst_40 = arith.constant dense<0.000000e+00> : vector<8x8xf32>
    %130 = tpu.matmul %128, %129, %cst_40 {dimension_numbers = #tpu.dot_dimension_numbers<[1], [0], [0], [1], [0, 0, 1, 1], [], []>} : vector<8x8xf32>, vector<8x8xf32>, vector<8x8xf32> -> vector<8x8xf32>
    %131 = vector.extract_strided_slice %114 {offsets = [0, 16], sizes = [8, 8], strides = [1, 1]} : vector<8x32xf32> to vector<8x8xf32>
    %132 = arith.mulf %131, %122 : vector<8x8xf32>
    %133 = vector.extract_strided_slice %85 {offsets = [0, 16], sizes = [8, 8], strides = [1, 1]} : vector<8x32xf32> to vector<8x8xf32>
    %cst_41 = arith.constant dense<0.000000e+00> : vector<8x8xf32>
    %134 = tpu.matmul %132, %133, %cst_41 {dimension_numbers = #tpu.dot_dimension_numbers<[1], [0], [0], [1], [0, 0, 1, 1], [], []>} : vector<8x8xf32>, vector<8x8xf32>, vector<8x8xf32> -> vector<8x8xf32>
    %135 = vector.extract_strided_slice %114 {offsets = [0, 24], sizes = [8, 8], strides = [1, 1]} : vector<8x32xf32> to vector<8x8xf32>
    %136 = arith.mulf %135, %122 : vector<8x8xf32>
    %137 = vector.extract_strided_slice %85 {offsets = [0, 24], sizes = [8, 8], strides = [1, 1]} : vector<8x32xf32> to vector<8x8xf32>
    %cst_42 = arith.constant dense<0.000000e+00> : vector<8x8xf32>
    %138 = tpu.matmul %136, %137, %cst_42 {dimension_numbers = #tpu.dot_dimension_numbers<[1], [0], [0], [1], [0, 0, 1, 1], [], []>} : vector<8x8xf32>, vector<8x8xf32>, vector<8x8xf32> -> vector<8x8xf32>
    %139 = tpu.concatenate %126, %130, %134, %138 in 1 : vector<8x8xf32>, vector<8x8xf32>, vector<8x8xf32>, vector<8x8xf32> -> vector<8x32xf32>
    %140 = tpu.concatenate %82, %139 in 0 : vector<8x32xf32>, vector<8x32xf32> -> vector<16x32xf32>
    %cst_43 = arith.constant dense<0.000000e+00> : vector<16x32xf32>
    %141 = tpu.matmul %140, %11, %cst_43 {dimension_numbers = #tpu.dot_dimension_numbers<[1], [0], [0], [1], [0, 0, 1, 1], [], []>} : vector<16x32xf32>, vector<32x32xf32>, vector<16x32xf32> -> vector<16x32xf32>
    %142 = vector.broadcast %13 : vector<1x32xf32> to vector<16x32xf32>
    %143 = arith.addf %141, %142 : vector<16x32xf32>
    %144 = arith.addf %143, %5 : vector<16x32xf32>
    %c0_44 = arith.constant 0 : index
    %c0_45 = arith.constant 0 : index
    %c0_46 = arith.constant 0 : index
    %145 = vector.load %arg7[%c0_44, %c0_45, %c0_46] : memref<6x1x32xf32, #tpu.memory_space<vmem>>, vector<1x1x32xf32>
    %146 = vector.shape_cast %145 : vector<1x1x32xf32> to vector<1x32xf32>
    %c0_47 = arith.constant 0 : index
    %c0_48 = arith.constant 0 : index
    %c0_49 = arith.constant 0 : index
    %147 = vector.load %arg8[%c0_47, %c0_48, %c0_49] : memref<6x1x32xf32, #tpu.memory_space<vmem>>, vector<1x1x32xf32>
    %148 = vector.shape_cast %147 : vector<1x1x32xf32> to vector<1x32xf32>
    %cst_50 = arith.constant dense<0.000000e+00> : vector<16xf32>
    %149 = vector.multi_reduction <add>, %144, %cst_50 [1] : vector<16x32xf32> to vector<16xf32>
    %150 = vector.shape_cast %149 : vector<16xf32> to vector<16x1xf32>
    %cst_51 = arith.constant 3.200000e+01 : f32
    %151 = vector.broadcast %cst_51 : f32 to vector<16x1xf32>
    %152 = arith.divf %150, %151 : vector<16x1xf32>
    %153 = vector.broadcast %152 : vector<16x1xf32> to vector<16x32xf32>
    %154 = arith.subf %144, %153 : vector<16x32xf32>
    %155 = arith.mulf %154, %154 : vector<16x32xf32>
    %cst_52 = arith.constant dense<0.000000e+00> : vector<16xf32>
    %156 = vector.multi_reduction <add>, %155, %cst_52 [1] : vector<16x32xf32> to vector<16xf32>
    %157 = vector.shape_cast %156 : vector<16xf32> to vector<16x1xf32>
    %cst_53 = arith.constant 3.200000e+01 : f32
    %158 = vector.broadcast %cst_53 : f32 to vector<16x1xf32>
    %159 = arith.divf %157, %158 : vector<16x1xf32>
    %160 = vector.broadcast %152 : vector<16x1xf32> to vector<16x32xf32>
    %161 = arith.subf %144, %160 : vector<16x32xf32>
    %cst_54 = arith.constant 9.99999974E-6 : f32
    %162 = vector.broadcast %cst_54 : f32 to vector<16x1xf32>
    %163 = arith.addf %159, %162 : vector<16x1xf32>
    %164 = math.rsqrt %163 : vector<16x1xf32>
    %165 = vector.broadcast %164 : vector<16x1xf32> to vector<16x32xf32>
    %166 = arith.mulf %161, %165 : vector<16x32xf32>
    %167 = vector.broadcast %146 : vector<1x32xf32> to vector<16x32xf32>
    %168 = arith.mulf %166, %167 : vector<16x32xf32>
    %169 = vector.broadcast %148 : vector<1x32xf32> to vector<16x32xf32>
    %170 = arith.addf %168, %169 : vector<16x32xf32>
    %c1 = arith.constant 1 : index
    %c0_55 = arith.constant 0 : index
    %c0_56 = arith.constant 0 : index
    %171 = vector.load %arg3[%c1, %c0_55, %c0_56] : memref<4x32x96xf32, #tpu.memory_space<vmem>>, vector<1x32x96xf32>
    %172 = vector.shape_cast %171 : vector<1x32x96xf32> to vector<32x96xf32>
    %c1_57 = arith.constant 1 : index
    %c0_58 = arith.constant 0 : index
    %c0_59 = arith.constant 0 : index
    %173 = vector.load %arg4[%c1_57, %c0_58, %c0_59] : memref<4x1x96xf32, #tpu.memory_space<vmem>>, vector<1x1x96xf32>
    %174 = vector.shape_cast %173 : vector<1x1x96xf32> to vector<1x96xf32>
    %c1_60 = arith.constant 1 : index
    %c0_61 = arith.constant 0 : index
    %c0_62 = arith.constant 0 : index
    %175 = vector.load %arg5[%c1_60, %c0_61, %c0_62] : memref<4x32x32xf32, #tpu.memory_space<vmem>>, vector<1x32x32xf32>
    %176 = vector.shape_cast %175 : vector<1x32x32xf32> to vector<32x32xf32>
    %c1_63 = arith.constant 1 : index
    %c0_64 = arith.constant 0 : index
    %c0_65 = arith.constant 0 : index
    %177 = vector.load %arg6[%c1_63, %c0_64, %c0_65] : memref<4x1x32xf32, #tpu.memory_space<vmem>>, vector<1x1x32xf32>
    %178 = vector.shape_cast %177 : vector<1x1x32xf32> to vector<1x32xf32>
    %cst_66 = arith.constant dense<0.000000e+00> : vector<16x96xf32>
    %179 = tpu.matmul %170, %172, %cst_66 {dimension_numbers = #tpu.dot_dimension_numbers<[1], [0], [0], [1], [0, 0, 1, 1], [], []>} : vector<16x32xf32>, vector<32x96xf32>, vector<16x96xf32> -> vector<16x96xf32>
    %180 = vector.broadcast %174 : vector<1x96xf32> to vector<16x96xf32>
    %181 = arith.addf %179, %180 : vector<16x96xf32>
    %182 = vector.extract_strided_slice %181 {offsets = [0, 0], sizes = [16, 32], strides = [1, 1]} : vector<16x96xf32> to vector<16x32xf32>
    %183 = vector.extract_strided_slice %181 {offsets = [0, 32], sizes = [16, 32], strides = [1, 1]} : vector<16x96xf32> to vector<16x32xf32>
    %184 = vector.extract_strided_slice %181 {offsets = [0, 64], sizes = [16, 32], strides = [1, 1]} : vector<16x96xf32> to vector<16x32xf32>
    %185 = vector.extract_strided_slice %182 {offsets = [0, 0], sizes = [8, 32], strides = [1, 1]} : vector<16x32xf32> to vector<8x32xf32>
    %186 = vector.extract_strided_slice %183 {offsets = [0, 0], sizes = [8, 32], strides = [1, 1]} : vector<16x32xf32> to vector<8x32xf32>
    %187 = vector.extract_strided_slice %184 {offsets = [0, 0], sizes = [8, 32], strides = [1, 1]} : vector<16x32xf32> to vector<8x32xf32>
    %188 = vector.extract_strided_slice %185 {offsets = [0, 0], sizes = [8, 8], strides = [1, 1]} : vector<8x32xf32> to vector<8x8xf32>
    %189 = vector.extract_strided_slice %186 {offsets = [0, 0], sizes = [8, 8], strides = [1, 1]} : vector<8x32xf32> to vector<8x8xf32>
    %cst_67 = arith.constant dense<0.000000e+00> : vector<8x8xf32>
    %190 = tpu.matmul %188, %189, %cst_67 {dimension_numbers = #tpu.dot_dimension_numbers<[1], [1], [0], [0], [0, 0, 1, 0], [], []>} : vector<8x8xf32>, vector<8x8xf32>, vector<8x8xf32> -> vector<8x8xf32>
    %cst_68 = arith.constant 0.353553385 : f32
    %191 = vector.broadcast %cst_68 : f32 to vector<8x8xf32>
    %192 = arith.mulf %190, %191 : vector<8x8xf32>
    %193 = vector.extract_strided_slice %185 {offsets = [0, 8], sizes = [8, 8], strides = [1, 1]} : vector<8x32xf32> to vector<8x8xf32>
    %194 = vector.extract_strided_slice %186 {offsets = [0, 8], sizes = [8, 8], strides = [1, 1]} : vector<8x32xf32> to vector<8x8xf32>
    %cst_69 = arith.constant dense<0.000000e+00> : vector<8x8xf32>
    %195 = tpu.matmul %193, %194, %cst_69 {dimension_numbers = #tpu.dot_dimension_numbers<[1], [1], [0], [0], [0, 0, 1, 0], [], []>} : vector<8x8xf32>, vector<8x8xf32>, vector<8x8xf32> -> vector<8x8xf32>
    %cst_70 = arith.constant 0.353553385 : f32
    %196 = vector.broadcast %cst_70 : f32 to vector<8x8xf32>
    %197 = arith.mulf %195, %196 : vector<8x8xf32>
    %198 = vector.extract_strided_slice %185 {offsets = [0, 16], sizes = [8, 8], strides = [1, 1]} : vector<8x32xf32> to vector<8x8xf32>
    %199 = vector.extract_strided_slice %186 {offsets = [0, 16], sizes = [8, 8], strides = [1, 1]} : vector<8x32xf32> to vector<8x8xf32>
    %cst_71 = arith.constant dense<0.000000e+00> : vector<8x8xf32>
    %200 = tpu.matmul %198, %199, %cst_71 {dimension_numbers = #tpu.dot_dimension_numbers<[1], [1], [0], [0], [0, 0, 1, 0], [], []>} : vector<8x8xf32>, vector<8x8xf32>, vector<8x8xf32> -> vector<8x8xf32>
    %cst_72 = arith.constant 0.353553385 : f32
    %201 = vector.broadcast %cst_72 : f32 to vector<8x8xf32>
    %202 = arith.mulf %200, %201 : vector<8x8xf32>
    %203 = vector.extract_strided_slice %185 {offsets = [0, 24], sizes = [8, 8], strides = [1, 1]} : vector<8x32xf32> to vector<8x8xf32>
    %204 = vector.extract_strided_slice %186 {offsets = [0, 24], sizes = [8, 8], strides = [1, 1]} : vector<8x32xf32> to vector<8x8xf32>
    %cst_73 = arith.constant dense<0.000000e+00> : vector<8x8xf32>
    %205 = tpu.matmul %203, %204, %cst_73 {dimension_numbers = #tpu.dot_dimension_numbers<[1], [1], [0], [0], [0, 0, 1, 0], [], []>} : vector<8x8xf32>, vector<8x8xf32>, vector<8x8xf32> -> vector<8x8xf32>
    %cst_74 = arith.constant 0.353553385 : f32
    %206 = vector.broadcast %cst_74 : f32 to vector<8x8xf32>
    %207 = arith.mulf %205, %206 : vector<8x8xf32>
    %208 = arith.maximumf %192, %197 : vector<8x8xf32>
    %209 = arith.maximumf %208, %202 : vector<8x8xf32>
    %210 = arith.maximumf %209, %207 : vector<8x8xf32>
    %211 = arith.subf %192, %210 : vector<8x8xf32>
    %212 = arith.subf %197, %210 : vector<8x8xf32>
    %213 = arith.subf %202, %210 : vector<8x8xf32>
    %214 = arith.subf %207, %210 : vector<8x8xf32>
    %215 = tpu.concatenate %211, %212, %213, %214 in 1 : vector<8x8xf32>, vector<8x8xf32>, vector<8x8xf32>, vector<8x8xf32> -> vector<8x32xf32>
    %216 = math.exp %215 : vector<8x32xf32>
    %217 = vector.extract_strided_slice %216 {offsets = [0, 0], sizes = [8, 8], strides = [1, 1]} : vector<8x32xf32> to vector<8x8xf32>
    %218 = vector.extract_strided_slice %216 {offsets = [0, 8], sizes = [8, 8], strides = [1, 1]} : vector<8x32xf32> to vector<8x8xf32>
    %219 = arith.addf %217, %218 : vector<8x8xf32>
    %220 = vector.extract_strided_slice %216 {offsets = [0, 16], sizes = [8, 8], strides = [1, 1]} : vector<8x32xf32> to vector<8x8xf32>
    %221 = arith.addf %219, %220 : vector<8x8xf32>
    %222 = vector.extract_strided_slice %216 {offsets = [0, 24], sizes = [8, 8], strides = [1, 1]} : vector<8x32xf32> to vector<8x8xf32>
    %223 = arith.addf %221, %222 : vector<8x8xf32>
    %224 = tpu.reciprocal %223 {approx = true} : vector<8x8xf32> -> vector<8x8xf32>
    %225 = vector.extract_strided_slice %216 {offsets = [0, 0], sizes = [8, 8], strides = [1, 1]} : vector<8x32xf32> to vector<8x8xf32>
    %226 = arith.mulf %225, %224 : vector<8x8xf32>
    %227 = vector.extract_strided_slice %187 {offsets = [0, 0], sizes = [8, 8], strides = [1, 1]} : vector<8x32xf32> to vector<8x8xf32>
    %cst_75 = arith.constant dense<0.000000e+00> : vector<8x8xf32>
    %228 = tpu.matmul %226, %227, %cst_75 {dimension_numbers = #tpu.dot_dimension_numbers<[1], [0], [0], [1], [0, 0, 1, 1], [], []>} : vector<8x8xf32>, vector<8x8xf32>, vector<8x8xf32> -> vector<8x8xf32>
    %229 = vector.extract_strided_slice %216 {offsets = [0, 8], sizes = [8, 8], strides = [1, 1]} : vector<8x32xf32> to vector<8x8xf32>
    %230 = arith.mulf %229, %224 : vector<8x8xf32>
    %231 = vector.extract_strided_slice %187 {offsets = [0, 8], sizes = [8, 8], strides = [1, 1]} : vector<8x32xf32> to vector<8x8xf32>
    %cst_76 = arith.constant dense<0.000000e+00> : vector<8x8xf32>
    %232 = tpu.matmul %230, %231, %cst_76 {dimension_numbers = #tpu.dot_dimension_numbers<[1], [0], [0], [1], [0, 0, 1, 1], [], []>} : vector<8x8xf32>, vector<8x8xf32>, vector<8x8xf32> -> vector<8x8xf32>
    %233 = vector.extract_strided_slice %216 {offsets = [0, 16], sizes = [8, 8], strides = [1, 1]} : vector<8x32xf32> to vector<8x8xf32>
    %234 = arith.mulf %233, %224 : vector<8x8xf32>
    %235 = vector.extract_strided_slice %187 {offsets = [0, 16], sizes = [8, 8], strides = [1, 1]} : vector<8x32xf32> to vector<8x8xf32>
    %cst_77 = arith.constant dense<0.000000e+00> : vector<8x8xf32>
    %236 = tpu.matmul %234, %235, %cst_77 {dimension_numbers = #tpu.dot_dimension_numbers<[1], [0], [0], [1], [0, 0, 1, 1], [], []>} : vector<8x8xf32>, vector<8x8xf32>, vector<8x8xf32> -> vector<8x8xf32>
    %237 = vector.extract_strided_slice %216 {offsets = [0, 24], sizes = [8, 8], strides = [1, 1]} : vector<8x32xf32> to vector<8x8xf32>
    %238 = arith.mulf %237, %224 : vector<8x8xf32>
    %239 = vector.extract_strided_slice %187 {offsets = [0, 24], sizes = [8, 8], strides = [1, 1]} : vector<8x32xf32> to vector<8x8xf32>
    %cst_78 = arith.constant dense<0.000000e+00> : vector<8x8xf32>
    %240 = tpu.matmul %238, %239, %cst_78 {dimension_numbers = #tpu.dot_dimension_numbers<[1], [0], [0], [1], [0, 0, 1, 1], [], []>} : vector<8x8xf32>, vector<8x8xf32>, vector<8x8xf32> -> vector<8x8xf32>
    %241 = tpu.concatenate %228, %232, %236, %240 in 1 : vector<8x8xf32>, vector<8x8xf32>, vector<8x8xf32>, vector<8x8xf32> -> vector<8x32xf32>
    %242 = vector.extract_strided_slice %182 {offsets = [8, 0], sizes = [8, 32], strides = [1, 1]} : vector<16x32xf32> to vector<8x32xf32>
    %243 = vector.extract_strided_slice %183 {offsets = [8, 0], sizes = [8, 32], strides = [1, 1]} : vector<16x32xf32> to vector<8x32xf32>
    %244 = vector.extract_strided_slice %184 {offsets = [8, 0], sizes = [8, 32], strides = [1, 1]} : vector<16x32xf32> to vector<8x32xf32>
    %245 = vector.extract_strided_slice %242 {offsets = [0, 0], sizes = [8, 8], strides = [1, 1]} : vector<8x32xf32> to vector<8x8xf32>
    %246 = vector.extract_strided_slice %243 {offsets = [0, 0], sizes = [8, 8], strides = [1, 1]} : vector<8x32xf32> to vector<8x8xf32>
    %cst_79 = arith.constant dense<0.000000e+00> : vector<8x8xf32>
    %247 = tpu.matmul %245, %246, %cst_79 {dimension_numbers = #tpu.dot_dimension_numbers<[1], [1], [0], [0], [0, 0, 1, 0], [], []>} : vector<8x8xf32>, vector<8x8xf32>, vector<8x8xf32> -> vector<8x8xf32>
    %cst_80 = arith.constant 0.353553385 : f32
    %248 = vector.broadcast %cst_80 : f32 to vector<8x8xf32>
    %249 = arith.mulf %247, %248 : vector<8x8xf32>
    %250 = vector.extract_strided_slice %242 {offsets = [0, 8], sizes = [8, 8], strides = [1, 1]} : vector<8x32xf32> to vector<8x8xf32>
    %251 = vector.extract_strided_slice %243 {offsets = [0, 8], sizes = [8, 8], strides = [1, 1]} : vector<8x32xf32> to vector<8x8xf32>
    %cst_81 = arith.constant dense<0.000000e+00> : vector<8x8xf32>
    %252 = tpu.matmul %250, %251, %cst_81 {dimension_numbers = #tpu.dot_dimension_numbers<[1], [1], [0], [0], [0, 0, 1, 0], [], []>} : vector<8x8xf32>, vector<8x8xf32>, vector<8x8xf32> -> vector<8x8xf32>
    %cst_82 = arith.constant 0.353553385 : f32
    %253 = vector.broadcast %cst_82 : f32 to vector<8x8xf32>
    %254 = arith.mulf %252, %253 : vector<8x8xf32>
    %255 = vector.extract_strided_slice %242 {offsets = [0, 16], sizes = [8, 8], strides = [1, 1]} : vector<8x32xf32> to vector<8x8xf32>
    %256 = vector.extract_strided_slice %243 {offsets = [0, 16], sizes = [8, 8], strides = [1, 1]} : vector<8x32xf32> to vector<8x8xf32>
    %cst_83 = arith.constant dense<0.000000e+00> : vector<8x8xf32>
    %257 = tpu.matmul %255, %256, %cst_83 {dimension_numbers = #tpu.dot_dimension_numbers<[1], [1], [0], [0], [0, 0, 1, 0], [], []>} : vector<8x8xf32>, vector<8x8xf32>, vector<8x8xf32> -> vector<8x8xf32>
    %cst_84 = arith.constant 0.353553385 : f32
    %258 = vector.broadcast %cst_84 : f32 to vector<8x8xf32>
    %259 = arith.mulf %257, %258 : vector<8x8xf32>
    %260 = vector.extract_strided_slice %242 {offsets = [0, 24], sizes = [8, 8], strides = [1, 1]} : vector<8x32xf32> to vector<8x8xf32>
    %261 = vector.extract_strided_slice %243 {offsets = [0, 24], sizes = [8, 8], strides = [1, 1]} : vector<8x32xf32> to vector<8x8xf32>
    %cst_85 = arith.constant dense<0.000000e+00> : vector<8x8xf32>
    %262 = tpu.matmul %260, %261, %cst_85 {dimension_numbers = #tpu.dot_dimension_numbers<[1], [1], [0], [0], [0, 0, 1, 0], [], []>} : vector<8x8xf32>, vector<8x8xf32>, vector<8x8xf32> -> vector<8x8xf32>
    %cst_86 = arith.constant 0.353553385 : f32
    %263 = vector.broadcast %cst_86 : f32 to vector<8x8xf32>
    %264 = arith.mulf %262, %263 : vector<8x8xf32>
    %265 = arith.maximumf %249, %254 : vector<8x8xf32>
    %266 = arith.maximumf %265, %259 : vector<8x8xf32>
    %267 = arith.maximumf %266, %264 : vector<8x8xf32>
    %268 = arith.subf %249, %267 : vector<8x8xf32>
    %269 = arith.subf %254, %267 : vector<8x8xf32>
    %270 = arith.subf %259, %267 : vector<8x8xf32>
    %271 = arith.subf %264, %267 : vector<8x8xf32>
    %272 = tpu.concatenate %268, %269, %270, %271 in 1 : vector<8x8xf32>, vector<8x8xf32>, vector<8x8xf32>, vector<8x8xf32> -> vector<8x32xf32>
    %273 = math.exp %272 : vector<8x32xf32>
    %274 = vector.extract_strided_slice %273 {offsets = [0, 0], sizes = [8, 8], strides = [1, 1]} : vector<8x32xf32> to vector<8x8xf32>
    %275 = vector.extract_strided_slice %273 {offsets = [0, 8], sizes = [8, 8], strides = [1, 1]} : vector<8x32xf32> to vector<8x8xf32>
    %276 = arith.addf %274, %275 : vector<8x8xf32>
    %277 = vector.extract_strided_slice %273 {offsets = [0, 16], sizes = [8, 8], strides = [1, 1]} : vector<8x32xf32> to vector<8x8xf32>
    %278 = arith.addf %276, %277 : vector<8x8xf32>
    %279 = vector.extract_strided_slice %273 {offsets = [0, 24], sizes = [8, 8], strides = [1, 1]} : vector<8x32xf32> to vector<8x8xf32>
    %280 = arith.addf %278, %279 : vector<8x8xf32>
    %281 = tpu.reciprocal %280 {approx = true} : vector<8x8xf32> -> vector<8x8xf32>
    %282 = vector.extract_strided_slice %273 {offsets = [0, 0], sizes = [8, 8], strides = [1, 1]} : vector<8x32xf32> to vector<8x8xf32>
    %283 = arith.mulf %282, %281 : vector<8x8xf32>
    %284 = vector.extract_strided_slice %244 {offsets = [0, 0], sizes = [8, 8], strides = [1, 1]} : vector<8x32xf32> to vector<8x8xf32>
    %cst_87 = arith.constant dense<0.000000e+00> : vector<8x8xf32>
    %285 = tpu.matmul %283, %284, %cst_87 {dimension_numbers = #tpu.dot_dimension_numbers<[1], [0], [0], [1], [0, 0, 1, 1], [], []>} : vector<8x8xf32>, vector<8x8xf32>, vector<8x8xf32> -> vector<8x8xf32>
    %286 = vector.extract_strided_slice %273 {offsets = [0, 8], sizes = [8, 8], strides = [1, 1]} : vector<8x32xf32> to vector<8x8xf32>
    %287 = arith.mulf %286, %281 : vector<8x8xf32>
    %288 = vector.extract_strided_slice %244 {offsets = [0, 8], sizes = [8, 8], strides = [1, 1]} : vector<8x32xf32> to vector<8x8xf32>
    %cst_88 = arith.constant dense<0.000000e+00> : vector<8x8xf32>
    %289 = tpu.matmul %287, %288, %cst_88 {dimension_numbers = #tpu.dot_dimension_numbers<[1], [0], [0], [1], [0, 0, 1, 1], [], []>} : vector<8x8xf32>, vector<8x8xf32>, vector<8x8xf32> -> vector<8x8xf32>
    %290 = vector.extract_strided_slice %273 {offsets = [0, 16], sizes = [8, 8], strides = [1, 1]} : vector<8x32xf32> to vector<8x8xf32>
    %291 = arith.mulf %290, %281 : vector<8x8xf32>
    %292 = vector.extract_strided_slice %244 {offsets = [0, 16], sizes = [8, 8], strides = [1, 1]} : vector<8x32xf32> to vector<8x8xf32>
    %cst_89 = arith.constant dense<0.000000e+00> : vector<8x8xf32>
    %293 = tpu.matmul %291, %292, %cst_89 {dimension_numbers = #tpu.dot_dimension_numbers<[1], [0], [0], [1], [0, 0, 1, 1], [], []>} : vector<8x8xf32>, vector<8x8xf32>, vector<8x8xf32> -> vector<8x8xf32>
    %294 = vector.extract_strided_slice %273 {offsets = [0, 24], sizes = [8, 8], strides = [1, 1]} : vector<8x32xf32> to vector<8x8xf32>
    %295 = arith.mulf %294, %281 : vector<8x8xf32>
    %296 = vector.extract_strided_slice %244 {offsets = [0, 24], sizes = [8, 8], strides = [1, 1]} : vector<8x32xf32> to vector<8x8xf32>
    %cst_90 = arith.constant dense<0.000000e+00> : vector<8x8xf32>
    %297 = tpu.matmul %295, %296, %cst_90 {dimension_numbers = #tpu.dot_dimension_numbers<[1], [0], [0], [1], [0, 0, 1, 1], [], []>} : vector<8x8xf32>, vector<8x8xf32>, vector<8x8xf32> -> vector<8x8xf32>
    %298 = tpu.concatenate %285, %289, %293, %297 in 1 : vector<8x8xf32>, vector<8x8xf32>, vector<8x8xf32>, vector<8x8xf32> -> vector<8x32xf32>
    %299 = tpu.concatenate %241, %298 in 0 : vector<8x32xf32>, vector<8x32xf32> -> vector<16x32xf32>
    %cst_91 = arith.constant dense<0.000000e+00> : vector<16x32xf32>
    %300 = tpu.matmul %299, %176, %cst_91 {dimension_numbers = #tpu.dot_dimension_numbers<[1], [0], [0], [1], [0, 0, 1, 1], [], []>} : vector<16x32xf32>, vector<32x32xf32>, vector<16x32xf32> -> vector<16x32xf32>
    %301 = vector.broadcast %178 : vector<1x32xf32> to vector<16x32xf32>
    %302 = arith.addf %300, %301 : vector<16x32xf32>
    %303 = arith.addf %302, %170 : vector<16x32xf32>
    %c1_92 = arith.constant 1 : index
    %c0_93 = arith.constant 0 : index
    %c0_94 = arith.constant 0 : index
    %304 = vector.load %arg7[%c1_92, %c0_93, %c0_94] : memref<6x1x32xf32, #tpu.memory_space<vmem>>, vector<1x1x32xf32>
    %305 = vector.shape_cast %304 : vector<1x1x32xf32> to vector<1x32xf32>
    %c1_95 = arith.constant 1 : index
    %c0_96 = arith.constant 0 : index
    %c0_97 = arith.constant 0 : index
    %306 = vector.load %arg8[%c1_95, %c0_96, %c0_97] : memref<6x1x32xf32, #tpu.memory_space<vmem>>, vector<1x1x32xf32>
    %307 = vector.shape_cast %306 : vector<1x1x32xf32> to vector<1x32xf32>
    %cst_98 = arith.constant dense<0.000000e+00> : vector<16xf32>
    %308 = vector.multi_reduction <add>, %303, %cst_98 [1] : vector<16x32xf32> to vector<16xf32>
    %309 = vector.shape_cast %308 : vector<16xf32> to vector<16x1xf32>
    %cst_99 = arith.constant 3.200000e+01 : f32
    %310 = vector.broadcast %cst_99 : f32 to vector<16x1xf32>
    %311 = arith.divf %309, %310 : vector<16x1xf32>
    %312 = vector.broadcast %311 : vector<16x1xf32> to vector<16x32xf32>
    %313 = arith.subf %303, %312 : vector<16x32xf32>
    %314 = arith.mulf %313, %313 : vector<16x32xf32>
    %cst_100 = arith.constant dense<0.000000e+00> : vector<16xf32>
    %315 = vector.multi_reduction <add>, %314, %cst_100 [1] : vector<16x32xf32> to vector<16xf32>
    %316 = vector.shape_cast %315 : vector<16xf32> to vector<16x1xf32>
    %cst_101 = arith.constant 3.200000e+01 : f32
    %317 = vector.broadcast %cst_101 : f32 to vector<16x1xf32>
    %318 = arith.divf %316, %317 : vector<16x1xf32>
    %319 = vector.broadcast %311 : vector<16x1xf32> to vector<16x32xf32>
    %320 = arith.subf %303, %319 : vector<16x32xf32>
    %cst_102 = arith.constant 9.99999974E-6 : f32
    %321 = vector.broadcast %cst_102 : f32 to vector<16x1xf32>
    %322 = arith.addf %318, %321 : vector<16x1xf32>
    %323 = math.rsqrt %322 : vector<16x1xf32>
    %324 = vector.broadcast %323 : vector<16x1xf32> to vector<16x32xf32>
    %325 = arith.mulf %320, %324 : vector<16x32xf32>
    %326 = vector.broadcast %305 : vector<1x32xf32> to vector<16x32xf32>
    %327 = arith.mulf %325, %326 : vector<16x32xf32>
    %328 = vector.broadcast %307 : vector<1x32xf32> to vector<16x32xf32>
    %329 = arith.addf %327, %328 : vector<16x32xf32>
    %c0_103 = arith.constant 0 : index
    %c0_104 = arith.constant 0 : index
    %c0_105 = arith.constant 0 : index
    %330 = vector.load %arg9[%c0_103, %c0_104, %c0_105] : memref<2x32x64xf32, #tpu.memory_space<vmem>>, vector<1x32x64xf32>
    %331 = vector.shape_cast %330 : vector<1x32x64xf32> to vector<32x64xf32>
    %cst_106 = arith.constant dense<0.000000e+00> : vector<16x64xf32>
    %332 = tpu.matmul %329, %331, %cst_106 {dimension_numbers = #tpu.dot_dimension_numbers<[1], [0], [0], [1], [0, 0, 1, 1], [], []>} : vector<16x32xf32>, vector<32x64xf32>, vector<16x64xf32> -> vector<16x64xf32>
    %c0_107 = arith.constant 0 : index
    %c0_108 = arith.constant 0 : index
    %c0_109 = arith.constant 0 : index
    %333 = vector.load %arg10[%c0_107, %c0_108, %c0_109] : memref<2x1x64xf32, #tpu.memory_space<vmem>>, vector<1x1x64xf32>
    %334 = vector.shape_cast %333 : vector<1x1x64xf32> to vector<1x64xf32>
    %335 = vector.broadcast %334 : vector<1x64xf32> to vector<16x64xf32>
    %336 = arith.addf %332, %335 : vector<16x64xf32>
    %cst_110 = arith.constant 0.000000e+00 : f32
    %337 = vector.broadcast %cst_110 : f32 to vector<16x64xf32>
    %338 = arith.maximumf %336, %337 : vector<16x64xf32>
    %c0_111 = arith.constant 0 : index
    %c0_112 = arith.constant 0 : index
    %c0_113 = arith.constant 0 : index
    %339 = vector.load %arg11[%c0_111, %c0_112, %c0_113] : memref<2x64x32xf32, #tpu.memory_space<vmem>>, vector<1x64x32xf32>
    %340 = vector.shape_cast %339 : vector<1x64x32xf32> to vector<64x32xf32>
    %cst_114 = arith.constant dense<0.000000e+00> : vector<16x32xf32>
    %341 = tpu.matmul %338, %340, %cst_114 {dimension_numbers = #tpu.dot_dimension_numbers<[1], [0], [0], [1], [0, 0, 1, 1], [], []>} : vector<16x64xf32>, vector<64x32xf32>, vector<16x32xf32> -> vector<16x32xf32>
    %c0_115 = arith.constant 0 : index
    %c0_116 = arith.constant 0 : index
    %c0_117 = arith.constant 0 : index
    %342 = vector.load %arg12[%c0_115, %c0_116, %c0_117] : memref<2x1x32xf32, #tpu.memory_space<vmem>>, vector<1x1x32xf32>
    %343 = vector.shape_cast %342 : vector<1x1x32xf32> to vector<1x32xf32>
    %344 = vector.broadcast %343 : vector<1x32xf32> to vector<16x32xf32>
    %345 = arith.addf %341, %344 : vector<16x32xf32>
    %346 = arith.addf %345, %329 : vector<16x32xf32>
    %c2 = arith.constant 2 : index
    %c0_118 = arith.constant 0 : index
    %c0_119 = arith.constant 0 : index
    %347 = vector.load %arg7[%c2, %c0_118, %c0_119] : memref<6x1x32xf32, #tpu.memory_space<vmem>>, vector<1x1x32xf32>
    %348 = vector.shape_cast %347 : vector<1x1x32xf32> to vector<1x32xf32>
    %c2_120 = arith.constant 2 : index
    %c0_121 = arith.constant 0 : index
    %c0_122 = arith.constant 0 : index
    %349 = vector.load %arg8[%c2_120, %c0_121, %c0_122] : memref<6x1x32xf32, #tpu.memory_space<vmem>>, vector<1x1x32xf32>
    %350 = vector.shape_cast %349 : vector<1x1x32xf32> to vector<1x32xf32>
    %cst_123 = arith.constant dense<0.000000e+00> : vector<16xf32>
    %351 = vector.multi_reduction <add>, %346, %cst_123 [1] : vector<16x32xf32> to vector<16xf32>
    %352 = vector.shape_cast %351 : vector<16xf32> to vector<16x1xf32>
    %cst_124 = arith.constant 3.200000e+01 : f32
    %353 = vector.broadcast %cst_124 : f32 to vector<16x1xf32>
    %354 = arith.divf %352, %353 : vector<16x1xf32>
    %355 = vector.broadcast %354 : vector<16x1xf32> to vector<16x32xf32>
    %356 = arith.subf %346, %355 : vector<16x32xf32>
    %357 = arith.mulf %356, %356 : vector<16x32xf32>
    %cst_125 = arith.constant dense<0.000000e+00> : vector<16xf32>
    %358 = vector.multi_reduction <add>, %357, %cst_125 [1] : vector<16x32xf32> to vector<16xf32>
    %359 = vector.shape_cast %358 : vector<16xf32> to vector<16x1xf32>
    %cst_126 = arith.constant 3.200000e+01 : f32
    %360 = vector.broadcast %cst_126 : f32 to vector<16x1xf32>
    %361 = arith.divf %359, %360 : vector<16x1xf32>
    %362 = vector.broadcast %354 : vector<16x1xf32> to vector<16x32xf32>
    %363 = arith.subf %346, %362 : vector<16x32xf32>
    %cst_127 = arith.constant 9.99999974E-6 : f32
    %364 = vector.broadcast %cst_127 : f32 to vector<16x1xf32>
    %365 = arith.addf %361, %364 : vector<16x1xf32>
    %366 = math.rsqrt %365 : vector<16x1xf32>
    %367 = vector.broadcast %366 : vector<16x1xf32> to vector<16x32xf32>
    %368 = arith.mulf %363, %367 : vector<16x32xf32>
    %369 = vector.broadcast %348 : vector<1x32xf32> to vector<16x32xf32>
    %370 = arith.mulf %368, %369 : vector<16x32xf32>
    %371 = vector.broadcast %350 : vector<1x32xf32> to vector<16x32xf32>
    %372 = arith.addf %370, %371 : vector<16x32xf32>
    %c2_128 = arith.constant 2 : index
    %c0_129 = arith.constant 0 : index
    %c0_130 = arith.constant 0 : index
    %373 = vector.load %arg3[%c2_128, %c0_129, %c0_130] : memref<4x32x96xf32, #tpu.memory_space<vmem>>, vector<1x32x96xf32>
    %374 = vector.shape_cast %373 : vector<1x32x96xf32> to vector<32x96xf32>
    %c2_131 = arith.constant 2 : index
    %c0_132 = arith.constant 0 : index
    %c0_133 = arith.constant 0 : index
    %375 = vector.load %arg4[%c2_131, %c0_132, %c0_133] : memref<4x1x96xf32, #tpu.memory_space<vmem>>, vector<1x1x96xf32>
    %376 = vector.shape_cast %375 : vector<1x1x96xf32> to vector<1x96xf32>
    %c2_134 = arith.constant 2 : index
    %c0_135 = arith.constant 0 : index
    %c0_136 = arith.constant 0 : index
    %377 = vector.load %arg5[%c2_134, %c0_135, %c0_136] : memref<4x32x32xf32, #tpu.memory_space<vmem>>, vector<1x32x32xf32>
    %378 = vector.shape_cast %377 : vector<1x32x32xf32> to vector<32x32xf32>
    %c2_137 = arith.constant 2 : index
    %c0_138 = arith.constant 0 : index
    %c0_139 = arith.constant 0 : index
    %379 = vector.load %arg6[%c2_137, %c0_138, %c0_139] : memref<4x1x32xf32, #tpu.memory_space<vmem>>, vector<1x1x32xf32>
    %380 = vector.shape_cast %379 : vector<1x1x32xf32> to vector<1x32xf32>
    %381 = vector.extract_strided_slice %374 {offsets = [0, 0], sizes = [32, 64], strides = [1, 1]} : vector<32x96xf32> to vector<32x64xf32>
    %cst_140 = arith.constant dense<0.000000e+00> : vector<16x64xf32>
    %382 = tpu.matmul %0, %381, %cst_140 {dimension_numbers = #tpu.dot_dimension_numbers<[1], [0], [0], [1], [0, 0, 1, 1], [], []>} : vector<16x32xf32>, vector<32x64xf32>, vector<16x64xf32> -> vector<16x64xf32>
    %383 = vector.extract_strided_slice %376 {offsets = [0, 0], sizes = [1, 64], strides = [1, 1]} : vector<1x96xf32> to vector<1x64xf32>
    %384 = vector.broadcast %383 : vector<1x64xf32> to vector<16x64xf32>
    %385 = arith.addf %382, %384 : vector<16x64xf32>
    %386 = vector.extract_strided_slice %385 {offsets = [0, 0], sizes = [16, 32], strides = [1, 1]} : vector<16x64xf32> to vector<16x32xf32>
    %387 = vector.extract_strided_slice %385 {offsets = [0, 32], sizes = [16, 32], strides = [1, 1]} : vector<16x64xf32> to vector<16x32xf32>
    %388 = vector.extract_strided_slice %374 {offsets = [0, 64], sizes = [32, 32], strides = [1, 1]} : vector<32x96xf32> to vector<32x32xf32>
    %cst_141 = arith.constant dense<0.000000e+00> : vector<16x32xf32>
    %389 = tpu.matmul %372, %388, %cst_141 {dimension_numbers = #tpu.dot_dimension_numbers<[1], [0], [0], [1], [0, 0, 1, 1], [], []>} : vector<16x32xf32>, vector<32x32xf32>, vector<16x32xf32> -> vector<16x32xf32>
    %390 = vector.extract_strided_slice %376 {offsets = [0, 64], sizes = [1, 32], strides = [1, 1]} : vector<1x96xf32> to vector<1x32xf32>
    %391 = vector.broadcast %390 : vector<1x32xf32> to vector<16x32xf32>
    %392 = arith.addf %389, %391 : vector<16x32xf32>
    %393 = vector.extract_strided_slice %386 {offsets = [0, 0], sizes = [8, 32], strides = [1, 1]} : vector<16x32xf32> to vector<8x32xf32>
    %394 = vector.extract_strided_slice %387 {offsets = [0, 0], sizes = [8, 32], strides = [1, 1]} : vector<16x32xf32> to vector<8x32xf32>
    %395 = vector.extract_strided_slice %392 {offsets = [0, 0], sizes = [8, 32], strides = [1, 1]} : vector<16x32xf32> to vector<8x32xf32>
    %396 = vector.extract_strided_slice %393 {offsets = [0, 0], sizes = [8, 8], strides = [1, 1]} : vector<8x32xf32> to vector<8x8xf32>
    %397 = vector.extract_strided_slice %394 {offsets = [0, 0], sizes = [8, 8], strides = [1, 1]} : vector<8x32xf32> to vector<8x8xf32>
    %cst_142 = arith.constant dense<0.000000e+00> : vector<8x8xf32>
    %398 = tpu.matmul %396, %397, %cst_142 {dimension_numbers = #tpu.dot_dimension_numbers<[1], [1], [0], [0], [0, 0, 1, 0], [], []>} : vector<8x8xf32>, vector<8x8xf32>, vector<8x8xf32> -> vector<8x8xf32>
    %cst_143 = arith.constant 0.353553385 : f32
    %399 = vector.broadcast %cst_143 : f32 to vector<8x8xf32>
    %400 = arith.mulf %398, %399 : vector<8x8xf32>
    %401 = vector.extract_strided_slice %393 {offsets = [0, 8], sizes = [8, 8], strides = [1, 1]} : vector<8x32xf32> to vector<8x8xf32>
    %402 = vector.extract_strided_slice %394 {offsets = [0, 8], sizes = [8, 8], strides = [1, 1]} : vector<8x32xf32> to vector<8x8xf32>
    %cst_144 = arith.constant dense<0.000000e+00> : vector<8x8xf32>
    %403 = tpu.matmul %401, %402, %cst_144 {dimension_numbers = #tpu.dot_dimension_numbers<[1], [1], [0], [0], [0, 0, 1, 0], [], []>} : vector<8x8xf32>, vector<8x8xf32>, vector<8x8xf32> -> vector<8x8xf32>
    %cst_145 = arith.constant 0.353553385 : f32
    %404 = vector.broadcast %cst_145 : f32 to vector<8x8xf32>
    %405 = arith.mulf %403, %404 : vector<8x8xf32>
    %406 = vector.extract_strided_slice %393 {offsets = [0, 16], sizes = [8, 8], strides = [1, 1]} : vector<8x32xf32> to vector<8x8xf32>
    %407 = vector.extract_strided_slice %394 {offsets = [0, 16], sizes = [8, 8], strides = [1, 1]} : vector<8x32xf32> to vector<8x8xf32>
    %cst_146 = arith.constant dense<0.000000e+00> : vector<8x8xf32>
    %408 = tpu.matmul %406, %407, %cst_146 {dimension_numbers = #tpu.dot_dimension_numbers<[1], [1], [0], [0], [0, 0, 1, 0], [], []>} : vector<8x8xf32>, vector<8x8xf32>, vector<8x8xf32> -> vector<8x8xf32>
    %cst_147 = arith.constant 0.353553385 : f32
    %409 = vector.broadcast %cst_147 : f32 to vector<8x8xf32>
    %410 = arith.mulf %408, %409 : vector<8x8xf32>
    %411 = vector.extract_strided_slice %393 {offsets = [0, 24], sizes = [8, 8], strides = [1, 1]} : vector<8x32xf32> to vector<8x8xf32>
    %412 = vector.extract_strided_slice %394 {offsets = [0, 24], sizes = [8, 8], strides = [1, 1]} : vector<8x32xf32> to vector<8x8xf32>
    %cst_148 = arith.constant dense<0.000000e+00> : vector<8x8xf32>
    %413 = tpu.matmul %411, %412, %cst_148 {dimension_numbers = #tpu.dot_dimension_numbers<[1], [1], [0], [0], [0, 0, 1, 0], [], []>} : vector<8x8xf32>, vector<8x8xf32>, vector<8x8xf32> -> vector<8x8xf32>
    %cst_149 = arith.constant 0.353553385 : f32
    %414 = vector.broadcast %cst_149 : f32 to vector<8x8xf32>
    %415 = arith.mulf %413, %414 : vector<8x8xf32>
    %416 = arith.maximumf %400, %405 : vector<8x8xf32>
    %417 = arith.maximumf %416, %410 : vector<8x8xf32>
    %418 = arith.maximumf %417, %415 : vector<8x8xf32>
    %419 = arith.subf %400, %418 : vector<8x8xf32>
    %420 = arith.subf %405, %418 : vector<8x8xf32>
    %421 = arith.subf %410, %418 : vector<8x8xf32>
    %422 = arith.subf %415, %418 : vector<8x8xf32>
    %423 = tpu.concatenate %419, %420, %421, %422 in 1 : vector<8x8xf32>, vector<8x8xf32>, vector<8x8xf32>, vector<8x8xf32> -> vector<8x32xf32>
    %424 = math.exp %423 : vector<8x32xf32>
    %425 = vector.extract_strided_slice %424 {offsets = [0, 0], sizes = [8, 8], strides = [1, 1]} : vector<8x32xf32> to vector<8x8xf32>
    %426 = vector.extract_strided_slice %424 {offsets = [0, 8], sizes = [8, 8], strides = [1, 1]} : vector<8x32xf32> to vector<8x8xf32>
    %427 = arith.addf %425, %426 : vector<8x8xf32>
    %428 = vector.extract_strided_slice %424 {offsets = [0, 16], sizes = [8, 8], strides = [1, 1]} : vector<8x32xf32> to vector<8x8xf32>
    %429 = arith.addf %427, %428 : vector<8x8xf32>
    %430 = vector.extract_strided_slice %424 {offsets = [0, 24], sizes = [8, 8], strides = [1, 1]} : vector<8x32xf32> to vector<8x8xf32>
    %431 = arith.addf %429, %430 : vector<8x8xf32>
    %432 = tpu.reciprocal %431 {approx = true} : vector<8x8xf32> -> vector<8x8xf32>
    %433 = vector.extract_strided_slice %424 {offsets = [0, 0], sizes = [8, 8], strides = [1, 1]} : vector<8x32xf32> to vector<8x8xf32>
    %434 = arith.mulf %433, %432 : vector<8x8xf32>
    %435 = vector.extract_strided_slice %395 {offsets = [0, 0], sizes = [8, 8], strides = [1, 1]} : vector<8x32xf32> to vector<8x8xf32>
    %cst_150 = arith.constant dense<0.000000e+00> : vector<8x8xf32>
    %436 = tpu.matmul %434, %435, %cst_150 {dimension_numbers = #tpu.dot_dimension_numbers<[1], [0], [0], [1], [0, 0, 1, 1], [], []>} : vector<8x8xf32>, vector<8x8xf32>, vector<8x8xf32> -> vector<8x8xf32>
    %437 = vector.extract_strided_slice %424 {offsets = [0, 8], sizes = [8, 8], strides = [1, 1]} : vector<8x32xf32> to vector<8x8xf32>
    %438 = arith.mulf %437, %432 : vector<8x8xf32>
    %439 = vector.extract_strided_slice %395 {offsets = [0, 8], sizes = [8, 8], strides = [1, 1]} : vector<8x32xf32> to vector<8x8xf32>
    %cst_151 = arith.constant dense<0.000000e+00> : vector<8x8xf32>
    %440 = tpu.matmul %438, %439, %cst_151 {dimension_numbers = #tpu.dot_dimension_numbers<[1], [0], [0], [1], [0, 0, 1, 1], [], []>} : vector<8x8xf32>, vector<8x8xf32>, vector<8x8xf32> -> vector<8x8xf32>
    %441 = vector.extract_strided_slice %424 {offsets = [0, 16], sizes = [8, 8], strides = [1, 1]} : vector<8x32xf32> to vector<8x8xf32>
    %442 = arith.mulf %441, %432 : vector<8x8xf32>
    %443 = vector.extract_strided_slice %395 {offsets = [0, 16], sizes = [8, 8], strides = [1, 1]} : vector<8x32xf32> to vector<8x8xf32>
    %cst_152 = arith.constant dense<0.000000e+00> : vector<8x8xf32>
    %444 = tpu.matmul %442, %443, %cst_152 {dimension_numbers = #tpu.dot_dimension_numbers<[1], [0], [0], [1], [0, 0, 1, 1], [], []>} : vector<8x8xf32>, vector<8x8xf32>, vector<8x8xf32> -> vector<8x8xf32>
    %445 = vector.extract_strided_slice %424 {offsets = [0, 24], sizes = [8, 8], strides = [1, 1]} : vector<8x32xf32> to vector<8x8xf32>
    %446 = arith.mulf %445, %432 : vector<8x8xf32>
    %447 = vector.extract_strided_slice %395 {offsets = [0, 24], sizes = [8, 8], strides = [1, 1]} : vector<8x32xf32> to vector<8x8xf32>
    %cst_153 = arith.constant dense<0.000000e+00> : vector<8x8xf32>
    %448 = tpu.matmul %446, %447, %cst_153 {dimension_numbers = #tpu.dot_dimension_numbers<[1], [0], [0], [1], [0, 0, 1, 1], [], []>} : vector<8x8xf32>, vector<8x8xf32>, vector<8x8xf32> -> vector<8x8xf32>
    %449 = tpu.concatenate %436, %440, %444, %448 in 1 : vector<8x8xf32>, vector<8x8xf32>, vector<8x8xf32>, vector<8x8xf32> -> vector<8x32xf32>
    %450 = vector.extract_strided_slice %386 {offsets = [8, 0], sizes = [8, 32], strides = [1, 1]} : vector<16x32xf32> to vector<8x32xf32>
    %451 = vector.extract_strided_slice %387 {offsets = [8, 0], sizes = [8, 32], strides = [1, 1]} : vector<16x32xf32> to vector<8x32xf32>
    %452 = vector.extract_strided_slice %392 {offsets = [8, 0], sizes = [8, 32], strides = [1, 1]} : vector<16x32xf32> to vector<8x32xf32>
    %453 = vector.extract_strided_slice %450 {offsets = [0, 0], sizes = [8, 8], strides = [1, 1]} : vector<8x32xf32> to vector<8x8xf32>
    %454 = vector.extract_strided_slice %451 {offsets = [0, 0], sizes = [8, 8], strides = [1, 1]} : vector<8x32xf32> to vector<8x8xf32>
    %cst_154 = arith.constant dense<0.000000e+00> : vector<8x8xf32>
    %455 = tpu.matmul %453, %454, %cst_154 {dimension_numbers = #tpu.dot_dimension_numbers<[1], [1], [0], [0], [0, 0, 1, 0], [], []>} : vector<8x8xf32>, vector<8x8xf32>, vector<8x8xf32> -> vector<8x8xf32>
    %cst_155 = arith.constant 0.353553385 : f32
    %456 = vector.broadcast %cst_155 : f32 to vector<8x8xf32>
    %457 = arith.mulf %455, %456 : vector<8x8xf32>
    %458 = vector.extract_strided_slice %450 {offsets = [0, 8], sizes = [8, 8], strides = [1, 1]} : vector<8x32xf32> to vector<8x8xf32>
    %459 = vector.extract_strided_slice %451 {offsets = [0, 8], sizes = [8, 8], strides = [1, 1]} : vector<8x32xf32> to vector<8x8xf32>
    %cst_156 = arith.constant dense<0.000000e+00> : vector<8x8xf32>
    %460 = tpu.matmul %458, %459, %cst_156 {dimension_numbers = #tpu.dot_dimension_numbers<[1], [1], [0], [0], [0, 0, 1, 0], [], []>} : vector<8x8xf32>, vector<8x8xf32>, vector<8x8xf32> -> vector<8x8xf32>
    %cst_157 = arith.constant 0.353553385 : f32
    %461 = vector.broadcast %cst_157 : f32 to vector<8x8xf32>
    %462 = arith.mulf %460, %461 : vector<8x8xf32>
    %463 = vector.extract_strided_slice %450 {offsets = [0, 16], sizes = [8, 8], strides = [1, 1]} : vector<8x32xf32> to vector<8x8xf32>
    %464 = vector.extract_strided_slice %451 {offsets = [0, 16], sizes = [8, 8], strides = [1, 1]} : vector<8x32xf32> to vector<8x8xf32>
    %cst_158 = arith.constant dense<0.000000e+00> : vector<8x8xf32>
    %465 = tpu.matmul %463, %464, %cst_158 {dimension_numbers = #tpu.dot_dimension_numbers<[1], [1], [0], [0], [0, 0, 1, 0], [], []>} : vector<8x8xf32>, vector<8x8xf32>, vector<8x8xf32> -> vector<8x8xf32>
    %cst_159 = arith.constant 0.353553385 : f32
    %466 = vector.broadcast %cst_159 : f32 to vector<8x8xf32>
    %467 = arith.mulf %465, %466 : vector<8x8xf32>
    %468 = vector.extract_strided_slice %450 {offsets = [0, 24], sizes = [8, 8], strides = [1, 1]} : vector<8x32xf32> to vector<8x8xf32>
    %469 = vector.extract_strided_slice %451 {offsets = [0, 24], sizes = [8, 8], strides = [1, 1]} : vector<8x32xf32> to vector<8x8xf32>
    %cst_160 = arith.constant dense<0.000000e+00> : vector<8x8xf32>
    %470 = tpu.matmul %468, %469, %cst_160 {dimension_numbers = #tpu.dot_dimension_numbers<[1], [1], [0], [0], [0, 0, 1, 0], [], []>} : vector<8x8xf32>, vector<8x8xf32>, vector<8x8xf32> -> vector<8x8xf32>
    %cst_161 = arith.constant 0.353553385 : f32
    %471 = vector.broadcast %cst_161 : f32 to vector<8x8xf32>
    %472 = arith.mulf %470, %471 : vector<8x8xf32>
    %473 = arith.maximumf %457, %462 : vector<8x8xf32>
    %474 = arith.maximumf %473, %467 : vector<8x8xf32>
    %475 = arith.maximumf %474, %472 : vector<8x8xf32>
    %476 = arith.subf %457, %475 : vector<8x8xf32>
    %477 = arith.subf %462, %475 : vector<8x8xf32>
    %478 = arith.subf %467, %475 : vector<8x8xf32>
    %479 = arith.subf %472, %475 : vector<8x8xf32>
    %480 = tpu.concatenate %476, %477, %478, %479 in 1 : vector<8x8xf32>, vector<8x8xf32>, vector<8x8xf32>, vector<8x8xf32> -> vector<8x32xf32>
    %481 = math.exp %480 : vector<8x32xf32>
    %482 = vector.extract_strided_slice %481 {offsets = [0, 0], sizes = [8, 8], strides = [1, 1]} : vector<8x32xf32> to vector<8x8xf32>
    %483 = vector.extract_strided_slice %481 {offsets = [0, 8], sizes = [8, 8], strides = [1, 1]} : vector<8x32xf32> to vector<8x8xf32>
    %484 = arith.addf %482, %483 : vector<8x8xf32>
    %485 = vector.extract_strided_slice %481 {offsets = [0, 16], sizes = [8, 8], strides = [1, 1]} : vector<8x32xf32> to vector<8x8xf32>
    %486 = arith.addf %484, %485 : vector<8x8xf32>
    %487 = vector.extract_strided_slice %481 {offsets = [0, 24], sizes = [8, 8], strides = [1, 1]} : vector<8x32xf32> to vector<8x8xf32>
    %488 = arith.addf %486, %487 : vector<8x8xf32>
    %489 = tpu.reciprocal %488 {approx = true} : vector<8x8xf32> -> vector<8x8xf32>
    %490 = vector.extract_strided_slice %481 {offsets = [0, 0], sizes = [8, 8], strides = [1, 1]} : vector<8x32xf32> to vector<8x8xf32>
    %491 = arith.mulf %490, %489 : vector<8x8xf32>
    %492 = vector.extract_strided_slice %452 {offsets = [0, 0], sizes = [8, 8], strides = [1, 1]} : vector<8x32xf32> to vector<8x8xf32>
    %cst_162 = arith.constant dense<0.000000e+00> : vector<8x8xf32>
    %493 = tpu.matmul %491, %492, %cst_162 {dimension_numbers = #tpu.dot_dimension_numbers<[1], [0], [0], [1], [0, 0, 1, 1], [], []>} : vector<8x8xf32>, vector<8x8xf32>, vector<8x8xf32> -> vector<8x8xf32>
    %494 = vector.extract_strided_slice %481 {offsets = [0, 8], sizes = [8, 8], strides = [1, 1]} : vector<8x32xf32> to vector<8x8xf32>
    %495 = arith.mulf %494, %489 : vector<8x8xf32>
    %496 = vector.extract_strided_slice %452 {offsets = [0, 8], sizes = [8, 8], strides = [1, 1]} : vector<8x32xf32> to vector<8x8xf32>
    %cst_163 = arith.constant dense<0.000000e+00> : vector<8x8xf32>
    %497 = tpu.matmul %495, %496, %cst_163 {dimension_numbers = #tpu.dot_dimension_numbers<[1], [0], [0], [1], [0, 0, 1, 1], [], []>} : vector<8x8xf32>, vector<8x8xf32>, vector<8x8xf32> -> vector<8x8xf32>
    %498 = vector.extract_strided_slice %481 {offsets = [0, 16], sizes = [8, 8], strides = [1, 1]} : vector<8x32xf32> to vector<8x8xf32>
    %499 = arith.mulf %498, %489 : vector<8x8xf32>
    %500 = vector.extract_strided_slice %452 {offsets = [0, 16], sizes = [8, 8], strides = [1, 1]} : vector<8x32xf32> to vector<8x8xf32>
    %cst_164 = arith.constant dense<0.000000e+00> : vector<8x8xf32>
    %501 = tpu.matmul %499, %500, %cst_164 {dimension_numbers = #tpu.dot_dimension_numbers<[1], [0], [0], [1], [0, 0, 1, 1], [], []>} : vector<8x8xf32>, vector<8x8xf32>, vector<8x8xf32> -> vector<8x8xf32>
    %502 = vector.extract_strided_slice %481 {offsets = [0, 24], sizes = [8, 8], strides = [1, 1]} : vector<8x32xf32> to vector<8x8xf32>
    %503 = arith.mulf %502, %489 : vector<8x8xf32>
    %504 = vector.extract_strided_slice %452 {offsets = [0, 24], sizes = [8, 8], strides = [1, 1]} : vector<8x32xf32> to vector<8x8xf32>
    %cst_165 = arith.constant dense<0.000000e+00> : vector<8x8xf32>
    %505 = tpu.matmul %503, %504, %cst_165 {dimension_numbers = #tpu.dot_dimension_numbers<[1], [0], [0], [1], [0, 0, 1, 1], [], []>} : vector<8x8xf32>, vector<8x8xf32>, vector<8x8xf32> -> vector<8x8xf32>
    %506 = tpu.concatenate %493, %497, %501, %505 in 1 : vector<8x8xf32>, vector<8x8xf32>, vector<8x8xf32>, vector<8x8xf32> -> vector<8x32xf32>
    %507 = tpu.concatenate %449, %506 in 0 : vector<8x32xf32>, vector<8x32xf32> -> vector<16x32xf32>
    %cst_166 = arith.constant dense<0.000000e+00> : vector<16x32xf32>
    %508 = tpu.matmul %507, %378, %cst_166 {dimension_numbers = #tpu.dot_dimension_numbers<[1], [0], [0], [1], [0, 0, 1, 1], [], []>} : vector<16x32xf32>, vector<32x32xf32>, vector<16x32xf32> -> vector<16x32xf32>
    %509 = vector.broadcast %380 : vector<1x32xf32> to vector<16x32xf32>
    %510 = arith.addf %508, %509 : vector<16x32xf32>
    %511 = arith.addf %510, %372 : vector<16x32xf32>
    %c3 = arith.constant 3 : index
    %c0_167 = arith.constant 0 : index
    %c0_168 = arith.constant 0 : index
    %512 = vector.load %arg7[%c3, %c0_167, %c0_168] : memref<6x1x32xf32, #tpu.memory_space<vmem>>, vector<1x1x32xf32>
    %513 = vector.shape_cast %512 : vector<1x1x32xf32> to vector<1x32xf32>
    %c3_169 = arith.constant 3 : index
    %c0_170 = arith.constant 0 : index
    %c0_171 = arith.constant 0 : index
    %514 = vector.load %arg8[%c3_169, %c0_170, %c0_171] : memref<6x1x32xf32, #tpu.memory_space<vmem>>, vector<1x1x32xf32>
    %515 = vector.shape_cast %514 : vector<1x1x32xf32> to vector<1x32xf32>
    %cst_172 = arith.constant dense<0.000000e+00> : vector<16xf32>
    %516 = vector.multi_reduction <add>, %511, %cst_172 [1] : vector<16x32xf32> to vector<16xf32>
    %517 = vector.shape_cast %516 : vector<16xf32> to vector<16x1xf32>
    %cst_173 = arith.constant 3.200000e+01 : f32
    %518 = vector.broadcast %cst_173 : f32 to vector<16x1xf32>
    %519 = arith.divf %517, %518 : vector<16x1xf32>
    %520 = vector.broadcast %519 : vector<16x1xf32> to vector<16x32xf32>
    %521 = arith.subf %511, %520 : vector<16x32xf32>
    %522 = arith.mulf %521, %521 : vector<16x32xf32>
    %cst_174 = arith.constant dense<0.000000e+00> : vector<16xf32>
    %523 = vector.multi_reduction <add>, %522, %cst_174 [1] : vector<16x32xf32> to vector<16xf32>
    %524 = vector.shape_cast %523 : vector<16xf32> to vector<16x1xf32>
    %cst_175 = arith.constant 3.200000e+01 : f32
    %525 = vector.broadcast %cst_175 : f32 to vector<16x1xf32>
    %526 = arith.divf %524, %525 : vector<16x1xf32>
    %527 = vector.broadcast %519 : vector<16x1xf32> to vector<16x32xf32>
    %528 = arith.subf %511, %527 : vector<16x32xf32>
    %cst_176 = arith.constant 9.99999974E-6 : f32
    %529 = vector.broadcast %cst_176 : f32 to vector<16x1xf32>
    %530 = arith.addf %526, %529 : vector<16x1xf32>
    %531 = math.rsqrt %530 : vector<16x1xf32>
    %532 = vector.broadcast %531 : vector<16x1xf32> to vector<16x32xf32>
    %533 = arith.mulf %528, %532 : vector<16x32xf32>
    %534 = vector.broadcast %513 : vector<1x32xf32> to vector<16x32xf32>
    %535 = arith.mulf %533, %534 : vector<16x32xf32>
    %536 = vector.broadcast %515 : vector<1x32xf32> to vector<16x32xf32>
    %537 = arith.addf %535, %536 : vector<16x32xf32>
    %c3_177 = arith.constant 3 : index
    %c0_178 = arith.constant 0 : index
    %c0_179 = arith.constant 0 : index
    %538 = vector.load %arg3[%c3_177, %c0_178, %c0_179] : memref<4x32x96xf32, #tpu.memory_space<vmem>>, vector<1x32x96xf32>
    %539 = vector.shape_cast %538 : vector<1x32x96xf32> to vector<32x96xf32>
    %c3_180 = arith.constant 3 : index
    %c0_181 = arith.constant 0 : index
    %c0_182 = arith.constant 0 : index
    %540 = vector.load %arg4[%c3_180, %c0_181, %c0_182] : memref<4x1x96xf32, #tpu.memory_space<vmem>>, vector<1x1x96xf32>
    %541 = vector.shape_cast %540 : vector<1x1x96xf32> to vector<1x96xf32>
    %c3_183 = arith.constant 3 : index
    %c0_184 = arith.constant 0 : index
    %c0_185 = arith.constant 0 : index
    %542 = vector.load %arg5[%c3_183, %c0_184, %c0_185] : memref<4x32x32xf32, #tpu.memory_space<vmem>>, vector<1x32x32xf32>
    %543 = vector.shape_cast %542 : vector<1x32x32xf32> to vector<32x32xf32>
    %c3_186 = arith.constant 3 : index
    %c0_187 = arith.constant 0 : index
    %c0_188 = arith.constant 0 : index
    %544 = vector.load %arg6[%c3_186, %c0_187, %c0_188] : memref<4x1x32xf32, #tpu.memory_space<vmem>>, vector<1x1x32xf32>
    %545 = vector.shape_cast %544 : vector<1x1x32xf32> to vector<1x32xf32>
    %cst_189 = arith.constant dense<0.000000e+00> : vector<16x96xf32>
    %546 = tpu.matmul %537, %539, %cst_189 {dimension_numbers = #tpu.dot_dimension_numbers<[1], [0], [0], [1], [0, 0, 1, 1], [], []>} : vector<16x32xf32>, vector<32x96xf32>, vector<16x96xf32> -> vector<16x96xf32>
    %547 = vector.broadcast %541 : vector<1x96xf32> to vector<16x96xf32>
    %548 = arith.addf %546, %547 : vector<16x96xf32>
    %549 = vector.extract_strided_slice %548 {offsets = [0, 0], sizes = [16, 32], strides = [1, 1]} : vector<16x96xf32> to vector<16x32xf32>
    %550 = vector.extract_strided_slice %548 {offsets = [0, 32], sizes = [16, 32], strides = [1, 1]} : vector<16x96xf32> to vector<16x32xf32>
    %551 = vector.extract_strided_slice %548 {offsets = [0, 64], sizes = [16, 32], strides = [1, 1]} : vector<16x96xf32> to vector<16x32xf32>
    %552 = vector.extract_strided_slice %549 {offsets = [0, 0], sizes = [8, 32], strides = [1, 1]} : vector<16x32xf32> to vector<8x32xf32>
    %553 = vector.extract_strided_slice %550 {offsets = [0, 0], sizes = [8, 32], strides = [1, 1]} : vector<16x32xf32> to vector<8x32xf32>
    %554 = vector.extract_strided_slice %551 {offsets = [0, 0], sizes = [8, 32], strides = [1, 1]} : vector<16x32xf32> to vector<8x32xf32>
    %555 = vector.extract_strided_slice %552 {offsets = [0, 0], sizes = [8, 8], strides = [1, 1]} : vector<8x32xf32> to vector<8x8xf32>
    %556 = vector.extract_strided_slice %553 {offsets = [0, 0], sizes = [8, 8], strides = [1, 1]} : vector<8x32xf32> to vector<8x8xf32>
    %cst_190 = arith.constant dense<0.000000e+00> : vector<8x8xf32>
    %557 = tpu.matmul %555, %556, %cst_190 {dimension_numbers = #tpu.dot_dimension_numbers<[1], [1], [0], [0], [0, 0, 1, 0], [], []>} : vector<8x8xf32>, vector<8x8xf32>, vector<8x8xf32> -> vector<8x8xf32>
    %cst_191 = arith.constant 0.353553385 : f32
    %558 = vector.broadcast %cst_191 : f32 to vector<8x8xf32>
    %559 = arith.mulf %557, %558 : vector<8x8xf32>
    %560 = vector.extract_strided_slice %552 {offsets = [0, 8], sizes = [8, 8], strides = [1, 1]} : vector<8x32xf32> to vector<8x8xf32>
    %561 = vector.extract_strided_slice %553 {offsets = [0, 8], sizes = [8, 8], strides = [1, 1]} : vector<8x32xf32> to vector<8x8xf32>
    %cst_192 = arith.constant dense<0.000000e+00> : vector<8x8xf32>
    %562 = tpu.matmul %560, %561, %cst_192 {dimension_numbers = #tpu.dot_dimension_numbers<[1], [1], [0], [0], [0, 0, 1, 0], [], []>} : vector<8x8xf32>, vector<8x8xf32>, vector<8x8xf32> -> vector<8x8xf32>
    %cst_193 = arith.constant 0.353553385 : f32
    %563 = vector.broadcast %cst_193 : f32 to vector<8x8xf32>
    %564 = arith.mulf %562, %563 : vector<8x8xf32>
    %565 = vector.extract_strided_slice %552 {offsets = [0, 16], sizes = [8, 8], strides = [1, 1]} : vector<8x32xf32> to vector<8x8xf32>
    %566 = vector.extract_strided_slice %553 {offsets = [0, 16], sizes = [8, 8], strides = [1, 1]} : vector<8x32xf32> to vector<8x8xf32>
    %cst_194 = arith.constant dense<0.000000e+00> : vector<8x8xf32>
    %567 = tpu.matmul %565, %566, %cst_194 {dimension_numbers = #tpu.dot_dimension_numbers<[1], [1], [0], [0], [0, 0, 1, 0], [], []>} : vector<8x8xf32>, vector<8x8xf32>, vector<8x8xf32> -> vector<8x8xf32>
    %cst_195 = arith.constant 0.353553385 : f32
    %568 = vector.broadcast %cst_195 : f32 to vector<8x8xf32>
    %569 = arith.mulf %567, %568 : vector<8x8xf32>
    %570 = vector.extract_strided_slice %552 {offsets = [0, 24], sizes = [8, 8], strides = [1, 1]} : vector<8x32xf32> to vector<8x8xf32>
    %571 = vector.extract_strided_slice %553 {offsets = [0, 24], sizes = [8, 8], strides = [1, 1]} : vector<8x32xf32> to vector<8x8xf32>
    %cst_196 = arith.constant dense<0.000000e+00> : vector<8x8xf32>
    %572 = tpu.matmul %570, %571, %cst_196 {dimension_numbers = #tpu.dot_dimension_numbers<[1], [1], [0], [0], [0, 0, 1, 0], [], []>} : vector<8x8xf32>, vector<8x8xf32>, vector<8x8xf32> -> vector<8x8xf32>
    %cst_197 = arith.constant 0.353553385 : f32
    %573 = vector.broadcast %cst_197 : f32 to vector<8x8xf32>
    %574 = arith.mulf %572, %573 : vector<8x8xf32>
    %575 = arith.maximumf %559, %564 : vector<8x8xf32>
    %576 = arith.maximumf %575, %569 : vector<8x8xf32>
    %577 = arith.maximumf %576, %574 : vector<8x8xf32>
    %578 = arith.subf %559, %577 : vector<8x8xf32>
    %579 = arith.subf %564, %577 : vector<8x8xf32>
    %580 = arith.subf %569, %577 : vector<8x8xf32>
    %581 = arith.subf %574, %577 : vector<8x8xf32>
    %582 = tpu.concatenate %578, %579, %580, %581 in 1 : vector<8x8xf32>, vector<8x8xf32>, vector<8x8xf32>, vector<8x8xf32> -> vector<8x32xf32>
    %583 = math.exp %582 : vector<8x32xf32>
    %584 = vector.extract_strided_slice %583 {offsets = [0, 0], sizes = [8, 8], strides = [1, 1]} : vector<8x32xf32> to vector<8x8xf32>
    %585 = vector.extract_strided_slice %583 {offsets = [0, 8], sizes = [8, 8], strides = [1, 1]} : vector<8x32xf32> to vector<8x8xf32>
    %586 = arith.addf %584, %585 : vector<8x8xf32>
    %587 = vector.extract_strided_slice %583 {offsets = [0, 16], sizes = [8, 8], strides = [1, 1]} : vector<8x32xf32> to vector<8x8xf32>
    %588 = arith.addf %586, %587 : vector<8x8xf32>
    %589 = vector.extract_strided_slice %583 {offsets = [0, 24], sizes = [8, 8], strides = [1, 1]} : vector<8x32xf32> to vector<8x8xf32>
    %590 = arith.addf %588, %589 : vector<8x8xf32>
    %591 = tpu.reciprocal %590 {approx = true} : vector<8x8xf32> -> vector<8x8xf32>
    %592 = vector.extract_strided_slice %583 {offsets = [0, 0], sizes = [8, 8], strides = [1, 1]} : vector<8x32xf32> to vector<8x8xf32>
    %593 = arith.mulf %592, %591 : vector<8x8xf32>
    %594 = vector.extract_strided_slice %554 {offsets = [0, 0], sizes = [8, 8], strides = [1, 1]} : vector<8x32xf32> to vector<8x8xf32>
    %cst_198 = arith.constant dense<0.000000e+00> : vector<8x8xf32>
    %595 = tpu.matmul %593, %594, %cst_198 {dimension_numbers = #tpu.dot_dimension_numbers<[1], [0], [0], [1], [0, 0, 1, 1], [], []>} : vector<8x8xf32>, vector<8x8xf32>, vector<8x8xf32> -> vector<8x8xf32>
    %596 = vector.extract_strided_slice %583 {offsets = [0, 8], sizes = [8, 8], strides = [1, 1]} : vector<8x32xf32> to vector<8x8xf32>
    %597 = arith.mulf %596, %591 : vector<8x8xf32>
    %598 = vector.extract_strided_slice %554 {offsets = [0, 8], sizes = [8, 8], strides = [1, 1]} : vector<8x32xf32> to vector<8x8xf32>
    %cst_199 = arith.constant dense<0.000000e+00> : vector<8x8xf32>
    %599 = tpu.matmul %597, %598, %cst_199 {dimension_numbers = #tpu.dot_dimension_numbers<[1], [0], [0], [1], [0, 0, 1, 1], [], []>} : vector<8x8xf32>, vector<8x8xf32>, vector<8x8xf32> -> vector<8x8xf32>
    %600 = vector.extract_strided_slice %583 {offsets = [0, 16], sizes = [8, 8], strides = [1, 1]} : vector<8x32xf32> to vector<8x8xf32>
    %601 = arith.mulf %600, %591 : vector<8x8xf32>
    %602 = vector.extract_strided_slice %554 {offsets = [0, 16], sizes = [8, 8], strides = [1, 1]} : vector<8x32xf32> to vector<8x8xf32>
    %cst_200 = arith.constant dense<0.000000e+00> : vector<8x8xf32>
    %603 = tpu.matmul %601, %602, %cst_200 {dimension_numbers = #tpu.dot_dimension_numbers<[1], [0], [0], [1], [0, 0, 1, 1], [], []>} : vector<8x8xf32>, vector<8x8xf32>, vector<8x8xf32> -> vector<8x8xf32>
    %604 = vector.extract_strided_slice %583 {offsets = [0, 24], sizes = [8, 8], strides = [1, 1]} : vector<8x32xf32> to vector<8x8xf32>
    %605 = arith.mulf %604, %591 : vector<8x8xf32>
    %606 = vector.extract_strided_slice %554 {offsets = [0, 24], sizes = [8, 8], strides = [1, 1]} : vector<8x32xf32> to vector<8x8xf32>
    %cst_201 = arith.constant dense<0.000000e+00> : vector<8x8xf32>
    %607 = tpu.matmul %605, %606, %cst_201 {dimension_numbers = #tpu.dot_dimension_numbers<[1], [0], [0], [1], [0, 0, 1, 1], [], []>} : vector<8x8xf32>, vector<8x8xf32>, vector<8x8xf32> -> vector<8x8xf32>
    %608 = tpu.concatenate %595, %599, %603, %607 in 1 : vector<8x8xf32>, vector<8x8xf32>, vector<8x8xf32>, vector<8x8xf32> -> vector<8x32xf32>
    %609 = vector.extract_strided_slice %549 {offsets = [8, 0], sizes = [8, 32], strides = [1, 1]} : vector<16x32xf32> to vector<8x32xf32>
    %610 = vector.extract_strided_slice %550 {offsets = [8, 0], sizes = [8, 32], strides = [1, 1]} : vector<16x32xf32> to vector<8x32xf32>
    %611 = vector.extract_strided_slice %551 {offsets = [8, 0], sizes = [8, 32], strides = [1, 1]} : vector<16x32xf32> to vector<8x32xf32>
    %612 = vector.extract_strided_slice %609 {offsets = [0, 0], sizes = [8, 8], strides = [1, 1]} : vector<8x32xf32> to vector<8x8xf32>
    %613 = vector.extract_strided_slice %610 {offsets = [0, 0], sizes = [8, 8], strides = [1, 1]} : vector<8x32xf32> to vector<8x8xf32>
    %cst_202 = arith.constant dense<0.000000e+00> : vector<8x8xf32>
    %614 = tpu.matmul %612, %613, %cst_202 {dimension_numbers = #tpu.dot_dimension_numbers<[1], [1], [0], [0], [0, 0, 1, 0], [], []>} : vector<8x8xf32>, vector<8x8xf32>, vector<8x8xf32> -> vector<8x8xf32>
    %cst_203 = arith.constant 0.353553385 : f32
    %615 = vector.broadcast %cst_203 : f32 to vector<8x8xf32>
    %616 = arith.mulf %614, %615 : vector<8x8xf32>
    %617 = vector.extract_strided_slice %609 {offsets = [0, 8], sizes = [8, 8], strides = [1, 1]} : vector<8x32xf32> to vector<8x8xf32>
    %618 = vector.extract_strided_slice %610 {offsets = [0, 8], sizes = [8, 8], strides = [1, 1]} : vector<8x32xf32> to vector<8x8xf32>
    %cst_204 = arith.constant dense<0.000000e+00> : vector<8x8xf32>
    %619 = tpu.matmul %617, %618, %cst_204 {dimension_numbers = #tpu.dot_dimension_numbers<[1], [1], [0], [0], [0, 0, 1, 0], [], []>} : vector<8x8xf32>, vector<8x8xf32>, vector<8x8xf32> -> vector<8x8xf32>
    %cst_205 = arith.constant 0.353553385 : f32
    %620 = vector.broadcast %cst_205 : f32 to vector<8x8xf32>
    %621 = arith.mulf %619, %620 : vector<8x8xf32>
    %622 = vector.extract_strided_slice %609 {offsets = [0, 16], sizes = [8, 8], strides = [1, 1]} : vector<8x32xf32> to vector<8x8xf32>
    %623 = vector.extract_strided_slice %610 {offsets = [0, 16], sizes = [8, 8], strides = [1, 1]} : vector<8x32xf32> to vector<8x8xf32>
    %cst_206 = arith.constant dense<0.000000e+00> : vector<8x8xf32>
    %624 = tpu.matmul %622, %623, %cst_206 {dimension_numbers = #tpu.dot_dimension_numbers<[1], [1], [0], [0], [0, 0, 1, 0], [], []>} : vector<8x8xf32>, vector<8x8xf32>, vector<8x8xf32> -> vector<8x8xf32>
    %cst_207 = arith.constant 0.353553385 : f32
    %625 = vector.broadcast %cst_207 : f32 to vector<8x8xf32>
    %626 = arith.mulf %624, %625 : vector<8x8xf32>
    %627 = vector.extract_strided_slice %609 {offsets = [0, 24], sizes = [8, 8], strides = [1, 1]} : vector<8x32xf32> to vector<8x8xf32>
    %628 = vector.extract_strided_slice %610 {offsets = [0, 24], sizes = [8, 8], strides = [1, 1]} : vector<8x32xf32> to vector<8x8xf32>
    %cst_208 = arith.constant dense<0.000000e+00> : vector<8x8xf32>
    %629 = tpu.matmul %627, %628, %cst_208 {dimension_numbers = #tpu.dot_dimension_numbers<[1], [1], [0], [0], [0, 0, 1, 0], [], []>} : vector<8x8xf32>, vector<8x8xf32>, vector<8x8xf32> -> vector<8x8xf32>
    %cst_209 = arith.constant 0.353553385 : f32
    %630 = vector.broadcast %cst_209 : f32 to vector<8x8xf32>
    %631 = arith.mulf %629, %630 : vector<8x8xf32>
    %632 = arith.maximumf %616, %621 : vector<8x8xf32>
    %633 = arith.maximumf %632, %626 : vector<8x8xf32>
    %634 = arith.maximumf %633, %631 : vector<8x8xf32>
    %635 = arith.subf %616, %634 : vector<8x8xf32>
    %636 = arith.subf %621, %634 : vector<8x8xf32>
    %637 = arith.subf %626, %634 : vector<8x8xf32>
    %638 = arith.subf %631, %634 : vector<8x8xf32>
    %639 = tpu.concatenate %635, %636, %637, %638 in 1 : vector<8x8xf32>, vector<8x8xf32>, vector<8x8xf32>, vector<8x8xf32> -> vector<8x32xf32>
    %640 = math.exp %639 : vector<8x32xf32>
    %641 = vector.extract_strided_slice %640 {offsets = [0, 0], sizes = [8, 8], strides = [1, 1]} : vector<8x32xf32> to vector<8x8xf32>
    %642 = vector.extract_strided_slice %640 {offsets = [0, 8], sizes = [8, 8], strides = [1, 1]} : vector<8x32xf32> to vector<8x8xf32>
    %643 = arith.addf %641, %642 : vector<8x8xf32>
    %644 = vector.extract_strided_slice %640 {offsets = [0, 16], sizes = [8, 8], strides = [1, 1]} : vector<8x32xf32> to vector<8x8xf32>
    %645 = arith.addf %643, %644 : vector<8x8xf32>
    %646 = vector.extract_strided_slice %640 {offsets = [0, 24], sizes = [8, 8], strides = [1, 1]} : vector<8x32xf32> to vector<8x8xf32>
    %647 = arith.addf %645, %646 : vector<8x8xf32>
    %648 = tpu.reciprocal %647 {approx = true} : vector<8x8xf32> -> vector<8x8xf32>
    %649 = vector.extract_strided_slice %640 {offsets = [0, 0], sizes = [8, 8], strides = [1, 1]} : vector<8x32xf32> to vector<8x8xf32>
    %650 = arith.mulf %649, %648 : vector<8x8xf32>
    %651 = vector.extract_strided_slice %611 {offsets = [0, 0], sizes = [8, 8], strides = [1, 1]} : vector<8x32xf32> to vector<8x8xf32>
    %cst_210 = arith.constant dense<0.000000e+00> : vector<8x8xf32>
    %652 = tpu.matmul %650, %651, %cst_210 {dimension_numbers = #tpu.dot_dimension_numbers<[1], [0], [0], [1], [0, 0, 1, 1], [], []>} : vector<8x8xf32>, vector<8x8xf32>, vector<8x8xf32> -> vector<8x8xf32>
    %653 = vector.extract_strided_slice %640 {offsets = [0, 8], sizes = [8, 8], strides = [1, 1]} : vector<8x32xf32> to vector<8x8xf32>
    %654 = arith.mulf %653, %648 : vector<8x8xf32>
    %655 = vector.extract_strided_slice %611 {offsets = [0, 8], sizes = [8, 8], strides = [1, 1]} : vector<8x32xf32> to vector<8x8xf32>
    %cst_211 = arith.constant dense<0.000000e+00> : vector<8x8xf32>
    %656 = tpu.matmul %654, %655, %cst_211 {dimension_numbers = #tpu.dot_dimension_numbers<[1], [0], [0], [1], [0, 0, 1, 1], [], []>} : vector<8x8xf32>, vector<8x8xf32>, vector<8x8xf32> -> vector<8x8xf32>
    %657 = vector.extract_strided_slice %640 {offsets = [0, 16], sizes = [8, 8], strides = [1, 1]} : vector<8x32xf32> to vector<8x8xf32>
    %658 = arith.mulf %657, %648 : vector<8x8xf32>
    %659 = vector.extract_strided_slice %611 {offsets = [0, 16], sizes = [8, 8], strides = [1, 1]} : vector<8x32xf32> to vector<8x8xf32>
    %cst_212 = arith.constant dense<0.000000e+00> : vector<8x8xf32>
    %660 = tpu.matmul %658, %659, %cst_212 {dimension_numbers = #tpu.dot_dimension_numbers<[1], [0], [0], [1], [0, 0, 1, 1], [], []>} : vector<8x8xf32>, vector<8x8xf32>, vector<8x8xf32> -> vector<8x8xf32>
    %661 = vector.extract_strided_slice %640 {offsets = [0, 24], sizes = [8, 8], strides = [1, 1]} : vector<8x32xf32> to vector<8x8xf32>
    %662 = arith.mulf %661, %648 : vector<8x8xf32>
    %663 = vector.extract_strided_slice %611 {offsets = [0, 24], sizes = [8, 8], strides = [1, 1]} : vector<8x32xf32> to vector<8x8xf32>
    %cst_213 = arith.constant dense<0.000000e+00> : vector<8x8xf32>
    %664 = tpu.matmul %662, %663, %cst_213 {dimension_numbers = #tpu.dot_dimension_numbers<[1], [0], [0], [1], [0, 0, 1, 1], [], []>} : vector<8x8xf32>, vector<8x8xf32>, vector<8x8xf32> -> vector<8x8xf32>
    %665 = tpu.concatenate %652, %656, %660, %664 in 1 : vector<8x8xf32>, vector<8x8xf32>, vector<8x8xf32>, vector<8x8xf32> -> vector<8x32xf32>
    %666 = tpu.concatenate %608, %665 in 0 : vector<8x32xf32>, vector<8x32xf32> -> vector<16x32xf32>
    %cst_214 = arith.constant dense<0.000000e+00> : vector<16x32xf32>
    %667 = tpu.matmul %666, %543, %cst_214 {dimension_numbers = #tpu.dot_dimension_numbers<[1], [0], [0], [1], [0, 0, 1, 1], [], []>} : vector<16x32xf32>, vector<32x32xf32>, vector<16x32xf32> -> vector<16x32xf32>
    %668 = vector.broadcast %545 : vector<1x32xf32> to vector<16x32xf32>
    %669 = arith.addf %667, %668 : vector<16x32xf32>
    %670 = arith.addf %669, %537 : vector<16x32xf32>
    %c4 = arith.constant 4 : index
    %c0_215 = arith.constant 0 : index
    %c0_216 = arith.constant 0 : index
    %671 = vector.load %arg7[%c4, %c0_215, %c0_216] : memref<6x1x32xf32, #tpu.memory_space<vmem>>, vector<1x1x32xf32>
    %672 = vector.shape_cast %671 : vector<1x1x32xf32> to vector<1x32xf32>
    %c4_217 = arith.constant 4 : index
    %c0_218 = arith.constant 0 : index
    %c0_219 = arith.constant 0 : index
    %673 = vector.load %arg8[%c4_217, %c0_218, %c0_219] : memref<6x1x32xf32, #tpu.memory_space<vmem>>, vector<1x1x32xf32>
    %674 = vector.shape_cast %673 : vector<1x1x32xf32> to vector<1x32xf32>
    %cst_220 = arith.constant dense<0.000000e+00> : vector<16xf32>
    %675 = vector.multi_reduction <add>, %670, %cst_220 [1] : vector<16x32xf32> to vector<16xf32>
    %676 = vector.shape_cast %675 : vector<16xf32> to vector<16x1xf32>
    %cst_221 = arith.constant 3.200000e+01 : f32
    %677 = vector.broadcast %cst_221 : f32 to vector<16x1xf32>
    %678 = arith.divf %676, %677 : vector<16x1xf32>
    %679 = vector.broadcast %678 : vector<16x1xf32> to vector<16x32xf32>
    %680 = arith.subf %670, %679 : vector<16x32xf32>
    %681 = arith.mulf %680, %680 : vector<16x32xf32>
    %cst_222 = arith.constant dense<0.000000e+00> : vector<16xf32>
    %682 = vector.multi_reduction <add>, %681, %cst_222 [1] : vector<16x32xf32> to vector<16xf32>
    %683 = vector.shape_cast %682 : vector<16xf32> to vector<16x1xf32>
    %cst_223 = arith.constant 3.200000e+01 : f32
    %684 = vector.broadcast %cst_223 : f32 to vector<16x1xf32>
    %685 = arith.divf %683, %684 : vector<16x1xf32>
    %686 = vector.broadcast %678 : vector<16x1xf32> to vector<16x32xf32>
    %687 = arith.subf %670, %686 : vector<16x32xf32>
    %cst_224 = arith.constant 9.99999974E-6 : f32
    %688 = vector.broadcast %cst_224 : f32 to vector<16x1xf32>
    %689 = arith.addf %685, %688 : vector<16x1xf32>
    %690 = math.rsqrt %689 : vector<16x1xf32>
    %691 = vector.broadcast %690 : vector<16x1xf32> to vector<16x32xf32>
    %692 = arith.mulf %687, %691 : vector<16x32xf32>
    %693 = vector.broadcast %672 : vector<1x32xf32> to vector<16x32xf32>
    %694 = arith.mulf %692, %693 : vector<16x32xf32>
    %695 = vector.broadcast %674 : vector<1x32xf32> to vector<16x32xf32>
    %696 = arith.addf %694, %695 : vector<16x32xf32>
    %c1_225 = arith.constant 1 : index
    %c0_226 = arith.constant 0 : index
    %c0_227 = arith.constant 0 : index
    %697 = vector.load %arg9[%c1_225, %c0_226, %c0_227] : memref<2x32x64xf32, #tpu.memory_space<vmem>>, vector<1x32x64xf32>
    %698 = vector.shape_cast %697 : vector<1x32x64xf32> to vector<32x64xf32>
    %cst_228 = arith.constant dense<0.000000e+00> : vector<16x64xf32>
    %699 = tpu.matmul %696, %698, %cst_228 {dimension_numbers = #tpu.dot_dimension_numbers<[1], [0], [0], [1], [0, 0, 1, 1], [], []>} : vector<16x32xf32>, vector<32x64xf32>, vector<16x64xf32> -> vector<16x64xf32>
    %c1_229 = arith.constant 1 : index
    %c0_230 = arith.constant 0 : index
    %c0_231 = arith.constant 0 : index
    %700 = vector.load %arg10[%c1_229, %c0_230, %c0_231] : memref<2x1x64xf32, #tpu.memory_space<vmem>>, vector<1x1x64xf32>
    %701 = vector.shape_cast %700 : vector<1x1x64xf32> to vector<1x64xf32>
    %702 = vector.broadcast %701 : vector<1x64xf32> to vector<16x64xf32>
    %703 = arith.addf %699, %702 : vector<16x64xf32>
    %cst_232 = arith.constant 0.000000e+00 : f32
    %704 = vector.broadcast %cst_232 : f32 to vector<16x64xf32>
    %705 = arith.maximumf %703, %704 : vector<16x64xf32>
    %c1_233 = arith.constant 1 : index
    %c0_234 = arith.constant 0 : index
    %c0_235 = arith.constant 0 : index
    %706 = vector.load %arg11[%c1_233, %c0_234, %c0_235] : memref<2x64x32xf32, #tpu.memory_space<vmem>>, vector<1x64x32xf32>
    %707 = vector.shape_cast %706 : vector<1x64x32xf32> to vector<64x32xf32>
    %cst_236 = arith.constant dense<0.000000e+00> : vector<16x32xf32>
    %708 = tpu.matmul %705, %707, %cst_236 {dimension_numbers = #tpu.dot_dimension_numbers<[1], [0], [0], [1], [0, 0, 1, 1], [], []>} : vector<16x64xf32>, vector<64x32xf32>, vector<16x32xf32> -> vector<16x32xf32>
    %c1_237 = arith.constant 1 : index
    %c0_238 = arith.constant 0 : index
    %c0_239 = arith.constant 0 : index
    %709 = vector.load %arg12[%c1_237, %c0_238, %c0_239] : memref<2x1x32xf32, #tpu.memory_space<vmem>>, vector<1x1x32xf32>
    %710 = vector.shape_cast %709 : vector<1x1x32xf32> to vector<1x32xf32>
    %711 = vector.broadcast %710 : vector<1x32xf32> to vector<16x32xf32>
    %712 = arith.addf %708, %711 : vector<16x32xf32>
    %713 = arith.addf %712, %696 : vector<16x32xf32>
    %c5 = arith.constant 5 : index
    %c0_240 = arith.constant 0 : index
    %c0_241 = arith.constant 0 : index
    %714 = vector.load %arg7[%c5, %c0_240, %c0_241] : memref<6x1x32xf32, #tpu.memory_space<vmem>>, vector<1x1x32xf32>
    %715 = vector.shape_cast %714 : vector<1x1x32xf32> to vector<1x32xf32>
    %c5_242 = arith.constant 5 : index
    %c0_243 = arith.constant 0 : index
    %c0_244 = arith.constant 0 : index
    %716 = vector.load %arg8[%c5_242, %c0_243, %c0_244] : memref<6x1x32xf32, #tpu.memory_space<vmem>>, vector<1x1x32xf32>
    %717 = vector.shape_cast %716 : vector<1x1x32xf32> to vector<1x32xf32>
    %cst_245 = arith.constant dense<0.000000e+00> : vector<16xf32>
    %718 = vector.multi_reduction <add>, %713, %cst_245 [1] : vector<16x32xf32> to vector<16xf32>
    %719 = vector.shape_cast %718 : vector<16xf32> to vector<16x1xf32>
    %cst_246 = arith.constant 3.200000e+01 : f32
    %720 = vector.broadcast %cst_246 : f32 to vector<16x1xf32>
    %721 = arith.divf %719, %720 : vector<16x1xf32>
    %722 = vector.broadcast %721 : vector<16x1xf32> to vector<16x32xf32>
    %723 = arith.subf %713, %722 : vector<16x32xf32>
    %724 = arith.mulf %723, %723 : vector<16x32xf32>
    %cst_247 = arith.constant dense<0.000000e+00> : vector<16xf32>
    %725 = vector.multi_reduction <add>, %724, %cst_247 [1] : vector<16x32xf32> to vector<16xf32>
    %726 = vector.shape_cast %725 : vector<16xf32> to vector<16x1xf32>
    %cst_248 = arith.constant 3.200000e+01 : f32
    %727 = vector.broadcast %cst_248 : f32 to vector<16x1xf32>
    %728 = arith.divf %726, %727 : vector<16x1xf32>
    %729 = vector.broadcast %721 : vector<16x1xf32> to vector<16x32xf32>
    %730 = arith.subf %713, %729 : vector<16x32xf32>
    %cst_249 = arith.constant 9.99999974E-6 : f32
    %731 = vector.broadcast %cst_249 : f32 to vector<16x1xf32>
    %732 = arith.addf %728, %731 : vector<16x1xf32>
    %733 = math.rsqrt %732 : vector<16x1xf32>
    %734 = vector.broadcast %733 : vector<16x1xf32> to vector<16x32xf32>
    %735 = arith.mulf %730, %734 : vector<16x32xf32>
    %736 = vector.broadcast %715 : vector<1x32xf32> to vector<16x32xf32>
    %737 = arith.mulf %735, %736 : vector<16x32xf32>
    %738 = vector.broadcast %717 : vector<1x32xf32> to vector<16x32xf32>
    %739 = arith.addf %737, %738 : vector<16x32xf32>
    %c0_250 = arith.constant 0 : index
    %c0_251 = arith.constant 0 : index
    %740 = vector.load %arg13[%c0_250, %c0_251] : memref<32x32xf32, #tpu.memory_space<vmem>>, vector<32x32xf32>
    %cst_252 = arith.constant dense<0.000000e+00> : vector<16x32xf32>
    %741 = tpu.matmul %739, %740, %cst_252 {dimension_numbers = #tpu.dot_dimension_numbers<[1], [0], [0], [1], [0, 0, 1, 1], [], []>} : vector<16x32xf32>, vector<32x32xf32>, vector<16x32xf32> -> vector<16x32xf32>
    %c0_253 = arith.constant 0 : index
    %c0_254 = arith.constant 0 : index
    %742 = vector.load %arg14[%c0_253, %c0_254] : memref<1x32xf32, #tpu.memory_space<vmem>>, vector<1x32xf32>
    %743 = vector.broadcast %742 : vector<1x32xf32> to vector<16x32xf32>
    %744 = arith.addf %741, %743 : vector<16x32xf32>
    %c0_255 = arith.constant 0 : index
    %c0_256 = arith.constant 0 : index
    %745 = vector.load %arg15[%c0_255, %c0_256] : memref<16x32xf32, #tpu.memory_space<vmem>>, vector<16x32xf32>
    tpu.vector_store %arg15[%c0_255, %c0_256], %744 {strides = array<i32>} : memref<16x32xf32, #tpu.memory_space<vmem>>, vector<16x32xf32>,
    return
  }
}

</mosaic_0001>

<llo_original>
// kernel: decoder_forward_pallas.1
$region0: #{decoder_forward_pallas.1}
  #allocation0 [shape = 'u32[]', space=smem, size = 0x4, offset = 0x4, fixed_abs, tag = 'smem constant byte address 0x4 - core index']
  #allocation1 [shape = 'u32[72,128]{1,0:T(1,128)}', space=vmem, size = 0x9000, scoped, tag = 'internal scratch']
  %s0 = inlined_call_operand.hbm [shape: f32[16,32], index: 0, kind: input, shape index: {}]
  %s1 = inlined_call_operand.vmem [shape: f32[16,32], index: 1, kind: input, shape index: {}]
  %s2 = inlined_call_operand.hbm [shape: f32[16,32], index: 2, kind: input, shape index: {}]
  %s3 = inlined_call_operand.vmem [shape: f32[4,32,96], index: 3, kind: input, shape index: {}]
  %s4 = inlined_call_operand.hbm [shape: f32[4,1,96], index: 4, kind: input, shape index: {}]
  %s5 = inlined_call_operand.vmem [shape: f32[4,32,32], index: 5, kind: input, shape index: {}]
  %s6 = inlined_call_operand.hbm [shape: f32[4,1,32], index: 6, kind: input, shape index: {}]
  %s7 = inlined_call_operand.vmem [shape: f32[6,1,32], index: 7, kind: input, shape index: {}]
  %s8 = inlined_call_operand.vmem [shape: f32[6,1,32], index: 8, kind: input, shape index: {}]
  %s9 = inlined_call_operand.hbm [shape: f32[2,32,64], index: 9, kind: input, shape index: {}]
  %s10 = inlined_call_operand.hbm [shape: f32[2,1,64], index: 10, kind: input, shape index: {}]
  %s11 = inlined_call_operand.vmem [shape: f32[2,64,32], index: 11, kind: input, shape index: {}]
  %s12 = inlined_call_operand.hbm [shape: f32[2,1,32], index: 12, kind: input, shape index: {}]
  %s13 = inlined_call_operand.vmem [shape: f32[32,32], index: 13, kind: input, shape index: {}]
  %s14 = inlined_call_operand.vmem [shape: f32[1,32], index: 14, kind: input, shape index: {}]
  %s15 = inlined_call_operand.hbm [shape: f32[16,32], index: 15, kind: output, shape index: {}]
  %s16 = sld [smem:[#allocation0]]
  $region98: #{decoder_forward_pallas.1} parent=0
    _
  %s18 = ssub.s32 1, %s16
  %s19 = scalar_select 0, %s18, %s16
  $region1: #{decoder_forward_pallas.1} parent=0
    #allocation2 [shape = 'u8[8192]{0}', space=vmem, size = 0x2000, scoped, tag = 'input window, operand 0, single buffered']
    #allocation3 [shape = 's32[1]{0}', space=sflag, size = 0x4, scoped, tag = 'scoped memory for decoder_forward_pallas.1']
    #allocation4 [shape = 's32[1]{0}', space=sflag, size = 0x4, scoped, tag = 'scoped memory for decoder_forward_pallas.1']
    #allocation5 [shape = 'u8[8192]{0}', space=vmem, size = 0x2000, scoped, tag = 'input window, operand 2, single buffered']
    #allocation6 [shape = 's32[1]{0}', space=sflag, size = 0x4, scoped, tag = 'scoped memory for decoder_forward_pallas.1']
    #allocation7 [shape = 'u8[2048]{0}', space=vmem, size = 0x800, scoped, tag = 'input window, operand 4, single buffered']
    #allocation8 [shape = 'u8[2048]{0}', space=vmem, size = 0x800, scoped, tag = 'input window, operand 6, single buffered']
    #allocation9 [shape = 's32[1]{0}', space=sflag, size = 0x4, scoped, tag = 'scoped memory for decoder_forward_pallas.1']
    #allocation10 [shape = 'u8[32768]{0}', space=vmem, size = 0x8000, scoped, tag = 'input window, operand 9, single buffered']
    #allocation11 [shape = 'u8[1024]{0}', space=vmem, size = 0x400, scoped, tag = 'input window, operand 10, single buffered']
    #allocation12 [shape = 's32[1]{0}', space=sflag, size = 0x4, scoped, tag = 'scoped memory for decoder_forward_pallas.1']
    #allocation13 [shape = 'u8[1024]{0}', space=vmem, size = 0x400, scoped, tag = 'input window, operand 12, single buffered']
    #allocation14 [shape = 'u8[8192]{0}', space=vmem, size = 0x2000, scoped, tag = 'output window, operand 0, single buffered']
    %20 = vsyncpa [#allocation3], 0
    %21 = vsyncpa [#allocation6], 0
    %22 = vsyncpa [#allocation9], 0
    %23 = vsyncpa [#allocation12], 0
    %24 = vsyncpa [#allocation4], 0
    // Predicated region
    $region2: #{decoder_forward_pallas.1} parent=1 // pred_check
      _
    $region3: #{decoder_forward_pallas.1} parent=1 // pred_check_branch
      %26 = sbr.rel (0) target = $region5
    $region4: #{decoder_forward_pallas.1} parent=1 // pred_region
      %28 = vsyncadd [#allocation3], 0
      %s29 = sshll.u32 %s0, 4
      %s30 = int_to_ptr.hbm [resolvable:$true] %s29
      %s31 = sshll.u32 [#allocation2], 4
      %s32 = int_to_ptr.vmem [resolvable:$true] %s31
      %37 = dma.hbm_to_vmem [thread:$0]  %s30, 256, %s32, [#allocation3], 128, 128, 8
    $region5: #{decoder_forward_pallas.1} parent=1 // pred_fallthru
      _
    // Predicated region
    $region6: #{decoder_forward_pallas.1} parent=1 // pred_check
      _
    $region7: #{decoder_forward_pallas.1} parent=1 // pred_check_branch
      %39 = sbr.rel (0) target = $region9
    $region8: #{decoder_forward_pallas.1} parent=1 // pred_region
      _
    $region9: #{decoder_forward_pallas.1} parent=1 // pred_fallthru
      _
    // Predicated region
    $region10: #{decoder_forward_pallas.1} parent=1 // pred_check
      _
    $region11: #{decoder_forward_pallas.1} parent=1 // pred_check_branch
      %41 = sbr.rel (0) target = $region13
    $region12: #{decoder_forward_pallas.1} parent=1 // pred_region
      %43 = vsyncadd [#allocation6], 0
      %s44 = sshll.u32 %s2, 4
      %s45 = int_to_ptr.hbm [resolvable:$true] %s44
      %s46 = sshll.u32 [#allocation5], 4
      %s47 = int_to_ptr.vmem [resolvable:$true] %s46
      %52 = dma.hbm_to_vmem [thread:$0]  %s45, 256, %s47, [#allocation6], 128, 128, 8
    $region13: #{decoder_forward_pallas.1} parent=1 // pred_fallthru
      _
    // Predicated region
    $region14: #{decoder_forward_pallas.1} parent=1 // pred_check
      _
    $region15: #{decoder_forward_pallas.1} parent=1 // pred_check_branch
      %54 = sbr.rel (0) target = $region17
    $region16: #{decoder_forward_pallas.1} parent=1 // pred_region
      _
    $region17: #{decoder_forward_pallas.1} parent=1 // pred_fallthru
      _
    // Predicated region
    $region18: #{decoder_forward_pallas.1} parent=1 // pred_check
      _
    $region19: #{decoder_forward_pallas.1} parent=1 // pred_check_branch
      %56 = sbr.rel (0) target = $region21
    $region20: #{decoder_forward_pallas.1} parent=1 // pred_region
      %58 = vsyncadd [#allocation6], 0
      %s59 = sshll.u32 %s4, 4
      %s60 = int_to_ptr.hbm [resolvable:$true] %s59
      %s61 = sshll.u32 [#allocation7], 4
      %s62 = int_to_ptr.vmem [resolvable:$true] %s61
      %67 = dma.hbm_to_vmem [thread:$0]  %s60, 64, %s62, [#allocation6], 16, 16, 1
    $region21: #{decoder_forward_pallas.1} parent=1 // pred_fallthru
      _
    // Predicated region
    $region22: #{decoder_forward_pallas.1} parent=1 // pred_check
      _
    $region23: #{decoder_forward_pallas.1} parent=1 // pred_check_branch
      %69 = sbr.rel (0) target = $region25
    $region24: #{decoder_forward_pallas.1} parent=1 // pred_region
      _
    $region25: #{decoder_forward_pallas.1} parent=1 // pred_fallthru
      _
    // Predicated region
    $region26: #{decoder_forward_pallas.1} parent=1 // pred_check
      _
    $region27: #{decoder_forward_pallas.1} parent=1 // pred_check_branch
      %71 = sbr.rel (0) target = $region29
    $region28: #{decoder_forward_pallas.1} parent=1 // pred_region
      %73 = vsyncadd [#allocation9], 0
      %s74 = sshll.u32 %s6, 4
      %s75 = int_to_ptr.hbm [resolvable:$true] %s74
      %s76 = sshll.u32 [#allocation8], 4
      %s77 = int_to_ptr.vmem [resolvable:$true] %s76
      %82 = dma.hbm_to_vmem [thread:$0]  %s75, 64, %s77, [#allocation9], 16, 16, 1
    $region29: #{decoder_forward_pallas.1} parent=1 // pred_fallthru
      _
    // Predicated region
    $region30: #{decoder_forward_pallas.1} parent=1 // pred_check
      _
    $region31: #{decoder_forward_pallas.1} parent=1 // pred_check_branch
      %84 = sbr.rel (0) target = $region33
    $region32: #{decoder_forward_pallas.1} parent=1 // pred_region
      _
    $region33: #{decoder_forward_pallas.1} parent=1 // pred_fallthru
      _
    // Predicated region
    $region34: #{decoder_forward_pallas.1} parent=1 // pred_check
      _
    $region35: #{decoder_forward_pallas.1} parent=1 // pred_check_branch
      %86 = sbr.rel (0) target = $region37
    $region36: #{decoder_forward_pallas.1} parent=1 // pred_region
      _
    $region37: #{decoder_forward_pallas.1} parent=1 // pred_fallthru
      _
    // Predicated region
    $region38: #{decoder_forward_pallas.1} parent=1 // pred_check
      _
    $region39: #{decoder_forward_pallas.1} parent=1 // pred_check_branch
      %88 = sbr.rel (0) target = $region41
    $region40: #{decoder_forward_pallas.1} parent=1 // pred_region
      %90 = vsyncadd [#allocation9], 0
      %s91 = sshll.u32 %s9, 4
      %s92 = int_to_ptr.hbm [resolvable:$true] %s91
      %s93 = sshll.u32 [#allocation10], 4
      %s94 = int_to_ptr.vmem [resolvable:$true] %s93
      %99 = dma.hbm_to_vmem [thread:$0]  %s92, 1024, %s94, [#allocation9], 128, 128, 8
    $region41: #{decoder_forward_pallas.1} parent=1 // pred_fallthru
      _
    // Predicated region
    $region42: #{decoder_forward_pallas.1} parent=1 // pred_check
      _
    $region43: #{decoder_forward_pallas.1} parent=1 // pred_check_branch
      %101 = sbr.rel (0) target = $region45
    $region44: #{decoder_forward_pallas.1} parent=1 // pred_region
      %103 = vsyncadd [#allocation12], 0
      %s104 = sshll.u32 %s10, 4
      %s105 = int_to_ptr.hbm [resolvable:$true] %s104
      %s106 = sshll.u32 [#allocation11], 4
      %s107 = int_to_ptr.vmem [resolvable:$true] %s106
      %112 = dma.hbm_to_vmem [thread:$0]  %s105, 32, %s107, [#allocation12], 16, 16, 1
    $region45: #{decoder_forward_pallas.1} parent=1 // pred_fallthru
      _
    // Predicated region
    $region46: #{decoder_forward_pallas.1} parent=1 // pred_check
      _
    $region47: #{decoder_forward_pallas.1} parent=1 // pred_check_branch
      %114 = sbr.rel (0) target = $region49
    $region48: #{decoder_forward_pallas.1} parent=1 // pred_region
      _
    $region49: #{decoder_forward_pallas.1} parent=1 // pred_fallthru
      _
    // Predicated region
    $region50: #{decoder_forward_pallas.1} parent=1 // pred_check
      _
    $region51: #{decoder_forward_pallas.1} parent=1 // pred_check_branch
      %116 = sbr.rel (0) target = $region53
    $region52: #{decoder_forward_pallas.1} parent=1 // pred_region
      %118 = vsyncadd [#allocation12], 0
      %s119 = sshll.u32 %s12, 4
      %s120 = int_to_ptr.hbm [resolvable:$true] %s119
      %s121 = sshll.u32 [#allocation13], 4
      %s122 = int_to_ptr.vmem [resolvable:$true] %s121
      %127 = dma.hbm_to_vmem [thread:$0]  %s120, 32, %s122, [#allocation12], 16, 16, 1
    $region53: #{decoder_forward_pallas.1} parent=1 // pred_fallthru
      _
    // Predicated region
    $region54: #{decoder_forward_pallas.1} parent=1 // pred_check
      _
    $region55: #{decoder_forward_pallas.1} parent=1 // pred_check_branch
      %129 = sbr.rel (0) target = $region57
    $region56: #{decoder_forward_pallas.1} parent=1 // pred_region
      _
    $region57: #{decoder_forward_pallas.1} parent=1 // pred_fallthru
      _
    // Predicated region
    $region58: #{decoder_forward_pallas.1} parent=1 // pred_check
      _
    $region59: #{decoder_forward_pallas.1} parent=1 // pred_check_branch
      %131 = sbr.rel (0) target = $region61
    $region60: #{decoder_forward_pallas.1} parent=1 // pred_region
      _
    $region61: #{decoder_forward_pallas.1} parent=1 // pred_fallthru
      _
    // Predicated region
    $region62: #{decoder_forward_pallas.1} parent=1 // pred_check
      _
    $region63: #{decoder_forward_pallas.1} parent=1 // pred_check_branch
      %133 = sbr.rel (0) target = $region65
    $region64: #{decoder_forward_pallas.1} parent=1 // pred_region
      %135 = dma.done [#allocation3], 256
    $region65: #{decoder_forward_pallas.1} parent=1 // pred_fallthru
      _
    // Predicated region
    $region66: #{decoder_forward_pallas.1} parent=1 // pred_check
      _
    $region67: #{decoder_forward_pallas.1} parent=1 // pred_check_branch
      %137 = sbr.rel (0) target = $region69
    $region68: #{decoder_forward_pallas.1} parent=1 // pred_region
      %139 = dma.done [#allocation6], 256
    $region69: #{decoder_forward_pallas.1} parent=1 // pred_fallthru
      _
    // Predicated region
    $region70: #{decoder_forward_pallas.1} parent=1 // pred_check
      _
    $region71: #{decoder_forward_pallas.1} parent=1 // pred_check_branch
      %141 = sbr.rel (0) target = $region73
    $region72: #{decoder_forward_pallas.1} parent=1 // pred_region
      %143 = dma.done [#allocation6], 64
    $region73: #{decoder_forward_pallas.1} parent=1 // pred_fallthru
      _
    // Predicated region
    $region74: #{decoder_forward_pallas.1} parent=1 // pred_check
      _
    $region75: #{decoder_forward_pallas.1} parent=1 // pred_check_branch
      %145 = sbr.rel (0) target = $region77
    $region76: #{decoder_forward_pallas.1} parent=1 // pred_region
      %147 = dma.done [#allocation9], 64
    $region77: #{decoder_forward_pallas.1} parent=1 // pred_fallthru
      _
    // Predicated region
    $region78: #{decoder_forward_pallas.1} parent=1 // pred_check
      _
    $region79: #{decoder_forward_pallas.1} parent=1 // pred_check_branch
      %149 = sbr.rel (0) target = $region81
    $region80: #{decoder_forward_pallas.1} parent=1 // pred_region
      %151 = dma.done [#allocation9], 1024
    $region81: #{decoder_forward_pallas.1} parent=1 // pred_fallthru
      _
    // Predicated region
    $region82: #{decoder_forward_pallas.1} parent=1 // pred_check
      _
    $region83: #{decoder_forward_pallas.1} parent=1 // pred_check_branch
      %153 = sbr.rel (0) target = $region85
    $region84: #{decoder_forward_pallas.1} parent=1 // pred_region
      %155 = dma.done [#allocation12], 32
    $region85: #{decoder_forward_pallas.1} parent=1 // pred_fallthru
      _
    // Predicated region
    $region86: #{decoder_forward_pallas.1} parent=1 // pred_check
      _
    $region87: #{decoder_forward_pallas.1} parent=1 // pred_check_branch
      %157 = sbr.rel (0) target = $region89
    $region88: #{decoder_forward_pallas.1} parent=1 // pred_region
      %159 = dma.done [#allocation12], 32
    $region89: #{decoder_forward_pallas.1} parent=1 // pred_fallthru
      _
    %v160 = vld [vmem:[#allocation2] sm:$0xff]
    %v161 = vld [vmem:[#allocation2 + $0x8] sm:$0xff]
    %v162 = vld [vmem:[%s1] sm:$0xff]
    %v163 = vld [vmem:[%s1 + $0x8] sm:$0xff]
    %v164 = vmul.f32 %v162, 5.656854
    %v165 = vmul.f32 %v163, 5.656854
    %v166 = vld [vmem:[#allocation5] sm:$0xff]
    %v167 = vld [vmem:[#allocation5 + $0x8] sm:$0xff]
    %v168 = vadd.f32 %v164, %v166
    %v169 = vadd.f32 %v165, %v167
    %v170 = vld [vmem:[%s3] sm:$0xff]
    %v171 = vld [vmem:[%s3 + $0x8] sm:$0xff]
    %v172 = vld [vmem:[%s3 + $0x10] sm:$0xff]
    %v173 = vld [vmem:[%s3 + $0x18] sm:$0xff]
    %v174 = vld [vmem:[#allocation7] sm:$0x1]
    %v175 = vld [vmem:[%s5] sm:$0xff]
    %v176 = vld [vmem:[%s5 + $0x8] sm:$0xff]
    %v177 = vld [vmem:[%s5 + $0x10] sm:$0xff]
    %v178 = vld [vmem:[%s5 + $0x18] sm:$0xff]
    %v179 = vld [vmem:[#allocation8] sm:$0x1]
    %v181 = vperm.slane %v174, 0
    %vm183 = vcmask 261120
    %v185 = vsel %vm183, %v160, 0
    %v188 = vsel %vm183, %v161, 0
    %190 = vmatpush.msra.mxu0 0.0
    %191 = vmatpush.msra.mxu0 0.0
    %192 = vmatpush.msra.mxu0 0.0
    %193 = vmatpush.msra.mxu0 0.0
    %194 = vmatpush.msra.mxu0 0.0
    %195 = vmatpush.msra.mxu0 0.0
    %196 = vmatpush.msra.mxu0 0.0
    %197 = vmatpush.msra.mxu0 0.0
    %198 = vmatpush.msra.mxu0 0.0
    %199 = vmatpush.msra.mxu0 0.0
    %200 = vmatpush.msra.mxu0 0.0
    %201 = vmatpush.msra.mxu0 0.0
    %202 = vmatpush.msra.mxu0 %v173
    %203 = vmatpush.msra.mxu0 %v172
    %204 = vmatpush.msra.mxu0 %v171
    %205 = vmatpush.msra.mxu0 %v170
    %206 = vmatmul.f32.gmra.mxu0 %v185
    %v207 = vpop.f32.mrf.mxu0
    %v208 = vadd.f32 %v181, %v207
    %209 = vmatmul.f32.gmra.mxu0 %v188
    %v210 = vpop.f32.mrf.mxu0
    %v211 = vadd.f32 %v181, %v210
    %212 = vdwg.mxu0
    %217 = vrot.lane.b32.xlu0 %v170, 64
    %v218 = vpop.permute.xlu0 %217
    %219 = vrot.lane.b32.xlu0 %v171, 64
    %v220 = vpop.permute.xlu0 %219
    %221 = vrot.lane.b32.xlu0 %v172, 64
    %v222 = vpop.permute.xlu0 %221
    %223 = vrot.lane.b32.xlu0 %v173, 64
    %v224 = vpop.permute.xlu0 %223
    %229 = vrot.lane.b32.xlu0 %v181, 64
    %v230 = vpop.permute.xlu0 %229
    %v233 = vsel %vm183, %v168, 0
    %v236 = vsel %vm183, %v169, 0
    %238 = vmatpush.msra.mxu0 0.0
    %239 = vmatpush.msra.mxu0 0.0
    %240 = vmatpush.msra.mxu0 0.0
    %241 = vmatpush.msra.mxu0 0.0
    %242 = vmatpush.msra.mxu0 0.0
    %243 = vmatpush.msra.mxu0 0.0
    %244 = vmatpush.msra.mxu0 0.0
    %245 = vmatpush.msra.mxu0 0.0
    %246 = vmatpush.msra.mxu0 0.0
    %247 = vmatpush.msra.mxu0 0.0
    %248 = vmatpush.msra.mxu0 0.0
    %249 = vmatpush.msra.mxu0 0.0
    %250 = vmatpush.msra.mxu0 %v224
    %251 = vmatpush.msra.mxu0 %v222
    %252 = vmatpush.msra.mxu0 %v220
    %253 = vmatpush.msra.mxu0 %v218
    %254 = vmatmul.f32.gmra.mxu0 %v233
    %v255 = vpop.f32.mrf.mxu0
    %v256 = vadd.f32 %v230, %v255
    %257 = vmatmul.f32.gmra.mxu0 %v236
    %v258 = vpop.f32.mrf.mxu0
    %v259 = vadd.f32 %v230, %v258
    %260 = vdwg.mxu0
    %262 = vrot.lane.b32.xlu0 %v208, 96
    %v263 = vpop.permute.xlu0 %262
    %vm264 = vcmask 64512
    %v265 = vsel %vm264, %v208, 0
    %v267 = vsel %vm264, %v263, 0
    %269 = vmatpush.xpose.msra.mxu0 0.0
    %270 = vmatpush.xpose.msra.mxu0 0.0
    %271 = vmatpush.xpose.msra.mxu0 0.0
    %272 = vmatpush.xpose.msra.mxu0 0.0
    %273 = vmatpush.xpose.msra.mxu0 0.0
    %274 = vmatpush.xpose.msra.mxu0 0.0
    %275 = vmatpush.xpose.msra.mxu0 0.0
    %276 = vmatpush.xpose.msra.mxu0 0.0
    %277 = vmatpush.xpose.msra.mxu0 0.0
    %278 = vmatpush.xpose.msra.mxu0 0.0
    %279 = vmatpush.xpose.msra.mxu0 0.0
    %280 = vmatpush.xpose.msra.mxu0 0.0
    %281 = vmatpush.xpose.msra.mxu0 0.0
    %282 = vmatpush.xpose.msra.mxu0 0.0
    %283 = vmatpush.xpose.msra.mxu0 0.0
    %284 = vmatpush.xpose.msra.mxu0 %v267
    %285 = vmatmul.f32.gmra.mxu0 %v265
    %v286 = vpop.f32.mrf.mxu0
    %v287 = vadd.f32 0.0, %v286
    %288 = vdwg.mxu0
    %v289 = vmul.f32 %v287, 0.35355338
    %290 = vrot.lane.b32.xlu0 %v208, 120
    %v291 = vpop.permute.xlu0 %290
    %292 = vrot.lane.b32.xlu0 %v208, 88
    %v293 = vpop.permute.xlu0 %292
    %v294 = vsel %vm264, %v291, 0
    %v296 = vsel %vm264, %v293, 0
    %298 = vmatpush.xpose.msra.mxu0 0.0
    %299 = vmatpush.xpose.msra.mxu0 0.0
    %300 = vmatpush.xpose.msra.mxu0 0.0
    %301 = vmatpush.xpose.msra.mxu0 0.0
    %302 = vmatpush.xpose.msra.mxu0 0.0
    %303 = vmatpush.xpose.msra.mxu0 0.0
    %304 = vmatpush.xpose.msra.mxu0 0.0
    %305 = vmatpush.xpose.msra.mxu0 0.0
    %306 = vmatpush.xpose.msra.mxu0 0.0
    %307 = vmatpush.xpose.msra.mxu0 0.0
    %308 = vmatpush.xpose.msra.mxu0 0.0
    %309 = vmatpush.xpose.msra.mxu0 0.0
    %310 = vmatpush.xpose.msra.mxu0 0.0
    %311 = vmatpush.xpose.msra.mxu0 0.0
    %312 = vmatpush.xpose.msra.mxu0 0.0
    %313 = vmatpush.xpose.msra.mxu0 %v296
    %314 = vmatmul.f32.gmra.mxu0 %v294
    %v315 = vpop.f32.mrf.mxu0
    %v316 = vadd.f32 0.0, %v315
    %317 = vdwg.mxu0
    %v318 = vmul.f32 %v316, 0.35355338
    %319 = vrot.lane.b32.xlu0 %v208, 112
    %v320 = vpop.permute.xlu0 %319
    %321 = vrot.lane.b32.xlu0 %v208, 80
    %v322 = vpop.permute.xlu0 %321
    %v323 = vsel %vm264, %v320, 0
    %v325 = vsel %vm264, %v322, 0
    %327 = vmatpush.xpose.msra.mxu0 0.0
    %328 = vmatpush.xpose.msra.mxu0 0.0
    %329 = vmatpush.xpose.msra.mxu0 0.0
    %330 = vmatpush.xpose.msra.mxu0 0.0
    %331 = vmatpush.xpose.msra.mxu0 0.0
    %332 = vmatpush.xpose.msra.mxu0 0.0
    %333 = vmatpush.xpose.msra.mxu0 0.0
    %334 = vmatpush.xpose.msra.mxu0 0.0
    %335 = vmatpush.xpose.msra.mxu0 0.0
    %336 = vmatpush.xpose.msra.mxu0 0.0
    %337 = vmatpush.xpose.msra.mxu0 0.0
    %338 = vmatpush.xpose.msra.mxu0 0.0
    %339 = vmatpush.xpose.msra.mxu0 0.0
    %340 = vmatpush.xpose.msra.mxu0 0.0
    %341 = vmatpush.xpose.msra.mxu0 0.0
    %342 = vmatpush.xpose.msra.mxu0 %v325
    %343 = vmatmul.f32.gmra.mxu0 %v323
    %v344 = vpop.f32.mrf.mxu0
    %v345 = vadd.f32 0.0, %v344
    %346 = vdwg.mxu0
    %v347 = vmul.f32 %v345, 0.35355338
    %348 = vrot.lane.b32.xlu0 %v208, 104
    %v349 = vpop.permute.xlu0 %348
    %350 = vrot.lane.b32.xlu0 %v208, 72
    %v351 = vpop.permute.xlu0 %350
    %v352 = vsel %vm264, %v349, 0
    %v354 = vsel %vm264, %v351, 0
    %356 = vmatpush.xpose.msra.mxu0 0.0
    %357 = vmatpush.xpose.msra.mxu0 0.0
    %358 = vmatpush.xpose.msra.mxu0 0.0
    %359 = vmatpush.xpose.msra.mxu0 0.0
    %360 = vmatpush.xpose.msra.mxu0 0.0
    %361 = vmatpush.xpose.msra.mxu0 0.0
    %362 = vmatpush.xpose.msra.mxu0 0.0
    %363 = vmatpush.xpose.msra.mxu0 0.0
    %364 = vmatpush.xpose.msra.mxu0 0.0
    %365 = vmatpush.xpose.msra.mxu0 0.0
    %366 = vmatpush.xpose.msra.mxu0 0.0
    %367 = vmatpush.xpose.msra.mxu0 0.0
    %368 = vmatpush.xpose.msra.mxu0 0.0
    %369 = vmatpush.xpose.msra.mxu0 0.0
    %370 = vmatpush.xpose.msra.mxu0 0.0
    %371 = vmatpush.xpose.msra.mxu0 %v354
    %372 = vmatmul.f32.gmra.mxu0 %v352
    %v373 = vpop.f32.mrf.mxu0
    %v374 = vadd.f32 0.0, %v373
    %375 = vdwg.mxu0
    %v376 = vmul.f32 %v374, 0.35355338
    %v377 = vmax.f32 %v289, %v318
    %v378 = vmax.f32 %v377, %v347
    %v379 = vmax.f32 %v378, %v376
    %v380 = vsub.f32 %v289, %v379
    %v381 = vsub.f32 %v318, %v379
    %v382 = vsub.f32 %v347, %v379
    %v383 = vsub.f32 %v376, %v379
    %385 = vrot.lane.b32.xlu0 %v381, 8
    %v386 = vpop.permute.xlu0 %385
    %389 = vrot.lane.b32.xlu0 %v382, 16
    %v390 = vpop.permute.xlu0 %389
    %393 = vrot.lane.b32.xlu0 %v383, 24
    %v394 = vpop.permute.xlu0 %393
    %v396 = vsel %vm264, %v380, %v386
    %vm397 = vcmask 130048
    %v398 = vsel %vm397, %v396, %v390
    %vm399 = vcmask 195584
    %v400 = vsel %vm399, %v398, %v394
    %v401 = vmul.f32 %v400, 1.442695
    %v402 = vpow.pop %v401
    %404 = vrot.lane.b32.xlu0 %v402, 120
    %v405 = vpop.permute.xlu0 %404
    %v407 = vadd.f32 %v402, %v405
    %408 = vrot.lane.b32.xlu0 %v402, 112
    %v409 = vpop.permute.xlu0 %408
    %v411 = vadd.f32 %v407, %v409
    %412 = vrot.lane.b32.xlu0 %v402, 104
    %v413 = vpop.permute.xlu0 %412
    %v415 = vadd.f32 %v411, %v413
    %v416 = vrcp.pop %v415
    %v417 = vmul.f32 %v402, %v416
    %v419 = vsel %vm264, %v417, 0
    %421 = vmatpush.msra.mxu0 0.0
    %422 = vmatpush.msra.mxu0 0.0
    %423 = vmatpush.msra.mxu0 0.0
    %424 = vmatpush.msra.mxu0 0.0
    %425 = vmatpush.msra.mxu0 0.0
    %426 = vmatpush.msra.mxu0 0.0
    %427 = vmatpush.msra.mxu0 0.0
    %428 = vmatpush.msra.mxu0 0.0
    %429 = vmatpush.msra.mxu0 0.0
    %430 = vmatpush.msra.mxu0 0.0
    %431 = vmatpush.msra.mxu0 0.0
    %432 = vmatpush.msra.mxu0 0.0
    %433 = vmatpush.msra.mxu0 0.0
    %434 = vmatpush.msra.mxu0 0.0
    %435 = vmatpush.msra.mxu0 0.0
    %436 = vmatpush.msra.mxu0 %v256
    %437 = vmatmul.f32.gmra.mxu0 %v419
    %v438 = vpop.f32.mrf.mxu0
    %v439 = vadd.f32 0.0, %v438
    %440 = vdwg.mxu0
    %442 = vrot.lane.b32.xlu0 %v416, 8
    %v443 = vpop.permute.xlu0 %442
    %v445 = vmul.f32 %v402, %v443
    %447 = vrot.lane.b32.xlu0 %v445, 120
    %v448 = vpop.permute.xlu0 %447
    %450 = vrot.lane.b32.xlu0 %v256, 120
    %v451 = vpop.permute.xlu0 %450
    %v453 = vsel %vm264, %v448, 0
    %455 = vmatpush.msra.mxu0 0.0
    %456 = vmatpush.msra.mxu0 0.0
    %457 = vmatpush.msra.mxu0 0.0
    %458 = vmatpush.msra.mxu0 0.0
    %459 = vmatpush.msra.mxu0 0.0
    %460 = vmatpush.msra.mxu0 0.0
    %461 = vmatpush.msra.mxu0 0.0
    %462 = vmatpush.msra.mxu0 0.0
    %463 = vmatpush.msra.mxu0 0.0
    %464 = vmatpush.msra.mxu0 0.0
    %465 = vmatpush.msra.mxu0 0.0
    %466 = vmatpush.msra.mxu0 0.0
    %467 = vmatpush.msra.mxu0 0.0
    %468 = vmatpush.msra.mxu0 0.0
    %469 = vmatpush.msra.mxu0 0.0
    %470 = vmatpush.msra.mxu0 %v451
    %471 = vmatmul.f32.gmra.mxu0 %v453
    %v472 = vpop.f32.mrf.mxu0
    %v473 = vadd.f32 0.0, %v472
    %474 = vdwg.mxu0
    %475 = vrot.lane.b32.xlu0 %v416, 16
    %v476 = vpop.permute.xlu0 %475
    %v478 = vmul.f32 %v402, %v476
    %480 = vrot.lane.b32.xlu0 %v478, 112
    %v481 = vpop.permute.xlu0 %480
    %482 = vrot.lane.b32.xlu0 %v256, 112
    %v483 = vpop.permute.xlu0 %482
    %v485 = vsel %vm264, %v481, 0
    %487 = vmatpush.msra.mxu0 0.0
    %488 = vmatpush.msra.mxu0 0.0
    %489 = vmatpush.msra.mxu0 0.0
    %490 = vmatpush.msra.mxu0 0.0
    %491 = vmatpush.msra.mxu0 0.0
    %492 = vmatpush.msra.mxu0 0.0
    %493 = vmatpush.msra.mxu0 0.0
    %494 = vmatpush.msra.mxu0 0.0
    %495 = vmatpush.msra.mxu0 0.0
    %496 = vmatpush.msra.mxu0 0.0
    %497 = vmatpush.msra.mxu0 0.0
    %498 = vmatpush.msra.mxu0 0.0
    %499 = vmatpush.msra.mxu0 0.0
    %500 = vmatpush.msra.mxu0 0.0
    %501 = vmatpush.msra.mxu0 0.0
    %502 = vmatpush.msra.mxu0 %v483
    %503 = vmatmul.f32.gmra.mxu0 %v485
    %v504 = vpop.f32.mrf.mxu0
    %v505 = vadd.f32 0.0, %v504
    %506 = vdwg.mxu0
    %507 = vrot.lane.b32.xlu0 %v416, 24
    %v508 = vpop.permute.xlu0 %507
    %v510 = vmul.f32 %v402, %v508
    %512 = vrot.lane.b32.xlu0 %v510, 104
    %v513 = vpop.permute.xlu0 %512
    %514 = vrot.lane.b32.xlu0 %v256, 104
    %v515 = vpop.permute.xlu0 %514
    %v517 = vsel %vm264, %v513, 0
    %519 = vmatpush.msra.mxu0 0.0
    %520 = vmatpush.msra.mxu0 0.0
    %521 = vmatpush.msra.mxu0 0.0
    %522 = vmatpush.msra.mxu0 0.0
    %523 = vmatpush.msra.mxu0 0.0
    %524 = vmatpush.msra.mxu0 0.0
    %525 = vmatpush.msra.mxu0 0.0
    %526 = vmatpush.msra.mxu0 0.0
    %527 = vmatpush.msra.mxu0 0.0
    %528 = vmatpush.msra.mxu0 0.0
    %529 = vmatpush.msra.mxu0 0.0
    %530 = vmatpush.msra.mxu0 0.0
    %531 = vmatpush.msra.mxu0 0.0
    %532 = vmatpush.msra.mxu0 0.0
    %533 = vmatpush.msra.mxu0 0.0
    %534 = vmatpush.msra.mxu0 %v515
    %535 = vmatmul.f32.gmra.mxu0 %v517
    %v536 = vpop.f32.mrf.mxu0
    %v537 = vadd.f32 0.0, %v536
    %538 = vdwg.mxu0
    %540 = vrot.lane.b32.xlu0 %v473, 8
    %v541 = vpop.permute.xlu0 %540
    %544 = vrot.lane.b32.xlu0 %v505, 16
    %v545 = vpop.permute.xlu0 %544
    %548 = vrot.lane.b32.xlu0 %v537, 24
    %v549 = vpop.permute.xlu0 %548
    %v551 = vsel %vm264, %v439, %v541
    %v552 = vsel %vm397, %v551, %v545
    %v553 = vsel %vm399, %v552, %v549
    %555 = vrot.lane.b32.xlu0 %v211, 96
    %v556 = vpop.permute.xlu0 %555
    %v557 = vsel %vm264, %v211, 0
    %v559 = vsel %vm264, %v556, 0
    %561 = vmatpush.xpose.msra.mxu0 0.0
    %562 = vmatpush.xpose.msra.mxu0 0.0
    %563 = vmatpush.xpose.msra.mxu0 0.0
    %564 = vmatpush.xpose.msra.mxu0 0.0
    %565 = vmatpush.xpose.msra.mxu0 0.0
    %566 = vmatpush.xpose.msra.mxu0 0.0
    %567 = vmatpush.xpose.msra.mxu0 0.0
    %568 = vmatpush.xpose.msra.mxu0 0.0
    %569 = vmatpush.xpose.msra.mxu0 0.0
    %570 = vmatpush.xpose.msra.mxu0 0.0
    %571 = vmatpush.xpose.msra.mxu0 0.0
    %572 = vmatpush.xpose.msra.mxu0 0.0
    %573 = vmatpush.xpose.msra.mxu0 0.0
    %574 = vmatpush.xpose.msra.mxu0 0.0
    %575 = vmatpush.xpose.msra.mxu0 0.0
    %576 = vmatpush.xpose.msra.mxu0 %v559
    %577 = vmatmul.f32.gmra.mxu0 %v557
    %v578 = vpop.f32.mrf.mxu0
    %v579 = vadd.f32 0.0, %v578
    %580 = vdwg.mxu0
    %v581 = vmul.f32 %v579, 0.35355338
    %582 = vrot.lane.b32.xlu0 %v211, 120
    %v583 = vpop.permute.xlu0 %582
    %584 = vrot.lane.b32.xlu0 %v211, 88
    %v585 = vpop.permute.xlu0 %584
    %v586 = vsel %vm264, %v583, 0
    %v588 = vsel %vm264, %v585, 0
    %590 = vmatpush.xpose.msra.mxu0 0.0
    %591 = vmatpush.xpose.msra.mxu0 0.0
    %592 = vmatpush.xpose.msra.mxu0 0.0
    %593 = vmatpush.xpose.msra.mxu0 0.0
    %594 = vmatpush.xpose.msra.mxu0 0.0
    %595 = vmatpush.xpose.msra.mxu0 0.0
    %596 = vmatpush.xpose.msra.mxu0 0.0
    %597 = vmatpush.xpose.msra.mxu0 0.0
    %598 = vmatpush.xpose.msra.mxu0 0.0
    %599 = vmatpush.xpose.msra.mxu0 0.0
    %600 = vmatpush.xpose.msra.mxu0 0.0
    %601 = vmatpush.xpose.msra.mxu0 0.0
    %602 = vmatpush.xpose.msra.mxu0 0.0
    %603 = vmatpush.xpose.msra.mxu0 0.0
    %604 = vmatpush.xpose.msra.mxu0 0.0
    %605 = vmatpush.xpose.msra.mxu0 %v588
    %606 = vmatmul.f32.gmra.mxu0 %v586
    %v607 = vpop.f32.mrf.mxu0
    %v608 = vadd.f32 0.0, %v607
    %609 = vdwg.mxu0
    %v610 = vmul.f32 %v608, 0.35355338
    %611 = vrot.lane.b32.xlu0 %v211, 112
    %v612 = vpop.permute.xlu0 %611
    %613 = vrot.lane.b32.xlu0 %v211, 80
    %v614 = vpop.permute.xlu0 %613
    %v615 = vsel %vm264, %v612, 0
    %v617 = vsel %vm264, %v614, 0
    %619 = vmatpush.xpose.msra.mxu0 0.0
    %620 = vmatpush.xpose.msra.mxu0 0.0
    %621 = vmatpush.xpose.msra.mxu0 0.0
    %622 = vmatpush.xpose.msra.mxu0 0.0
    %623 = vmatpush.xpose.msra.mxu0 0.0
    %624 = vmatpush.xpose.msra.mxu0 0.0
    %625 = vmatpush.xpose.msra.mxu0 0.0
    %626 = vmatpush.xpose.msra.mxu0 0.0
    %627 = vmatpush.xpose.msra.mxu0 0.0
    %628 = vmatpush.xpose.msra.mxu0 0.0
    %629 = vmatpush.xpose.msra.mxu0 0.0
    %630 = vmatpush.xpose.msra.mxu0 0.0
    %631 = vmatpush.xpose.msra.mxu0 0.0
    %632 = vmatpush.xpose.msra.mxu0 0.0
    %633 = vmatpush.xpose.msra.mxu0 0.0
    %634 = vmatpush.xpose.msra.mxu0 %v617
    %635 = vmatmul.f32.gmra.mxu0 %v615
    %v636 = vpop.f32.mrf.mxu0
    %v637 = vadd.f32 0.0, %v636
    %638 = vdwg.mxu0
    %v639 = vmul.f32 %v637, 0.35355338
    %640 = vrot.lane.b32.xlu0 %v211, 104
    %v641 = vpop.permute.xlu0 %640
    %642 = vrot.lane.b32.xlu0 %v211, 72
    %v643 = vpop.permute.xlu0 %642
    %v644 = vsel %vm264, %v641, 0
    %v646 = vsel %vm264, %v643, 0
    %648 = vmatpush.xpose.msra.mxu0 0.0
    %649 = vmatpush.xpose.msra.mxu0 0.0
    %650 = vmatpush.xpose.msra.mxu0 0.0
    %651 = vmatpush.xpose.msra.mxu0 0.0
    %652 = vmatpush.xpose.msra.mxu0 0.0
    %653 = vmatpush.xpose.msra.mxu0 0.0
    %654 = vmatpush.xpose.msra.mxu0 0.0
    %655 = vmatpush.xpose.msra.mxu0 0.0
    %656 = vmatpush.xpose.msra.mxu0 0.0
    %657 = vmatpush.xpose.msra.mxu0 0.0
    %658 = vmatpush.xpose.msra.mxu0 0.0
    %659 = vmatpush.xpose.msra.mxu0 0.0
    %660 = vmatpush.xpose.msra.mxu0 0.0
    %661 = vmatpush.xpose.msra.mxu0 0.0
    %662 = vmatpush.xpose.msra.mxu0 0.0
    %663 = vmatpush.xpose.msra.mxu0 %v646
    %664 = vmatmul.f32.gmra.mxu0 %v644
    %v665 = vpop.f32.mrf.mxu0
    %v666 = vadd.f32 0.0, %v665
    %667 = vdwg.mxu0
    %v668 = vmul.f32 %v666, 0.35355338
    %v669 = vmax.f32 %v581, %v610
    %v670 = vmax.f32 %v669, %v639
    %v671 = vmax.f32 %v670, %v668
    %v672 = vsub.f32 %v581, %v671
    %v673 = vsub.f32 %v610, %v671
    %v674 = vsub.f32 %v639, %v671
    %v675 = vsub.f32 %v668, %v671
    %677 = vrot.lane.b32.xlu0 %v673, 8
    %v678 = vpop.permute.xlu0 %677
    %681 = vrot.lane.b32.xlu0 %v674, 16
    %v682 = vpop.permute.xlu0 %681
    %685 = vrot.lane.b32.xlu0 %v675, 24
    %v686 = vpop.permute.xlu0 %685
    %v688 = vsel %vm264, %v672, %v678
    %v689 = vsel %vm397, %v688, %v682
    %v690 = vsel %vm399, %v689, %v686
    %v691 = vmul.f32 %v690, 1.442695
    %v692 = vpow.pop %v691
    %694 = vrot.lane.b32.xlu0 %v692, 120
    %v695 = vpop.permute.xlu0 %694
    %v697 = vadd.f32 %v692, %v695
    %698 = vrot.lane.b32.xlu0 %v692, 112
    %v699 = vpop.permute.xlu0 %698
    %v701 = vadd.f32 %v697, %v699
    %702 = vrot.lane.b32.xlu0 %v692, 104
    %v703 = vpop.permute.xlu0 %702
    %v705 = vadd.f32 %v701, %v703
    %v706 = vrcp.pop %v705
    %v707 = vmul.f32 %v692, %v706
    %v709 = vsel %vm264, %v707, 0
    %711 = vmatpush.msra.mxu0 0.0
    %712 = vmatpush.msra.mxu0 0.0
    %713 = vmatpush.msra.mxu0 0.0
    %714 = vmatpush.msra.mxu0 0.0
    %715 = vmatpush.msra.mxu0 0.0
    %716 = vmatpush.msra.mxu0 0.0
    %717 = vmatpush.msra.mxu0 0.0
    %718 = vmatpush.msra.mxu0 0.0
    %719 = vmatpush.msra.mxu0 0.0
    %720 = vmatpush.msra.mxu0 0.0
    %721 = vmatpush.msra.mxu0 0.0
    %722 = vmatpush.msra.mxu0 0.0
    %723 = vmatpush.msra.mxu0 0.0
    %724 = vmatpush.msra.mxu0 0.0
    %725 = vmatpush.msra.mxu0 0.0
    %726 = vmatpush.msra.mxu0 %v259
    %727 = vmatmul.f32.gmra.mxu0 %v709
    %v728 = vpop.f32.mrf.mxu0
    %v729 = vadd.f32 0.0, %v728
    %730 = vdwg.mxu0
    %732 = vrot.lane.b32.xlu0 %v706, 8
    %v733 = vpop.permute.xlu0 %732
    %v735 = vmul.f32 %v692, %v733
    %737 = vrot.lane.b32.xlu0 %v735, 120
    %v738 = vpop.permute.xlu0 %737
    %740 = vrot.lane.b32.xlu0 %v259, 120
    %v741 = vpop.permute.xlu0 %740
    %v743 = vsel %vm264, %v738, 0
    %745 = vmatpush.msra.mxu0 0.0
    %746 = vmatpush.msra.mxu0 0.0
    %747 = vmatpush.msra.mxu0 0.0
    %748 = vmatpush.msra.mxu0 0.0
    %749 = vmatpush.msra.mxu0 0.0
    %750 = vmatpush.msra.mxu0 0.0
    %751 = vmatpush.msra.mxu0 0.0
    %752 = vmatpush.msra.mxu0 0.0
    %753 = vmatpush.msra.mxu0 0.0
    %754 = vmatpush.msra.mxu0 0.0
    %755 = vmatpush.msra.mxu0 0.0
    %756 = vmatpush.msra.mxu0 0.0
    %757 = vmatpush.msra.mxu0 0.0
    %758 = vmatpush.msra.mxu0 0.0
    %759 = vmatpush.msra.mxu0 0.0
    %760 = vmatpush.msra.mxu0 %v741
    %761 = vmatmul.f32.gmra.mxu0 %v743
    %v762 = vpop.f32.mrf.mxu0
    %v763 = vadd.f32 0.0, %v762
    %764 = vdwg.mxu0
    %765 = vrot.lane.b32.xlu0 %v706, 16
    %v766 = vpop.permute.xlu0 %765
    %v768 = vmul.f32 %v692, %v766
    %770 = vrot.lane.b32.xlu0 %v768, 112
    %v771 = vpop.permute.xlu0 %770
    %772 = vrot.lane.b32.xlu0 %v259, 112
    %v773 = vpop.permute.xlu0 %772
    %v775 = vsel %vm264, %v771, 0
    %777 = vmatpush.msra.mxu0 0.0
    %778 = vmatpush.msra.mxu0 0.0
    %779 = vmatpush.msra.mxu0 0.0
    %780 = vmatpush.msra.mxu0 0.0
    %781 = vmatpush.msra.mxu0 0.0
    %782 = vmatpush.msra.mxu0 0.0
    %783 = vmatpush.msra.mxu0 0.0
    %784 = vmatpush.msra.mxu0 0.0
    %785 = vmatpush.msra.mxu0 0.0
    %786 = vmatpush.msra.mxu0 0.0
    %787 = vmatpush.msra.mxu0 0.0
    %788 = vmatpush.msra.mxu0 0.0
    %789 = vmatpush.msra.mxu0 0.0
    %790 = vmatpush.msra.mxu0 0.0
    %791 = vmatpush.msra.mxu0 0.0
    %792 = vmatpush.msra.mxu0 %v773
    %793 = vmatmul.f32.gmra.mxu0 %v775
    %v794 = vpop.f32.mrf.mxu0
    %v795 = vadd.f32 0.0, %v794
    %796 = vdwg.mxu0
    %797 = vrot.lane.b32.xlu0 %v706, 24
    %v798 = vpop.permute.xlu0 %797
    %v800 = vmul.f32 %v692, %v798
    %802 = vrot.lane.b32.xlu0 %v800, 104
    %v803 = vpop.permute.xlu0 %802
    %804 = vrot.lane.b32.xlu0 %v259, 104
    %v805 = vpop.permute.xlu0 %804
    %v807 = vsel %vm264, %v803, 0
    %809 = vmatpush.msra.mxu0 0.0
    %810 = vmatpush.msra.mxu0 0.0
    %811 = vmatpush.msra.mxu0 0.0
    %812 = vmatpush.msra.mxu0 0.0
    %813 = vmatpush.msra.mxu0 0.0
    %814 = vmatpush.msra.mxu0 0.0
    %815 = vmatpush.msra.mxu0 0.0
    %816 = vmatpush.msra.mxu0 0.0
    %817 = vmatpush.msra.mxu0 0.0
    %818 = vmatpush.msra.mxu0 0.0
    %819 = vmatpush.msra.mxu0 0.0
    %820 = vmatpush.msra.mxu0 0.0
    %821 = vmatpush.msra.mxu0 0.0
    %822 = vmatpush.msra.mxu0 0.0
    %823 = vmatpush.msra.mxu0 0.0
    %824 = vmatpush.msra.mxu0 %v805
    %825 = vmatmul.f32.gmra.mxu0 %v807
    %v826 = vpop.f32.mrf.mxu0
    %v827 = vadd.f32 0.0, %v826
    %828 = vdwg.mxu0
    %830 = vrot.lane.b32.xlu0 %v763, 8
    %v831 = vpop.permute.xlu0 %830
    %834 = vrot.lane.b32.xlu0 %v795, 16
    %v835 = vpop.permute.xlu0 %834
    %838 = vrot.lane.b32.xlu0 %v827, 24
    %v839 = vpop.permute.xlu0 %838
    %v841 = vsel %vm264, %v729, %v831
    %v842 = vsel %vm397, %v841, %v835
    %v843 = vsel %vm399, %v842, %v839
    %v845 = vperm.slane %v179, 0
    %v848 = vsel %vm183, %v553, 0
    %v851 = vsel %vm183, %v843, 0
    %853 = vmatpush.msra.mxu0 0.0
    %854 = vmatpush.msra.mxu0 0.0
    %855 = vmatpush.msra.mxu0 0.0
    %856 = vmatpush.msra.mxu0 0.0
    %857 = vmatpush.msra.mxu0 0.0
    %858 = vmatpush.msra.mxu0 0.0
    %859 = vmatpush.msra.mxu0 0.0
    %860 = vmatpush.msra.mxu0 0.0
    %861 = vmatpush.msra.mxu0 0.0
    %862 = vmatpush.msra.mxu0 0.0
    %863 = vmatpush.msra.mxu0 0.0
    %864 = vmatpush.msra.mxu0 0.0
    %865 = vmatpush.msra.mxu0 %v178
    %866 = vmatpush.msra.mxu0 %v177
    %867 = vmatpush.msra.mxu0 %v176
    %868 = vmatpush.msra.mxu0 %v175
    %869 = vmatmul.f32.gmra.mxu0 %v848
    %v870 = vpop.f32.mrf.mxu0
    %v871 = vadd.f32 %v845, %v870
    %872 = vmatmul.f32.gmra.mxu0 %v851
    %v873 = vpop.f32.mrf.mxu0
    %v874 = vadd.f32 %v845, %v873
    %875 = vdwg.mxu0
    %v876 = vadd.f32 %v871, %v168
    %v877 = vadd.f32 %v874, %v169
    %v878 = vld [vmem:[%s7] sm:$0x1]
    %v879 = vld [vmem:[%s8] sm:$0x1]
    %v880 = vsel %vm183, %v876, 0.0
    %881 = vadd.xlane.f32.xlu0 %v880
    %v882 = vpop.xlane.xlu0 %881
    %v883 = vsel %vm183, %v877, 0.0
    %884 = vadd.xlane.f32.xlu0 %v883
    %v885 = vpop.xlane.xlu0 %884
    %v886 = vrcp.pop 32.0
    %v887 = vmul.f32 32.0, %v886
    %v888 = vsub.f32 1.0, %v887
    %v889 = vmul.f32 %v886, %v888
    %v890 = vadd.f32 %v886, %v889
    %vm891 = vweird.f32 %v886
    %v892 = vsel %vm891, %v886, %v890
    %v893 = vmul.f32 %v882, %v892
    %v894 = vmul.f32 %v885, %v892
    %v895 = vsub.f32 %v876, %v893
    %v896 = vsub.f32 %v877, %v894
    %v897 = vmul.f32 %v895, %v895
    %v898 = vmul.f32 %v896, %v896
    %v899 = vsel %vm183, %v897, 0.0
    %900 = vadd.xlane.f32.xlu0 %v899
    %v901 = vpop.xlane.xlu0 %900
    %v902 = vsel %vm183, %v898, 0.0
    %903 = vadd.xlane.f32.xlu0 %v902
    %v904 = vpop.xlane.xlu0 %903
    %v905 = vmul.f32 %v901, %v892
    %v906 = vmul.f32 %v904, %v892
    %v907 = vadd.f32 %v905, 1e-05
    %v908 = vadd.f32 %v906, 1e-05
    %v909 = vrsqrt.pop %v907
    %v910 = vmul.f32 %v909, %v907
    %v911 = vmul.f32 %v910, %v909
    %v912 = vmul.f32 0.5, %v911
    %v913 = vsub.f32 1.5, %v912
    %v914 = vmul.f32 %v909, %v913
    %vm915 = vweird.f32 %v907
    %vm916 = vweird.f32 %v909
    %vm917 = vmor %vm915, %vm916
    %v918 = vsel %vm917, %v909, %v914
    %v919 = vrsqrt.pop %v908
    %v920 = vmul.f32 %v919, %v908
    %v921 = vmul.f32 %v920, %v919
    %v922 = vmul.f32 0.5, %v921
    %v923 = vsub.f32 1.5, %v922
    %v924 = vmul.f32 %v919, %v923
    %vm925 = vweird.f32 %v908
    %vm926 = vweird.f32 %v919
    %vm927 = vmor %vm925, %vm926
    %v928 = vsel %vm927, %v919, %v924
    %v929 = vmul.f32 %v895, %v918
    %v930 = vmul.f32 %v896, %v928
    %v932 = vperm.slane %v878, 0
    %v934 = vmul.f32 %v929, %v932
    %v935 = vmul.f32 %v930, %v932
    %v937 = vperm.slane %v879, 0
    %v939 = vadd.f32 %v934, %v937
    %v940 = vadd.f32 %v935, %v937
    %s941 = scalar_lea.vmem %s3, 32
    %v942 = vld [vmem:[%s941] sm:$0xff]
    %v943 = vld [vmem:[%s941 + $0x8] sm:$0xff]
    %v944 = vld [vmem:[%s941 + $0x10] sm:$0xff]
    %v945 = vld [vmem:[%s941 + $0x18] sm:$0xff]
    %s946 = scalar_lea.vmem [#allocation7], 1
    %v947 = vld [vmem:[%s946] sm:$0x1]
    %s948 = scalar_lea.vmem %s5, 32
    %v949 = vld [vmem:[%s948] sm:$0xff]
    %v950 = vld [vmem:[%s948 + $0x8] sm:$0xff]
    %v951 = vld [vmem:[%s948 + $0x10] sm:$0xff]
    %v952 = vld [vmem:[%s948 + $0x18] sm:$0xff]
    %s953 = scalar_lea.vmem [#allocation8], 1
    %v954 = vld [vmem:[%s953] sm:$0x1]
    %v956 = vperm.slane %v947, 0
    %v959 = vsel %vm183, %v939, 0
    %v962 = vsel %vm183, %v940, 0
    %964 = vmatpush.msra.mxu0 0.0
    %965 = vmatpush.msra.mxu0 0.0
    %966 = vmatpush.msra.mxu0 0.0
    %967 = vmatpush.msra.mxu0 0.0
    %968 = vmatpush.msra.mxu0 0.0
    %969 = vmatpush.msra.mxu0 0.0
    %970 = vmatpush.msra.mxu0 0.0
    %971 = vmatpush.msra.mxu0 0.0
    %972 = vmatpush.msra.mxu0 0.0
    %973 = vmatpush.msra.mxu0 0.0
    %974 = vmatpush.msra.mxu0 0.0
    %975 = vmatpush.msra.mxu0 0.0
    %976 = vmatpush.msra.mxu0 %v945
    %977 = vmatpush.msra.mxu0 %v944
    %978 = vmatpush.msra.mxu0 %v943
    %979 = vmatpush.msra.mxu0 %v942
    %980 = vmatmul.f32.gmra.mxu0 %v959
    %v981 = vpop.f32.mrf.mxu0
    %v982 = vadd.f32 %v956, %v981
    %983 = vmatmul.f32.gmra.mxu0 %v962
    %v984 = vpop.f32.mrf.mxu0
    %v985 = vadd.f32 %v956, %v984
    %986 = vdwg.mxu0
    %988 = vrot.lane.b32.xlu0 %v982, 96
    %v989 = vpop.permute.xlu0 %988
    %v990 = vsel %vm264, %v982, 0
    %v992 = vsel %vm264, %v989, 0
    %994 = vmatpush.xpose.msra.mxu0 0.0
    %995 = vmatpush.xpose.msra.mxu0 0.0
    %996 = vmatpush.xpose.msra.mxu0 0.0
    %997 = vmatpush.xpose.msra.mxu0 0.0
    %998 = vmatpush.xpose.msra.mxu0 0.0
    %999 = vmatpush.xpose.msra.mxu0 0.0
    %1000 = vmatpush.xpose.msra.mxu0 0.0
    %1001 = vmatpush.xpose.msra.mxu0 0.0
    %1002 = vmatpush.xpose.msra.mxu0 0.0
    %1003 = vmatpush.xpose.msra.mxu0 0.0
    %1004 = vmatpush.xpose.msra.mxu0 0.0
    %1005 = vmatpush.xpose.msra.mxu0 0.0
    %1006 = vmatpush.xpose.msra.mxu0 0.0
    %1007 = vmatpush.xpose.msra.mxu0 0.0
    %1008 = vmatpush.xpose.msra.mxu0 0.0
    %1009 = vmatpush.xpose.msra.mxu0 %v992
    %1010 = vmatmul.f32.gmra.mxu0 %v990
    %v1011 = vpop.f32.mrf.mxu0
    %v1012 = vadd.f32 0.0, %v1011
    %1013 = vdwg.mxu0
    %v1014 = vmul.f32 %v1012, 0.35355338
    %1015 = vrot.lane.b32.xlu0 %v982, 120
    %v1016 = vpop.permute.xlu0 %1015
    %1017 = vrot.lane.b32.xlu0 %v982, 88
    %v1018 = vpop.permute.xlu0 %1017
    %v1019 = vsel %vm264, %v1016, 0
    %v1021 = vsel %vm264, %v1018, 0
    %1023 = vmatpush.xpose.msra.mxu0 0.0
    %1024 = vmatpush.xpose.msra.mxu0 0.0
    %1025 = vmatpush.xpose.msra.mxu0 0.0
    %1026 = vmatpush.xpose.msra.mxu0 0.0
    %1027 = vmatpush.xpose.msra.mxu0 0.0
    %1028 = vmatpush.xpose.msra.mxu0 0.0
    %1029 = vmatpush.xpose.msra.mxu0 0.0
    %1030 = vmatpush.xpose.msra.mxu0 0.0
    %1031 = vmatpush.xpose.msra.mxu0 0.0
    %1032 = vmatpush.xpose.msra.mxu0 0.0
    %1033 = vmatpush.xpose.msra.mxu0 0.0
    %1034 = vmatpush.xpose.msra.mxu0 0.0
    %1035 = vmatpush.xpose.msra.mxu0 0.0
    %1036 = vmatpush.xpose.msra.mxu0 0.0
    %1037 = vmatpush.xpose.msra.mxu0 0.0
    %1038 = vmatpush.xpose.msra.mxu0 %v1021
    %1039 = vmatmul.f32.gmra.mxu0 %v1019
    %v1040 = vpop.f32.mrf.mxu0
    %v1041 = vadd.f32 0.0, %v1040
    %1042 = vdwg.mxu0
    %v1043 = vmul.f32 %v1041, 0.35355338
    %1044 = vrot.lane.b32.xlu0 %v982, 112
    %v1045 = vpop.permute.xlu0 %1044
    %1046 = vrot.lane.b32.xlu0 %v982, 80
    %v1047 = vpop.permute.xlu0 %1046
    %v1048 = vsel %vm264, %v1045, 0
    %v1050 = vsel %vm264, %v1047, 0
    %1052 = vmatpush.xpose.msra.mxu0 0.0
    %1053 = vmatpush.xpose.msra.mxu0 0.0
    %1054 = vmatpush.xpose.msra.mxu0 0.0
    %1055 = vmatpush.xpose.msra.mxu0 0.0
    %1056 = vmatpush.xpose.msra.mxu0 0.0
    %1057 = vmatpush.xpose.msra.mxu0 0.0
    %1058 = vmatpush.xpose.msra.mxu0 0.0
    %1059 = vmatpush.xpose.msra.mxu0 0.0
    %1060 = vmatpush.xpose.msra.mxu0 0.0
    %1061 = vmatpush.xpose.msra.mxu0 0.0
    %1062 = vmatpush.xpose.msra.mxu0 0.0
    %1063 = vmatpush.xpose.msra.mxu0 0.0
    %1064 = vmatpush.xpose.msra.mxu0 0.0
    %1065 = vmatpush.xpose.msra.mxu0 0.0
    %1066 = vmatpush.xpose.msra.mxu0 0.0
    %1067 = vmatpush.xpose.msra.mxu0 %v1050
    %1068 = vmatmul.f32.gmra.mxu0 %v1048
    %v1069 = vpop.f32.mrf.mxu0
    %v1070 = vadd.f32 0.0, %v1069
    %1071 = vdwg.mxu0
    %v1072 = vmul.f32 %v1070, 0.35355338
    %1073 = vrot.lane.b32.xlu0 %v982, 104
    %v1074 = vpop.permute.xlu0 %1073
    %1075 = vrot.lane.b32.xlu0 %v982, 72
    %v1076 = vpop.permute.xlu0 %1075
    %v1077 = vsel %vm264, %v1074, 0
    %v1079 = vsel %vm264, %v1076, 0
    %1081 = vmatpush.xpose.msra.mxu0 0.0
    %1082 = vmatpush.xpose.msra.mxu0 0.0
    %1083 = vmatpush.xpose.msra.mxu0 0.0
    %1084 = vmatpush.xpose.msra.mxu0 0.0
    %1085 = vmatpush.xpose.msra.mxu0 0.0
    %1086 = vmatpush.xpose.msra.mxu0 0.0
    %1087 = vmatpush.xpose.msra.mxu0 0.0
    %1088 = vmatpush.xpose.msra.mxu0 0.0
    %1089 = vmatpush.xpose.msra.mxu0 0.0
    %1090 = vmatpush.xpose.msra.mxu0 0.0
    %1091 = vmatpush.xpose.msra.mxu0 0.0
    %1092 = vmatpush.xpose.msra.mxu0 0.0
    %1093 = vmatpush.xpose.msra.mxu0 0.0
    %1094 = vmatpush.xpose.msra.mxu0 0.0
    %1095 = vmatpush.xpose.msra.mxu0 0.0
    %1096 = vmatpush.xpose.msra.mxu0 %v1079
    %1097 = vmatmul.f32.gmra.mxu0 %v1077
    %v1098 = vpop.f32.mrf.mxu0
    %v1099 = vadd.f32 0.0, %v1098
    %1100 = vdwg.mxu0
    %v1101 = vmul.f32 %v1099, 0.35355338
    %v1102 = vmax.f32 %v1014, %v1043
    %v1103 = vmax.f32 %v1102, %v1072
    %v1104 = vmax.f32 %v1103, %v1101
    %v1105 = vsub.f32 %v1014, %v1104
    %v1106 = vsub.f32 %v1043, %v1104
    %v1107 = vsub.f32 %v1072, %v1104
    %v1108 = vsub.f32 %v1101, %v1104
    %1110 = vrot.lane.b32.xlu0 %v1106, 8
    %v1111 = vpop.permute.xlu0 %1110
    %1114 = vrot.lane.b32.xlu0 %v1107, 16
    %v1115 = vpop.permute.xlu0 %1114
    %1118 = vrot.lane.b32.xlu0 %v1108, 24
    %v1119 = vpop.permute.xlu0 %1118
    %v1121 = vsel %vm264, %v1105, %v1111
    %v1122 = vsel %vm397, %v1121, %v1115
    %v1123 = vsel %vm399, %v1122, %v1119
    %v1124 = vmul.f32 %v1123, 1.442695
    %v1125 = vpow.pop %v1124
    %1127 = vrot.lane.b32.xlu0 %v1125, 120
    %v1128 = vpop.permute.xlu0 %1127
    %v1130 = vadd.f32 %v1125, %v1128
    %1131 = vrot.lane.b32.xlu0 %v1125, 112
    %v1132 = vpop.permute.xlu0 %1131
    %v1134 = vadd.f32 %v1130, %v1132
    %1135 = vrot.lane.b32.xlu0 %v1125, 104
    %v1136 = vpop.permute.xlu0 %1135
    %v1138 = vadd.f32 %v1134, %v1136
    %v1139 = vrcp.pop %v1138
    %v1140 = vmul.f32 %v1125, %v1139
    %1141 = vrot.lane.b32.xlu0 %v982, 64
    %v1142 = vpop.permute.xlu0 %1141
    %v1145 = vsel %vm264, %v1140, 0
    %1147 = vmatpush.msra.mxu0 0.0
    %1148 = vmatpush.msra.mxu0 0.0
    %1149 = vmatpush.msra.mxu0 0.0
    %1150 = vmatpush.msra.mxu0 0.0
    %1151 = vmatpush.msra.mxu0 0.0
    %1152 = vmatpush.msra.mxu0 0.0
    %1153 = vmatpush.msra.mxu0 0.0
    %1154 = vmatpush.msra.mxu0 0.0
    %1155 = vmatpush.msra.mxu0 0.0
    %1156 = vmatpush.msra.mxu0 0.0
    %1157 = vmatpush.msra.mxu0 0.0
    %1158 = vmatpush.msra.mxu0 0.0
    %1159 = vmatpush.msra.mxu0 0.0
    %1160 = vmatpush.msra.mxu0 0.0
    %1161 = vmatpush.msra.mxu0 0.0
    %1162 = vmatpush.msra.mxu0 %v1142
    %1163 = vmatmul.f32.gmra.mxu0 %v1145
    %v1164 = vpop.f32.mrf.mxu0
    %v1165 = vadd.f32 0.0, %v1164
    %1166 = vdwg.mxu0
    %1168 = vrot.lane.b32.xlu0 %v1139, 8
    %v1169 = vpop.permute.xlu0 %1168
    %v1171 = vmul.f32 %v1125, %v1169
    %1173 = vrot.lane.b32.xlu0 %v1171, 120
    %v1174 = vpop.permute.xlu0 %1173
    %1175 = vrot.lane.b32.xlu0 %v982, 56
    %v1176 = vpop.permute.xlu0 %1175
    %v1178 = vsel %vm264, %v1174, 0
    %1180 = vmatpush.msra.mxu0 0.0
    %1181 = vmatpush.msra.mxu0 0.0
    %1182 = vmatpush.msra.mxu0 0.0
    %1183 = vmatpush.msra.mxu0 0.0
    %1184 = vmatpush.msra.mxu0 0.0
    %1185 = vmatpush.msra.mxu0 0.0
    %1186 = vmatpush.msra.mxu0 0.0
    %1187 = vmatpush.msra.mxu0 0.0
    %1188 = vmatpush.msra.mxu0 0.0
    %1189 = vmatpush.msra.mxu0 0.0
    %1190 = vmatpush.msra.mxu0 0.0
    %1191 = vmatpush.msra.mxu0 0.0
    %1192 = vmatpush.msra.mxu0 0.0
    %1193 = vmatpush.msra.mxu0 0.0
    %1194 = vmatpush.msra.mxu0 0.0
    %1195 = vmatpush.msra.mxu0 %v1176
    %1196 = vmatmul.f32.gmra.mxu0 %v1178
    %v1197 = vpop.f32.mrf.mxu0
    %v1198 = vadd.f32 0.0, %v1197
    %1199 = vdwg.mxu0
    %1200 = vrot.lane.b32.xlu0 %v1139, 16
    %v1201 = vpop.permute.xlu0 %1200
    %v1203 = vmul.f32 %v1125, %v1201
    %1205 = vrot.lane.b32.xlu0 %v1203, 112
    %v1206 = vpop.permute.xlu0 %1205
    %1207 = vrot.lane.b32.xlu0 %v982, 48
    %v1208 = vpop.permute.xlu0 %1207
    %v1210 = vsel %vm264, %v1206, 0
    %1212 = vmatpush.msra.mxu0 0.0
    %1213 = vmatpush.msra.mxu0 0.0
    %1214 = vmatpush.msra.mxu0 0.0
    %1215 = vmatpush.msra.mxu0 0.0
    %1216 = vmatpush.msra.mxu0 0.0
    %1217 = vmatpush.msra.mxu0 0.0
    %1218 = vmatpush.msra.mxu0 0.0
    %1219 = vmatpush.msra.mxu0 0.0
    %1220 = vmatpush.msra.mxu0 0.0
    %1221 = vmatpush.msra.mxu0 0.0
    %1222 = vmatpush.msra.mxu0 0.0
    %1223 = vmatpush.msra.mxu0 0.0
    %1224 = vmatpush.msra.mxu0 0.0
    %1225 = vmatpush.msra.mxu0 0.0
    %1226 = vmatpush.msra.mxu0 0.0
    %1227 = vmatpush.msra.mxu0 %v1208
    %1228 = vmatmul.f32.gmra.mxu0 %v1210
    %v1229 = vpop.f32.mrf.mxu0
    %v1230 = vadd.f32 0.0, %v1229
    %1231 = vdwg.mxu0
    %1232 = vrot.lane.b32.xlu0 %v1139, 24
    %v1233 = vpop.permute.xlu0 %1232
    %v1235 = vmul.f32 %v1125, %v1233
    %1237 = vrot.lane.b32.xlu0 %v1235, 104
    %v1238 = vpop.permute.xlu0 %1237
    %1239 = vrot.lane.b32.xlu0 %v982, 40
    %v1240 = vpop.permute.xlu0 %1239
    %v1242 = vsel %vm264, %v1238, 0
    %1244 = vmatpush.msra.mxu0 0.0
    %1245 = vmatpush.msra.mxu0 0.0
    %1246 = vmatpush.msra.mxu0 0.0
    %1247 = vmatpush.msra.mxu0 0.0
    %1248 = vmatpush.msra.mxu0 0.0
    %1249 = vmatpush.msra.mxu0 0.0
    %1250 = vmatpush.msra.mxu0 0.0
    %1251 = vmatpush.msra.mxu0 0.0
    %1252 = vmatpush.msra.mxu0 0.0
    %1253 = vmatpush.msra.mxu0 0.0
    %1254 = vmatpush.msra.mxu0 0.0
    %1255 = vmatpush.msra.mxu0 0.0
    %1256 = vmatpush.msra.mxu0 0.0
    %1257 = vmatpush.msra.mxu0 0.0
    %1258 = vmatpush.msra.mxu0 0.0
    %1259 = vmatpush.msra.mxu0 %v1240
    %1260 = vmatmul.f32.gmra.mxu0 %v1242
    %v1261 = vpop.f32.mrf.mxu0
    %v1262 = vadd.f32 0.0, %v1261
    %1263 = vdwg.mxu0
    %1265 = vrot.lane.b32.xlu0 %v1198, 8
    %v1266 = vpop.permute.xlu0 %1265
    %1269 = vrot.lane.b32.xlu0 %v1230, 16
    %v1270 = vpop.permute.xlu0 %1269
    %1273 = vrot.lane.b32.xlu0 %v1262, 24
    %v1274 = vpop.permute.xlu0 %1273
    %v1276 = vsel %vm264, %v1165, %v1266
    %v1277 = vsel %vm397, %v1276, %v1270
    %v1278 = vsel %vm399, %v1277, %v1274
    %1280 = vrot.lane.b32.xlu0 %v985, 96
    %v1281 = vpop.permute.xlu0 %1280
    %v1282 = vsel %vm264, %v985, 0
    %v1284 = vsel %vm264, %v1281, 0
    %1286 = vmatpush.xpose.msra.mxu0 0.0
    %1287 = vmatpush.xpose.msra.mxu0 0.0
    %1288 = vmatpush.xpose.msra.mxu0 0.0
    %1289 = vmatpush.xpose.msra.mxu0 0.0
    %1290 = vmatpush.xpose.msra.mxu0 0.0
    %1291 = vmatpush.xpose.msra.mxu0 0.0
    %1292 = vmatpush.xpose.msra.mxu0 0.0
    %1293 = vmatpush.xpose.msra.mxu0 0.0
    %1294 = vmatpush.xpose.msra.mxu0 0.0
    %1295 = vmatpush.xpose.msra.mxu0 0.0
    %1296 = vmatpush.xpose.msra.mxu0 0.0
    %1297 = vmatpush.xpose.msra.mxu0 0.0
    %1298 = vmatpush.xpose.msra.mxu0 0.0
    %1299 = vmatpush.xpose.msra.mxu0 0.0
    %1300 = vmatpush.xpose.msra.mxu0 0.0
    %1301 = vmatpush.xpose.msra.mxu0 %v1284
    %1302 = vmatmul.f32.gmra.mxu0 %v1282
    %v1303 = vpop.f32.mrf.mxu0
    %v1304 = vadd.f32 0.0, %v1303
    %1305 = vdwg.mxu0
    %v1306 = vmul.f32 %v1304, 0.35355338
    %1307 = vrot.lane.b32.xlu0 %v985, 120
    %v1308 = vpop.permute.xlu0 %1307
    %1309 = vrot.lane.b32.xlu0 %v985, 88
    %v1310 = vpop.permute.xlu0 %1309
    %v1311 = vsel %vm264, %v1308, 0
    %v1313 = vsel %vm264, %v1310, 0
    %1315 = vmatpush.xpose.msra.mxu0 0.0
    %1316 = vmatpush.xpose.msra.mxu0 0.0
    %1317 = vmatpush.xpose.msra.mxu0 0.0
    %1318 = vmatpush.xpose.msra.mxu0 0.0
    %1319 = vmatpush.xpose.msra.mxu0 0.0
    %1320 = vmatpush.xpose.msra.mxu0 0.0
    %1321 = vmatpush.xpose.msra.mxu0 0.0
    %1322 = vmatpush.xpose.msra.mxu0 0.0
    %1323 = vmatpush.xpose.msra.mxu0 0.0
    %1324 = vmatpush.xpose.msra.mxu0 0.0
    %1325 = vmatpush.xpose.msra.mxu0 0.0
    %1326 = vmatpush.xpose.msra.mxu0 0.0
    %1327 = vmatpush.xpose.msra.mxu0 0.0
    %1328 = vmatpush.xpose.msra.mxu0 0.0
    %1329 = vmatpush.xpose.msra.mxu0 0.0
    %1330 = vmatpush.xpose.msra.mxu0 %v1313
    %1331 = vmatmul.f32.gmra.mxu0 %v1311
    %v1332 = vpop.f32.mrf.mxu0
    %v1333 = vadd.f32 0.0, %v1332
    %1334 = vdwg.mxu0
    %v1335 = vmul.f32 %v1333, 0.35355338
    %1336 = vrot.lane.b32.xlu0 %v985, 112
    %v1337 = vpop.permute.xlu0 %1336
    %1338 = vrot.lane.b32.xlu0 %v985, 80
    %v1339 = vpop.permute.xlu0 %1338
    %v1340 = vsel %vm264, %v1337, 0
    %v1342 = vsel %vm264, %v1339, 0
    %1344 = vmatpush.xpose.msra.mxu0 0.0
    %1345 = vmatpush.xpose.msra.mxu0 0.0
    %1346 = vmatpush.xpose.msra.mxu0 0.0
    %1347 = vmatpush.xpose.msra.mxu0 0.0
    %1348 = vmatpush.xpose.msra.mxu0 0.0
    %1349 = vmatpush.xpose.msra.mxu0 0.0
    %1350 = vmatpush.xpose.msra.mxu0 0.0
    %1351 = vmatpush.xpose.msra.mxu0 0.0
    %1352 = vmatpush.xpose.msra.mxu0 0.0
    %1353 = vmatpush.xpose.msra.mxu0 0.0
    %1354 = vmatpush.xpose.msra.mxu0 0.0
    %1355 = vmatpush.xpose.msra.mxu0 0.0
    %1356 = vmatpush.xpose.msra.mxu0 0.0
    %1357 = vmatpush.xpose.msra.mxu0 0.0
    %1358 = vmatpush.xpose.msra.mxu0 0.0
    %1359 = vmatpush.xpose.msra.mxu0 %v1342
    %1360 = vmatmul.f32.gmra.mxu0 %v1340
    %v1361 = vpop.f32.mrf.mxu0
    %v1362 = vadd.f32 0.0, %v1361
    %1363 = vdwg.mxu0
    %v1364 = vmul.f32 %v1362, 0.35355338
    %1365 = vrot.lane.b32.xlu0 %v985, 104
    %v1366 = vpop.permute.xlu0 %1365
    %1367 = vrot.lane.b32.xlu0 %v985, 72
    %v1368 = vpop.permute.xlu0 %1367
    %v1369 = vsel %vm264, %v1366, 0
    %v1371 = vsel %vm264, %v1368, 0
    %1373 = vmatpush.xpose.msra.mxu0 0.0
    %1374 = vmatpush.xpose.msra.mxu0 0.0
    %1375 = vmatpush.xpose.msra.mxu0 0.0
    %1376 = vmatpush.xpose.msra.mxu0 0.0
    %1377 = vmatpush.xpose.msra.mxu0 0.0
    %1378 = vmatpush.xpose.msra.mxu0 0.0
    %1379 = vmatpush.xpose.msra.mxu0 0.0
    %1380 = vmatpush.xpose.msra.mxu0 0.0
    %1381 = vmatpush.xpose.msra.mxu0 0.0
    %1382 = vmatpush.xpose.msra.mxu0 0.0
    %1383 = vmatpush.xpose.msra.mxu0 0.0
    %1384 = vmatpush.xpose.msra.mxu0 0.0
    %1385 = vmatpush.xpose.msra.mxu0 0.0
    %1386 = vmatpush.xpose.msra.mxu0 0.0
    %1387 = vmatpush.xpose.msra.mxu0 0.0
    %1388 = vmatpush.xpose.msra.mxu0 %v1371
    %1389 = vmatmul.f32.gmra.mxu0 %v1369
    %v1390 = vpop.f32.mrf.mxu0
    %v1391 = vadd.f32 0.0, %v1390
    %1392 = vdwg.mxu0
    %v1393 = vmul.f32 %v1391, 0.35355338
    %v1394 = vmax.f32 %v1306, %v1335
    %v1395 = vmax.f32 %v1394, %v1364
    %v1396 = vmax.f32 %v1395, %v1393
    %v1397 = vsub.f32 %v1306, %v1396
    %v1398 = vsub.f32 %v1335, %v1396
    %v1399 = vsub.f32 %v1364, %v1396
    %v1400 = vsub.f32 %v1393, %v1396
    %1402 = vrot.lane.b32.xlu0 %v1398, 8
    %v1403 = vpop.permute.xlu0 %1402
    %1406 = vrot.lane.b32.xlu0 %v1399, 16
    %v1407 = vpop.permute.xlu0 %1406
    %1410 = vrot.lane.b32.xlu0 %v1400, 24
    %v1411 = vpop.permute.xlu0 %1410
    %v1413 = vsel %vm264, %v1397, %v1403
    %v1414 = vsel %vm397, %v1413, %v1407
    %v1415 = vsel %vm399, %v1414, %v1411
    %v1416 = vmul.f32 %v1415, 1.442695
    %v1417 = vpow.pop %v1416
    %1419 = vrot.lane.b32.xlu0 %v1417, 120
    %v1420 = vpop.permute.xlu0 %1419
    %v1422 = vadd.f32 %v1417, %v1420
    %1423 = vrot.lane.b32.xlu0 %v1417, 112
    %v1424 = vpop.permute.xlu0 %1423
    %v1426 = vadd.f32 %v1422, %v1424
    %1427 = vrot.lane.b32.xlu0 %v1417, 104
    %v1428 = vpop.permute.xlu0 %1427
    %v1430 = vadd.f32 %v1426, %v1428
    %v1431 = vrcp.pop %v1430
    %v1432 = vmul.f32 %v1417, %v1431
    %1433 = vrot.lane.b32.xlu0 %v985, 64
    %v1434 = vpop.permute.xlu0 %1433
    %v1437 = vsel %vm264, %v1432, 0
    %1439 = vmatpush.msra.mxu0 0.0
    %1440 = vmatpush.msra.mxu0 0.0
    %1441 = vmatpush.msra.mxu0 0.0
    %1442 = vmatpush.msra.mxu0 0.0
    %1443 = vmatpush.msra.mxu0 0.0
    %1444 = vmatpush.msra.mxu0 0.0
    %1445 = vmatpush.msra.mxu0 0.0
    %1446 = vmatpush.msra.mxu0 0.0
    %1447 = vmatpush.msra.mxu0 0.0
    %1448 = vmatpush.msra.mxu0 0.0
    %1449 = vmatpush.msra.mxu0 0.0
    %1450 = vmatpush.msra.mxu0 0.0
    %1451 = vmatpush.msra.mxu0 0.0
    %1452 = vmatpush.msra.mxu0 0.0
    %1453 = vmatpush.msra.mxu0 0.0
    %1454 = vmatpush.msra.mxu0 %v1434
    %1455 = vmatmul.f32.gmra.mxu0 %v1437
    %v1456 = vpop.f32.mrf.mxu0
    %v1457 = vadd.f32 0.0, %v1456
    %1458 = vdwg.mxu0
    %1460 = vrot.lane.b32.xlu0 %v1431, 8
    %v1461 = vpop.permute.xlu0 %1460
    %v1463 = vmul.f32 %v1417, %v1461
    %1465 = vrot.lane.b32.xlu0 %v1463, 120
    %v1466 = vpop.permute.xlu0 %1465
    %1467 = vrot.lane.b32.xlu0 %v985, 56
    %v1468 = vpop.permute.xlu0 %1467
    %v1470 = vsel %vm264, %v1466, 0
    %1472 = vmatpush.msra.mxu0 0.0
    %1473 = vmatpush.msra.mxu0 0.0
    %1474 = vmatpush.msra.mxu0 0.0
    %1475 = vmatpush.msra.mxu0 0.0
    %1476 = vmatpush.msra.mxu0 0.0
    %1477 = vmatpush.msra.mxu0 0.0
    %1478 = vmatpush.msra.mxu0 0.0
    %1479 = vmatpush.msra.mxu0 0.0
    %1480 = vmatpush.msra.mxu0 0.0
    %1481 = vmatpush.msra.mxu0 0.0
    %1482 = vmatpush.msra.mxu0 0.0
    %1483 = vmatpush.msra.mxu0 0.0
    %1484 = vmatpush.msra.mxu0 0.0
    %1485 = vmatpush.msra.mxu0 0.0
    %1486 = vmatpush.msra.mxu0 0.0
    %1487 = vmatpush.msra.mxu0 %v1468
    %1488 = vmatmul.f32.gmra.mxu0 %v1470
    %v1489 = vpop.f32.mrf.mxu0
    %v1490 = vadd.f32 0.0, %v1489
    %1491 = vdwg.mxu0
    %1492 = vrot.lane.b32.xlu0 %v1431, 16
    %v1493 = vpop.permute.xlu0 %1492
    %v1495 = vmul.f32 %v1417, %v1493
    %1497 = vrot.lane.b32.xlu0 %v1495, 112
    %v1498 = vpop.permute.xlu0 %1497
    %1499 = vrot.lane.b32.xlu0 %v985, 48
    %v1500 = vpop.permute.xlu0 %1499
    %v1502 = vsel %vm264, %v1498, 0
    %1504 = vmatpush.msra.mxu0 0.0
    %1505 = vmatpush.msra.mxu0 0.0
    %1506 = vmatpush.msra.mxu0 0.0
    %1507 = vmatpush.msra.mxu0 0.0
    %1508 = vmatpush.msra.mxu0 0.0
    %1509 = vmatpush.msra.mxu0 0.0
    %1510 = vmatpush.msra.mxu0 0.0
    %1511 = vmatpush.msra.mxu0 0.0
    %1512 = vmatpush.msra.mxu0 0.0
    %1513 = vmatpush.msra.mxu0 0.0
    %1514 = vmatpush.msra.mxu0 0.0
    %1515 = vmatpush.msra.mxu0 0.0
    %1516 = vmatpush.msra.mxu0 0.0
    %1517 = vmatpush.msra.mxu0 0.0
    %1518 = vmatpush.msra.mxu0 0.0
    %1519 = vmatpush.msra.mxu0 %v1500
    %1520 = vmatmul.f32.gmra.mxu0 %v1502
    %v1521 = vpop.f32.mrf.mxu0
    %v1522 = vadd.f32 0.0, %v1521
    %1523 = vdwg.mxu0
    %1524 = vrot.lane.b32.xlu0 %v1431, 24
    %v1525 = vpop.permute.xlu0 %1524
    %v1527 = vmul.f32 %v1417, %v1525
    %1529 = vrot.lane.b32.xlu0 %v1527, 104
    %v1530 = vpop.permute.xlu0 %1529
    %1531 = vrot.lane.b32.xlu0 %v985, 40
    %v1532 = vpop.permute.xlu0 %1531
    %v1534 = vsel %vm264, %v1530, 0
    %1536 = vmatpush.msra.mxu0 0.0
    %1537 = vmatpush.msra.mxu0 0.0
    %1538 = vmatpush.msra.mxu0 0.0
    %1539 = vmatpush.msra.mxu0 0.0
    %1540 = vmatpush.msra.mxu0 0.0
    %1541 = vmatpush.msra.mxu0 0.0
    %1542 = vmatpush.msra.mxu0 0.0
    %1543 = vmatpush.msra.mxu0 0.0
    %1544 = vmatpush.msra.mxu0 0.0
    %1545 = vmatpush.msra.mxu0 0.0
    %1546 = vmatpush.msra.mxu0 0.0
    %1547 = vmatpush.msra.mxu0 0.0
    %1548 = vmatpush.msra.mxu0 0.0
    %1549 = vmatpush.msra.mxu0 0.0
    %1550 = vmatpush.msra.mxu0 0.0
    %1551 = vmatpush.msra.mxu0 %v1532
    %1552 = vmatmul.f32.gmra.mxu0 %v1534
    %v1553 = vpop.f32.mrf.mxu0
    %v1554 = vadd.f32 0.0, %v1553
    %1555 = vdwg.mxu0
    %1557 = vrot.lane.b32.xlu0 %v1490, 8
    %v1558 = vpop.permute.xlu0 %1557
    %1561 = vrot.lane.b32.xlu0 %v1522, 16
    %v1562 = vpop.permute.xlu0 %1561
    %1565 = vrot.lane.b32.xlu0 %v1554, 24
    %v1566 = vpop.permute.xlu0 %1565
    %v1568 = vsel %vm264, %v1457, %v1558
    %v1569 = vsel %vm397, %v1568, %v1562
    %v1570 = vsel %vm399, %v1569, %v1566
    %v1572 = vperm.slane %v954, 0
    %v1575 = vsel %vm183, %v1278, 0
    %v1578 = vsel %vm183, %v1570, 0
    %1580 = vmatpush.msra.mxu0 0.0
    %1581 = vmatpush.msra.mxu0 0.0
    %1582 = vmatpush.msra.mxu0 0.0
    %1583 = vmatpush.msra.mxu0 0.0
    %1584 = vmatpush.msra.mxu0 0.0
    %1585 = vmatpush.msra.mxu0 0.0
    %1586 = vmatpush.msra.mxu0 0.0
    %1587 = vmatpush.msra.mxu0 0.0
    %1588 = vmatpush.msra.mxu0 0.0
    %1589 = vmatpush.msra.mxu0 0.0
    %1590 = vmatpush.msra.mxu0 0.0
    %1591 = vmatpush.msra.mxu0 0.0
    %1592 = vmatpush.msra.mxu0 %v952
    %1593 = vmatpush.msra.mxu0 %v951
    %1594 = vmatpush.msra.mxu0 %v950
    %1595 = vmatpush.msra.mxu0 %v949
    %1596 = vmatmul.f32.gmra.mxu0 %v1575
    %v1597 = vpop.f32.mrf.mxu0
    %v1598 = vadd.f32 %v1572, %v1597
    %1599 = vmatmul.f32.gmra.mxu0 %v1578
    %v1600 = vpop.f32.mrf.mxu0
    %v1601 = vadd.f32 %v1572, %v1600
    %1602 = vdwg.mxu0
    %v1603 = vadd.f32 %v1598, %v939
    %v1604 = vadd.f32 %v1601, %v940
    %s1605 = scalar_lea.vmem %s7, 1
    %v1606 = vld [vmem:[%s1605] sm:$0x1]
    %s1607 = scalar_lea.vmem %s8, 1
    %v1608 = vld [vmem:[%s1607] sm:$0x1]
    %v1609 = vsel %vm183, %v1603, 0.0
    %1610 = vadd.xlane.f32.xlu0 %v1609
    %v1611 = vpop.xlane.xlu0 %1610
    %v1612 = vsel %vm183, %v1604, 0.0
    %1613 = vadd.xlane.f32.xlu0 %v1612
    %v1614 = vpop.xlane.xlu0 %1613
    %v1615 = vmul.f32 %v1611, %v892
    %v1616 = vmul.f32 %v1614, %v892
    %v1617 = vsub.f32 %v1603, %v1615
    %v1618 = vsub.f32 %v1604, %v1616
    %v1619 = vmul.f32 %v1617, %v1617
    %v1620 = vmul.f32 %v1618, %v1618
    %v1621 = vsel %vm183, %v1619, 0.0
    %1622 = vadd.xlane.f32.xlu0 %v1621
    %v1623 = vpop.xlane.xlu0 %1622
    %v1624 = vsel %vm183, %v1620, 0.0
    %1625 = vadd.xlane.f32.xlu0 %v1624
    %v1626 = vpop.xlane.xlu0 %1625
    %v1627 = vmul.f32 %v1623, %v892
    %v1628 = vmul.f32 %v1626, %v892
    %v1629 = vadd.f32 %v1627, 1e-05
    %v1630 = vadd.f32 %v1628, 1e-05
    %v1631 = vrsqrt.pop %v1629
    %v1632 = vmul.f32 %v1631, %v1629
    %v1633 = vmul.f32 %v1632, %v1631
    %v1634 = vmul.f32 0.5, %v1633
    %v1635 = vsub.f32 1.5, %v1634
    %v1636 = vmul.f32 %v1631, %v1635
    %vm1637 = vweird.f32 %v1629
    %vm1638 = vweird.f32 %v1631
    %vm1639 = vmor %vm1637, %vm1638
    %v1640 = vsel %vm1639, %v1631, %v1636
    %v1641 = vrsqrt.pop %v1630
    %v1642 = vmul.f32 %v1641, %v1630
    %v1643 = vmul.f32 %v1642, %v1641
    %v1644 = vmul.f32 0.5, %v1643
    %v1645 = vsub.f32 1.5, %v1644
    %v1646 = vmul.f32 %v1641, %v1645
    %vm1647 = vweird.f32 %v1630
    %vm1648 = vweird.f32 %v1641
    %vm1649 = vmor %vm1647, %vm1648
    %v1650 = vsel %vm1649, %v1641, %v1646
    %v1651 = vmul.f32 %v1617, %v1640
    %v1652 = vmul.f32 %v1618, %v1650
    %v1654 = vperm.slane %v1606, 0
    %v1656 = vmul.f32 %v1651, %v1654
    %v1657 = vmul.f32 %v1652, %v1654
    %v1659 = vperm.slane %v1608, 0
    %v1661 = vadd.f32 %v1656, %v1659
    %v1662 = vadd.f32 %v1657, %v1659
    %v1663 = vld [vmem:[#allocation10] sm:$0xff]
    %v1664 = vld [vmem:[#allocation10 + $0x8] sm:$0xff]
    %v1665 = vld [vmem:[#allocation10 + $0x10] sm:$0xff]
    %v1666 = vld [vmem:[#allocation10 + $0x18] sm:$0xff]
    %v1667 = vld [vmem:[#allocation11] sm:$0x1]
    %v1669 = vperm.slane %v1667, 0
    %v1672 = vsel %vm183, %v1661, 0
    %v1675 = vsel %vm183, %v1662, 0
    %1677 = vmatpush.msra.mxu0 0.0
    %1678 = vmatpush.msra.mxu0 0.0
    %1679 = vmatpush.msra.mxu0 0.0
    %1680 = vmatpush.msra.mxu0 0.0
    %1681 = vmatpush.msra.mxu0 0.0
    %1682 = vmatpush.msra.mxu0 0.0
    %1683 = vmatpush.msra.mxu0 0.0
    %1684 = vmatpush.msra.mxu0 0.0
    %1685 = vmatpush.msra.mxu0 0.0
    %1686 = vmatpush.msra.mxu0 0.0
    %1687 = vmatpush.msra.mxu0 0.0
    %1688 = vmatpush.msra.mxu0 0.0
    %1689 = vmatpush.msra.mxu0 %v1666
    %1690 = vmatpush.msra.mxu0 %v1665
    %1691 = vmatpush.msra.mxu0 %v1664
    %1692 = vmatpush.msra.mxu0 %v1663
    %1693 = vmatmul.f32.gmra.mxu0 %v1672
    %v1694 = vpop.f32.mrf.mxu0
    %v1695 = vadd.f32 %v1669, %v1694
    %1696 = vmatmul.f32.gmra.mxu0 %v1675
    %v1697 = vpop.f32.mrf.mxu0
    %v1698 = vadd.f32 %v1669, %v1697
    %1699 = vdwg.mxu0
    %v1700 = vmax.f32 %v1695, 0.0
    %v1701 = vmax.f32 %v1698, 0.0
    %v1702 = vld [vmem:[%s11] sm:$0xff]
    %v1703 = vld [vmem:[%s11 + $0x8] sm:$0xff]
    %v1704 = vld [vmem:[%s11 + $0x10] sm:$0xff]
    %v1705 = vld [vmem:[%s11 + $0x18] sm:$0xff]
    %v1706 = vld [vmem:[%s11 + $0x20] sm:$0xff]
    %v1707 = vld [vmem:[%s11 + $0x28] sm:$0xff]
    %v1708 = vld [vmem:[%s11 + $0x30] sm:$0xff]
    %v1709 = vld [vmem:[%s11 + $0x38] sm:$0xff]
    %v1710 = vld [vmem:[#allocation13] sm:$0x1]
    %v1712 = vperm.slane %v1710, 0
    %vm1714 = vcmask 523264
    %v1716 = vsel %vm1714, %v1700, 0
    %v1719 = vsel %vm1714, %v1701, 0
    %1721 = vmatpush.msra.mxu0 0.0
    %1722 = vmatpush.msra.mxu0 0.0
    %1723 = vmatpush.msra.mxu0 0.0
    %1724 = vmatpush.msra.mxu0 0.0
    %1725 = vmatpush.msra.mxu0 0.0
    %1726 = vmatpush.msra.mxu0 0.0
    %1727 = vmatpush.msra.mxu0 0.0
    %1728 = vmatpush.msra.mxu0 0.0
    %1729 = vmatpush.msra.mxu0 %v1709
    %1730 = vmatpush.msra.mxu0 %v1708
    %1731 = vmatpush.msra.mxu0 %v1707
    %1732 = vmatpush.msra.mxu0 %v1706
    %1733 = vmatpush.msra.mxu0 %v1705
    %1734 = vmatpush.msra.mxu0 %v1704
    %1735 = vmatpush.msra.mxu0 %v1703
    %1736 = vmatpush.msra.mxu0 %v1702
    %1737 = vmatmul.f32.gmra.mxu0 %v1716
    %v1738 = vpop.f32.mrf.mxu0
    %v1739 = vadd.f32 %v1712, %v1738
    %1740 = vmatmul.f32.gmra.mxu0 %v1719
    %v1741 = vpop.f32.mrf.mxu0
    %v1742 = vadd.f32 %v1712, %v1741
    %1743 = vdwg.mxu0
    %v1744 = vadd.f32 %v1739, %v1661
    %v1745 = vadd.f32 %v1742, %v1662
    %s1746 = scalar_lea.vmem %s7, 2
    %v1747 = vld [vmem:[%s1746] sm:$0x1]
    %s1748 = scalar_lea.vmem %s8, 2
    %v1749 = vld [vmem:[%s1748] sm:$0x1]
    %v1750 = vsel %vm183, %v1744, 0.0
    %1751 = vadd.xlane.f32.xlu0 %v1750
    %v1752 = vpop.xlane.xlu0 %1751
    %v1753 = vsel %vm183, %v1745, 0.0
    %1754 = vadd.xlane.f32.xlu0 %v1753
    %v1755 = vpop.xlane.xlu0 %1754
    %v1756 = vmul.f32 %v1752, %v892
    %v1757 = vmul.f32 %v1755, %v892
    %v1758 = vsub.f32 %v1744, %v1756
    %v1759 = vsub.f32 %v1745, %v1757
    %v1760 = vmul.f32 %v1758, %v1758
    %v1761 = vmul.f32 %v1759, %v1759
    %v1762 = vsel %vm183, %v1760, 0.0
    %1763 = vadd.xlane.f32.xlu0 %v1762
    %v1764 = vpop.xlane.xlu0 %1763
    %v1765 = vsel %vm183, %v1761, 0.0
    %1766 = vadd.xlane.f32.xlu0 %v1765
    %v1767 = vpop.xlane.xlu0 %1766
    %v1768 = vmul.f32 %v1764, %v892
    %v1769 = vmul.f32 %v1767, %v892
    %v1770 = vadd.f32 %v1768, 1e-05
    %v1771 = vadd.f32 %v1769, 1e-05
    %v1772 = vrsqrt.pop %v1770
    %v1773 = vmul.f32 %v1772, %v1770
    %v1774 = vmul.f32 %v1773, %v1772
    %v1775 = vmul.f32 0.5, %v1774
    %v1776 = vsub.f32 1.5, %v1775
    %v1777 = vmul.f32 %v1772, %v1776
    %vm1778 = vweird.f32 %v1770
    %vm1779 = vweird.f32 %v1772
    %vm1780 = vmor %vm1778, %vm1779
    %v1781 = vsel %vm1780, %v1772, %v1777
    %v1782 = vrsqrt.pop %v1771
    %v1783 = vmul.f32 %v1782, %v1771
    %v1784 = vmul.f32 %v1783, %v1782
    %v1785 = vmul.f32 0.5, %v1784
    %v1786 = vsub.f32 1.5, %v1785
    %v1787 = vmul.f32 %v1782, %v1786
    %vm1788 = vweird.f32 %v1771
    %vm1789 = vweird.f32 %v1782
    %vm1790 = vmor %vm1788, %vm1789
    %v1791 = vsel %vm1790, %v1782, %v1787
    %v1792 = vmul.f32 %v1758, %v1781
    %v1793 = vmul.f32 %v1759, %v1791
    %v1795 = vperm.slane %v1747, 0
    %v1797 = vmul.f32 %v1792, %v1795
    %v1798 = vmul.f32 %v1793, %v1795
    %v1800 = vperm.slane %v1749, 0
    %v1802 = vadd.f32 %v1797, %v1800
    %v1803 = vadd.f32 %v1798, %v1800
    %s1804 = scalar_lea.vmem %s3, 64
    %v1805 = vld [vmem:[%s1804] sm:$0xff]
    %v1806 = vld [vmem:[%s1804 + $0x8] sm:$0xff]
    %v1807 = vld [vmem:[%s1804 + $0x10] sm:$0xff]
    %v1808 = vld [vmem:[%s1804 + $0x18] sm:$0xff]
    %s1809 = scalar_lea.vmem [#allocation7], 2
    %v1810 = vld [vmem:[%s1809] sm:$0x1]
    %s1811 = scalar_lea.vmem %s5, 64
    %v1812 = vld [vmem:[%s1811] sm:$0xff]
    %v1813 = vld [vmem:[%s1811 + $0x8] sm:$0xff]
    %v1814 = vld [vmem:[%s1811 + $0x10] sm:$0xff]
    %v1815 = vld [vmem:[%s1811 + $0x18] sm:$0xff]
    %s1816 = scalar_lea.vmem [#allocation8], 2
    %v1817 = vld [vmem:[%s1816] sm:$0x1]
    %v1819 = vperm.slane %v1810, 0
    %1821 = vmatpush.msra.mxu0 0.0
    %1822 = vmatpush.msra.mxu0 0.0
    %1823 = vmatpush.msra.mxu0 0.0
    %1824 = vmatpush.msra.mxu0 0.0
    %1825 = vmatpush.msra.mxu0 0.0
    %1826 = vmatpush.msra.mxu0 0.0
    %1827 = vmatpush.msra.mxu0 0.0
    %1828 = vmatpush.msra.mxu0 0.0
    %1829 = vmatpush.msra.mxu0 0.0
    %1830 = vmatpush.msra.mxu0 0.0
    %1831 = vmatpush.msra.mxu0 0.0
    %1832 = vmatpush.msra.mxu0 0.0
    %1833 = vmatpush.msra.mxu0 %v1808
    %1834 = vmatpush.msra.mxu0 %v1807
    %1835 = vmatpush.msra.mxu0 %v1806
    %1836 = vmatpush.msra.mxu0 %v1805
    %1837 = vmatmul.f32.gmra.mxu0 %v185
    %v1838 = vpop.f32.mrf.mxu0
    %v1839 = vadd.f32 %v1819, %v1838
    %1840 = vmatmul.f32.gmra.mxu0 %v188
    %v1841 = vpop.f32.mrf.mxu0
    %v1842 = vadd.f32 %v1819, %v1841
    %1843 = vdwg.mxu0
    %1848 = vrot.lane.b32.xlu0 %v1805, 64
    %v1849 = vpop.permute.xlu0 %1848
    %1850 = vrot.lane.b32.xlu0 %v1806, 64
    %v1851 = vpop.permute.xlu0 %1850
    %1852 = vrot.lane.b32.xlu0 %v1807, 64
    %v1853 = vpop.permute.xlu0 %1852
    %1854 = vrot.lane.b32.xlu0 %v1808, 64
    %v1855 = vpop.permute.xlu0 %1854
    %1860 = vrot.lane.b32.xlu0 %v1819, 64
    %v1861 = vpop.permute.xlu0 %1860
    %v1864 = vsel %vm183, %v1802, 0
    %v1867 = vsel %vm183, %v1803, 0
    %1869 = vmatpush.msra.mxu0 0.0
    %1870 = vmatpush.msra.mxu0 0.0
    %1871 = vmatpush.msra.mxu0 0.0
    %1872 = vmatpush.msra.mxu0 0.0
    %1873 = vmatpush.msra.mxu0 0.0
    %1874 = vmatpush.msra.mxu0 0.0
    %1875 = vmatpush.msra.mxu0 0.0
    %1876 = vmatpush.msra.mxu0 0.0
    %1877 = vmatpush.msra.mxu0 0.0
    %1878 = vmatpush.msra.mxu0 0.0
    %1879 = vmatpush.msra.mxu0 0.0
    %1880 = vmatpush.msra.mxu0 0.0
    %1881 = vmatpush.msra.mxu0 %v1855
    %1882 = vmatpush.msra.mxu0 %v1853
    %1883 = vmatpush.msra.mxu0 %v1851
    %1884 = vmatpush.msra.mxu0 %v1849
    %1885 = vmatmul.f32.gmra.mxu0 %v1864
    %v1886 = vpop.f32.mrf.mxu0
    %v1887 = vadd.f32 %v1861, %v1886
    %1888 = vmatmul.f32.gmra.mxu0 %v1867
    %v1889 = vpop.f32.mrf.mxu0
    %v1890 = vadd.f32 %v1861, %v1889
    %1891 = vdwg.mxu0
    %1893 = vrot.lane.b32.xlu0 %v1839, 96
    %v1894 = vpop.permute.xlu0 %1893
    %v1895 = vsel %vm264, %v1839, 0
    %v1897 = vsel %vm264, %v1894, 0
    %1899 = vmatpush.xpose.msra.mxu0 0.0
    %1900 = vmatpush.xpose.msra.mxu0 0.0
    %1901 = vmatpush.xpose.msra.mxu0 0.0
    %1902 = vmatpush.xpose.msra.mxu0 0.0
    %1903 = vmatpush.xpose.msra.mxu0 0.0
    %1904 = vmatpush.xpose.msra.mxu0 0.0
    %1905 = vmatpush.xpose.msra.mxu0 0.0
    %1906 = vmatpush.xpose.msra.mxu0 0.0
    %1907 = vmatpush.xpose.msra.mxu0 0.0
    %1908 = vmatpush.xpose.msra.mxu0 0.0
    %1909 = vmatpush.xpose.msra.mxu0 0.0
    %1910 = vmatpush.xpose.msra.mxu0 0.0
    %1911 = vmatpush.xpose.msra.mxu0 0.0
    %1912 = vmatpush.xpose.msra.mxu0 0.0
    %1913 = vmatpush.xpose.msra.mxu0 0.0
    %1914 = vmatpush.xpose.msra.mxu0 %v1897
    %1915 = vmatmul.f32.gmra.mxu0 %v1895
    %v1916 = vpop.f32.mrf.mxu0
    %v1917 = vadd.f32 0.0, %v1916
    %1918 = vdwg.mxu0
    %v1919 = vmul.f32 %v1917, 0.35355338
    %1920 = vrot.lane.b32.xlu0 %v1839, 120
    %v1921 = vpop.permute.xlu0 %1920
    %1922 = vrot.lane.b32.xlu0 %v1839, 88
    %v1923 = vpop.permute.xlu0 %1922
    %v1924 = vsel %vm264, %v1921, 0
    %v1926 = vsel %vm264, %v1923, 0
    %1928 = vmatpush.xpose.msra.mxu0 0.0
    %1929 = vmatpush.xpose.msra.mxu0 0.0
    %1930 = vmatpush.xpose.msra.mxu0 0.0
    %1931 = vmatpush.xpose.msra.mxu0 0.0
    %1932 = vmatpush.xpose.msra.mxu0 0.0
    %1933 = vmatpush.xpose.msra.mxu0 0.0
    %1934 = vmatpush.xpose.msra.mxu0 0.0
    %1935 = vmatpush.xpose.msra.mxu0 0.0
    %1936 = vmatpush.xpose.msra.mxu0 0.0
    %1937 = vmatpush.xpose.msra.mxu0 0.0
    %1938 = vmatpush.xpose.msra.mxu0 0.0
    %1939 = vmatpush.xpose.msra.mxu0 0.0
    %1940 = vmatpush.xpose.msra.mxu0 0.0
    %1941 = vmatpush.xpose.msra.mxu0 0.0
    %1942 = vmatpush.xpose.msra.mxu0 0.0
    %1943 = vmatpush.xpose.msra.mxu0 %v1926
    %1944 = vmatmul.f32.gmra.mxu0 %v1924
    %v1945 = vpop.f32.mrf.mxu0
    %v1946 = vadd.f32 0.0, %v1945
    %1947 = vdwg.mxu0
    %v1948 = vmul.f32 %v1946, 0.35355338
    %1949 = vrot.lane.b32.xlu0 %v1839, 112
    %v1950 = vpop.permute.xlu0 %1949
    %1951 = vrot.lane.b32.xlu0 %v1839, 80
    %v1952 = vpop.permute.xlu0 %1951
    %v1953 = vsel %vm264, %v1950, 0
    %v1955 = vsel %vm264, %v1952, 0
    %1957 = vmatpush.xpose.msra.mxu0 0.0
    %1958 = vmatpush.xpose.msra.mxu0 0.0
    %1959 = vmatpush.xpose.msra.mxu0 0.0
    %1960 = vmatpush.xpose.msra.mxu0 0.0
    %1961 = vmatpush.xpose.msra.mxu0 0.0
    %1962 = vmatpush.xpose.msra.mxu0 0.0
    %1963 = vmatpush.xpose.msra.mxu0 0.0
    %1964 = vmatpush.xpose.msra.mxu0 0.0
    %1965 = vmatpush.xpose.msra.mxu0 0.0
    %1966 = vmatpush.xpose.msra.mxu0 0.0
    %1967 = vmatpush.xpose.msra.mxu0 0.0
    %1968 = vmatpush.xpose.msra.mxu0 0.0
    %1969 = vmatpush.xpose.msra.mxu0 0.0
    %1970 = vmatpush.xpose.msra.mxu0 0.0
    %1971 = vmatpush.xpose.msra.mxu0 0.0
    %1972 = vmatpush.xpose.msra.mxu0 %v1955
    %1973 = vmatmul.f32.gmra.mxu0 %v1953
    %v1974 = vpop.f32.mrf.mxu0
    %v1975 = vadd.f32 0.0, %v1974
    %1976 = vdwg.mxu0
    %v1977 = vmul.f32 %v1975, 0.35355338
    %1978 = vrot.lane.b32.xlu0 %v1839, 104
    %v1979 = vpop.permute.xlu0 %1978
    %1980 = vrot.lane.b32.xlu0 %v1839, 72
    %v1981 = vpop.permute.xlu0 %1980
    %v1982 = vsel %vm264, %v1979, 0
    %v1984 = vsel %vm264, %v1981, 0
    %1986 = vmatpush.xpose.msra.mxu0 0.0
    %1987 = vmatpush.xpose.msra.mxu0 0.0
    %1988 = vmatpush.xpose.msra.mxu0 0.0
    %1989 = vmatpush.xpose.msra.mxu0 0.0
    %1990 = vmatpush.xpose.msra.mxu0 0.0
    %1991 = vmatpush.xpose.msra.mxu0 0.0
    %1992 = vmatpush.xpose.msra.mxu0 0.0
    %1993 = vmatpush.xpose.msra.mxu0 0.0
    %1994 = vmatpush.xpose.msra.mxu0 0.0
    %1995 = vmatpush.xpose.msra.mxu0 0.0
    %1996 = vmatpush.xpose.msra.mxu0 0.0
    %1997 = vmatpush.xpose.msra.mxu0 0.0
    %1998 = vmatpush.xpose.msra.mxu0 0.0
    %1999 = vmatpush.xpose.msra.mxu0 0.0
    %2000 = vmatpush.xpose.msra.mxu0 0.0
    %2001 = vmatpush.xpose.msra.mxu0 %v1984
    %2002 = vmatmul.f32.gmra.mxu0 %v1982
    %v2003 = vpop.f32.mrf.mxu0
    %v2004 = vadd.f32 0.0, %v2003
    %2005 = vdwg.mxu0
    %v2006 = vmul.f32 %v2004, 0.35355338
    %v2007 = vmax.f32 %v1919, %v1948
    %v2008 = vmax.f32 %v2007, %v1977
    %v2009 = vmax.f32 %v2008, %v2006
    %v2010 = vsub.f32 %v1919, %v2009
    %v2011 = vsub.f32 %v1948, %v2009
    %v2012 = vsub.f32 %v1977, %v2009
    %v2013 = vsub.f32 %v2006, %v2009
    %2015 = vrot.lane.b32.xlu0 %v2011, 8
    %v2016 = vpop.permute.xlu0 %2015
    %2019 = vrot.lane.b32.xlu0 %v2012, 16
    %v2020 = vpop.permute.xlu0 %2019
    %2023 = vrot.lane.b32.xlu0 %v2013, 24
    %v2024 = vpop.permute.xlu0 %2023
    %v2026 = vsel %vm264, %v2010, %v2016
    %v2027 = vsel %vm397, %v2026, %v2020
    %v2028 = vsel %vm399, %v2027, %v2024
    %v2029 = vmul.f32 %v2028, 1.442695
    %v2030 = vpow.pop %v2029
    %2032 = vrot.lane.b32.xlu0 %v2030, 120
    %v2033 = vpop.permute.xlu0 %2032
    %v2035 = vadd.f32 %v2030, %v2033
    %2036 = vrot.lane.b32.xlu0 %v2030, 112
    %v2037 = vpop.permute.xlu0 %2036
    %v2039 = vadd.f32 %v2035, %v2037
    %2040 = vrot.lane.b32.xlu0 %v2030, 104
    %v2041 = vpop.permute.xlu0 %2040
    %v2043 = vadd.f32 %v2039, %v2041
    %v2044 = vrcp.pop %v2043
    %v2045 = vmul.f32 %v2030, %v2044
    %v2047 = vsel %vm264, %v2045, 0
    %2049 = vmatpush.msra.mxu0 0.0
    %2050 = vmatpush.msra.mxu0 0.0
    %2051 = vmatpush.msra.mxu0 0.0
    %2052 = vmatpush.msra.mxu0 0.0
    %2053 = vmatpush.msra.mxu0 0.0
    %2054 = vmatpush.msra.mxu0 0.0
    %2055 = vmatpush.msra.mxu0 0.0
    %2056 = vmatpush.msra.mxu0 0.0
    %2057 = vmatpush.msra.mxu0 0.0
    %2058 = vmatpush.msra.mxu0 0.0
    %2059 = vmatpush.msra.mxu0 0.0
    %2060 = vmatpush.msra.mxu0 0.0
    %2061 = vmatpush.msra.mxu0 0.0
    %2062 = vmatpush.msra.mxu0 0.0
    %2063 = vmatpush.msra.mxu0 0.0
    %2064 = vmatpush.msra.mxu0 %v1887
    %2065 = vmatmul.f32.gmra.mxu0 %v2047
    %v2066 = vpop.f32.mrf.mxu0
    %v2067 = vadd.f32 0.0, %v2066
    %2068 = vdwg.mxu0
    %2070 = vrot.lane.b32.xlu0 %v2044, 8
    %v2071 = vpop.permute.xlu0 %2070
    %v2073 = vmul.f32 %v2030, %v2071
    %2075 = vrot.lane.b32.xlu0 %v2073, 120
    %v2076 = vpop.permute.xlu0 %2075
    %2078 = vrot.lane.b32.xlu0 %v1887, 120
    %v2079 = vpop.permute.xlu0 %2078
    %v2081 = vsel %vm264, %v2076, 0
    %2083 = vmatpush.msra.mxu0 0.0
    %2084 = vmatpush.msra.mxu0 0.0
    %2085 = vmatpush.msra.mxu0 0.0
    %2086 = vmatpush.msra.mxu0 0.0
    %2087 = vmatpush.msra.mxu0 0.0
    %2088 = vmatpush.msra.mxu0 0.0
    %2089 = vmatpush.msra.mxu0 0.0
    %2090 = vmatpush.msra.mxu0 0.0
    %2091 = vmatpush.msra.mxu0 0.0
    %2092 = vmatpush.msra.mxu0 0.0
    %2093 = vmatpush.msra.mxu0 0.0
    %2094 = vmatpush.msra.mxu0 0.0
    %2095 = vmatpush.msra.mxu0 0.0
    %2096 = vmatpush.msra.mxu0 0.0
    %2097 = vmatpush.msra.mxu0 0.0
    %2098 = vmatpush.msra.mxu0 %v2079
    %2099 = vmatmul.f32.gmra.mxu0 %v2081
    %v2100 = vpop.f32.mrf.mxu0
    %v2101 = vadd.f32 0.0, %v2100
    %2102 = vdwg.mxu0
    %2103 = vrot.lane.b32.xlu0 %v2044, 16
    %v2104 = vpop.permute.xlu0 %2103
    %v2106 = vmul.f32 %v2030, %v2104
    %2108 = vrot.lane.b32.xlu0 %v2106, 112
    %v2109 = vpop.permute.xlu0 %2108
    %2110 = vrot.lane.b32.xlu0 %v1887, 112
    %v2111 = vpop.permute.xlu0 %2110
    %v2113 = vsel %vm264, %v2109, 0
    %2115 = vmatpush.msra.mxu0 0.0
    %2116 = vmatpush.msra.mxu0 0.0
    %2117 = vmatpush.msra.mxu0 0.0
    %2118 = vmatpush.msra.mxu0 0.0
    %2119 = vmatpush.msra.mxu0 0.0
    %2120 = vmatpush.msra.mxu0 0.0
    %2121 = vmatpush.msra.mxu0 0.0
    %2122 = vmatpush.msra.mxu0 0.0
    %2123 = vmatpush.msra.mxu0 0.0
    %2124 = vmatpush.msra.mxu0 0.0
    %2125 = vmatpush.msra.mxu0 0.0
    %2126 = vmatpush.msra.mxu0 0.0
    %2127 = vmatpush.msra.mxu0 0.0
    %2128 = vmatpush.msra.mxu0 0.0
    %2129 = vmatpush.msra.mxu0 0.0
    %2130 = vmatpush.msra.mxu0 %v2111
    %2131 = vmatmul.f32.gmra.mxu0 %v2113
    %v2132 = vpop.f32.mrf.mxu0
    %v2133 = vadd.f32 0.0, %v2132
    %2134 = vdwg.mxu0
    %2135 = vrot.lane.b32.xlu0 %v2044, 24
    %v2136 = vpop.permute.xlu0 %2135
    %v2138 = vmul.f32 %v2030, %v2136
    %2140 = vrot.lane.b32.xlu0 %v2138, 104
    %v2141 = vpop.permute.xlu0 %2140
    %2142 = vrot.lane.b32.xlu0 %v1887, 104
    %v2143 = vpop.permute.xlu0 %2142
    %v2145 = vsel %vm264, %v2141, 0
    %2147 = vmatpush.msra.mxu0 0.0
    %2148 = vmatpush.msra.mxu0 0.0
    %2149 = vmatpush.msra.mxu0 0.0
    %2150 = vmatpush.msra.mxu0 0.0
    %2151 = vmatpush.msra.mxu0 0.0
    %2152 = vmatpush.msra.mxu0 0.0
    %2153 = vmatpush.msra.mxu0 0.0
    %2154 = vmatpush.msra.mxu0 0.0
    %2155 = vmatpush.msra.mxu0 0.0
    %2156 = vmatpush.msra.mxu0 0.0
    %2157 = vmatpush.msra.mxu0 0.0
    %2158 = vmatpush.msra.mxu0 0.0
    %2159 = vmatpush.msra.mxu0 0.0
    %2160 = vmatpush.msra.mxu0 0.0
    %2161 = vmatpush.msra.mxu0 0.0
    %2162 = vmatpush.msra.mxu0 %v2143
    %2163 = vmatmul.f32.gmra.mxu0 %v2145
    %v2164 = vpop.f32.mrf.mxu0
    %v2165 = vadd.f32 0.0, %v2164
    %2166 = vdwg.mxu0
    %2168 = vrot.lane.b32.xlu0 %v2101, 8
    %v2169 = vpop.permute.xlu0 %2168
    %2172 = vrot.lane.b32.xlu0 %v2133, 16
    %v2173 = vpop.permute.xlu0 %2172
    %2176 = vrot.lane.b32.xlu0 %v2165, 24
    %v2177 = vpop.permute.xlu0 %2176
    %v2179 = vsel %vm264, %v2067, %v2169
    %v2180 = vsel %vm397, %v2179, %v2173
    %v2181 = vsel %vm399, %v2180, %v2177
    %2183 = vrot.lane.b32.xlu0 %v1842, 96
    %v2184 = vpop.permute.xlu0 %2183
    %v2185 = vsel %vm264, %v1842, 0
    %v2187 = vsel %vm264, %v2184, 0
    %2189 = vmatpush.xpose.msra.mxu0 0.0
    %2190 = vmatpush.xpose.msra.mxu0 0.0
    %2191 = vmatpush.xpose.msra.mxu0 0.0
    %2192 = vmatpush.xpose.msra.mxu0 0.0
    %2193 = vmatpush.xpose.msra.mxu0 0.0
    %2194 = vmatpush.xpose.msra.mxu0 0.0
    %2195 = vmatpush.xpose.msra.mxu0 0.0
    %2196 = vmatpush.xpose.msra.mxu0 0.0
    %2197 = vmatpush.xpose.msra.mxu0 0.0
    %2198 = vmatpush.xpose.msra.mxu0 0.0
    %2199 = vmatpush.xpose.msra.mxu0 0.0
    %2200 = vmatpush.xpose.msra.mxu0 0.0
    %2201 = vmatpush.xpose.msra.mxu0 0.0
    %2202 = vmatpush.xpose.msra.mxu0 0.0
    %2203 = vmatpush.xpose.msra.mxu0 0.0
    %2204 = vmatpush.xpose.msra.mxu0 %v2187
    %2205 = vmatmul.f32.gmra.mxu0 %v2185
    %v2206 = vpop.f32.mrf.mxu0
    %v2207 = vadd.f32 0.0, %v2206
    %2208 = vdwg.mxu0
    %v2209 = vmul.f32 %v2207, 0.35355338
    %2210 = vrot.lane.b32.xlu0 %v1842, 120
    %v2211 = vpop.permute.xlu0 %2210
    %2212 = vrot.lane.b32.xlu0 %v1842, 88
    %v2213 = vpop.permute.xlu0 %2212
    %v2214 = vsel %vm264, %v2211, 0
    %v2216 = vsel %vm264, %v2213, 0
    %2218 = vmatpush.xpose.msra.mxu0 0.0
    %2219 = vmatpush.xpose.msra.mxu0 0.0
    %2220 = vmatpush.xpose.msra.mxu0 0.0
    %2221 = vmatpush.xpose.msra.mxu0 0.0
    %2222 = vmatpush.xpose.msra.mxu0 0.0
    %2223 = vmatpush.xpose.msra.mxu0 0.0
    %2224 = vmatpush.xpose.msra.mxu0 0.0
    %2225 = vmatpush.xpose.msra.mxu0 0.0
    %2226 = vmatpush.xpose.msra.mxu0 0.0
    %2227 = vmatpush.xpose.msra.mxu0 0.0
    %2228 = vmatpush.xpose.msra.mxu0 0.0
    %2229 = vmatpush.xpose.msra.mxu0 0.0
    %2230 = vmatpush.xpose.msra.mxu0 0.0
    %2231 = vmatpush.xpose.msra.mxu0 0.0
    %2232 = vmatpush.xpose.msra.mxu0 0.0
    %2233 = vmatpush.xpose.msra.mxu0 %v2216
    %2234 = vmatmul.f32.gmra.mxu0 %v2214
    %v2235 = vpop.f32.mrf.mxu0
    %v2236 = vadd.f32 0.0, %v2235
    %2237 = vdwg.mxu0
    %v2238 = vmul.f32 %v2236, 0.35355338
    %2239 = vrot.lane.b32.xlu0 %v1842, 112
    %v2240 = vpop.permute.xlu0 %2239
    %2241 = vrot.lane.b32.xlu0 %v1842, 80
    %v2242 = vpop.permute.xlu0 %2241
    %v2243 = vsel %vm264, %v2240, 0
    %v2245 = vsel %vm264, %v2242, 0
    %2247 = vmatpush.xpose.msra.mxu0 0.0
    %2248 = vmatpush.xpose.msra.mxu0 0.0
    %2249 = vmatpush.xpose.msra.mxu0 0.0
    %2250 = vmatpush.xpose.msra.mxu0 0.0
    %2251 = vmatpush.xpose.msra.mxu0 0.0
    %2252 = vmatpush.xpose.msra.mxu0 0.0
    %2253 = vmatpush.xpose.msra.mxu0 0.0
    %2254 = vmatpush.xpose.msra.mxu0 0.0
    %2255 = vmatpush.xpose.msra.mxu0 0.0
    %2256 = vmatpush.xpose.msra.mxu0 0.0
    %2257 = vmatpush.xpose.msra.mxu0 0.0
    %2258 = vmatpush.xpose.msra.mxu0 0.0
    %2259 = vmatpush.xpose.msra.mxu0 0.0
    %2260 = vmatpush.xpose.msra.mxu0 0.0
    %2261 = vmatpush.xpose.msra.mxu0 0.0
    %2262 = vmatpush.xpose.msra.mxu0 %v2245
    %2263 = vmatmul.f32.gmra.mxu0 %v2243
    %v2264 = vpop.f32.mrf.mxu0
    %v2265 = vadd.f32 0.0, %v2264
    %2266 = vdwg.mxu0
    %v2267 = vmul.f32 %v2265, 0.35355338
    %2268 = vrot.lane.b32.xlu0 %v1842, 104
    %v2269 = vpop.permute.xlu0 %2268
    %2270 = vrot.lane.b32.xlu0 %v1842, 72
    %v2271 = vpop.permute.xlu0 %2270
    %v2272 = vsel %vm264, %v2269, 0
    %v2274 = vsel %vm264, %v2271, 0
    %2276 = vmatpush.xpose.msra.mxu0 0.0
    %2277 = vmatpush.xpose.msra.mxu0 0.0
    %2278 = vmatpush.xpose.msra.mxu0 0.0
    %2279 = vmatpush.xpose.msra.mxu0 0.0
    %2280 = vmatpush.xpose.msra.mxu0 0.0
    %2281 = vmatpush.xpose.msra.mxu0 0.0
    %2282 = vmatpush.xpose.msra.mxu0 0.0
    %2283 = vmatpush.xpose.msra.mxu0 0.0
    %2284 = vmatpush.xpose.msra.mxu0 0.0
    %2285 = vmatpush.xpose.msra.mxu0 0.0
    %2286 = vmatpush.xpose.msra.mxu0 0.0
    %2287 = vmatpush.xpose.msra.mxu0 0.0
    %2288 = vmatpush.xpose.msra.mxu0 0.0
    %2289 = vmatpush.xpose.msra.mxu0 0.0
    %2290 = vmatpush.xpose.msra.mxu0 0.0
    %2291 = vmatpush.xpose.msra.mxu0 %v2274
    %2292 = vmatmul.f32.gmra.mxu0 %v2272
    %v2293 = vpop.f32.mrf.mxu0
    %v2294 = vadd.f32 0.0, %v2293
    %2295 = vdwg.mxu0
    %v2296 = vmul.f32 %v2294, 0.35355338
    %v2297 = vmax.f32 %v2209, %v2238
    %v2298 = vmax.f32 %v2297, %v2267
    %v2299 = vmax.f32 %v2298, %v2296
    %v2300 = vsub.f32 %v2209, %v2299
    %v2301 = vsub.f32 %v2238, %v2299
    %v2302 = vsub.f32 %v2267, %v2299
    %v2303 = vsub.f32 %v2296, %v2299
    %2305 = vrot.lane.b32.xlu0 %v2301, 8
    %v2306 = vpop.permute.xlu0 %2305
    %2309 = vrot.lane.b32.xlu0 %v2302, 16
    %v2310 = vpop.permute.xlu0 %2309
    %2313 = vrot.lane.b32.xlu0 %v2303, 24
    %v2314 = vpop.permute.xlu0 %2313
    %v2316 = vsel %vm264, %v2300, %v2306
    %v2317 = vsel %vm397, %v2316, %v2310
    %v2318 = vsel %vm399, %v2317, %v2314
    %v2319 = vmul.f32 %v2318, 1.442695
    %v2320 = vpow.pop %v2319
    %2322 = vrot.lane.b32.xlu0 %v2320, 120
    %v2323 = vpop.permute.xlu0 %2322
    %v2325 = vadd.f32 %v2320, %v2323
    %2326 = vrot.lane.b32.xlu0 %v2320, 112
    %v2327 = vpop.permute.xlu0 %2326
    %v2329 = vadd.f32 %v2325, %v2327
    %2330 = vrot.lane.b32.xlu0 %v2320, 104
    %v2331 = vpop.permute.xlu0 %2330
    %v2333 = vadd.f32 %v2329, %v2331
    %v2334 = vrcp.pop %v2333
    %v2335 = vmul.f32 %v2320, %v2334
    %v2337 = vsel %vm264, %v2335, 0
    %2339 = vmatpush.msra.mxu0 0.0
    %2340 = vmatpush.msra.mxu0 0.0
    %2341 = vmatpush.msra.mxu0 0.0
    %2342 = vmatpush.msra.mxu0 0.0
    %2343 = vmatpush.msra.mxu0 0.0
    %2344 = vmatpush.msra.mxu0 0.0
    %2345 = vmatpush.msra.mxu0 0.0
    %2346 = vmatpush.msra.mxu0 0.0
    %2347 = vmatpush.msra.mxu0 0.0
    %2348 = vmatpush.msra.mxu0 0.0
    %2349 = vmatpush.msra.mxu0 0.0
    %2350 = vmatpush.msra.mxu0 0.0
    %2351 = vmatpush.msra.mxu0 0.0
    %2352 = vmatpush.msra.mxu0 0.0
    %2353 = vmatpush.msra.mxu0 0.0
    %2354 = vmatpush.msra.mxu0 %v1890
    %2355 = vmatmul.f32.gmra.mxu0 %v2337
    %v2356 = vpop.f32.mrf.mxu0
    %v2357 = vadd.f32 0.0, %v2356
    %2358 = vdwg.mxu0
    %2360 = vrot.lane.b32.xlu0 %v2334, 8
    %v2361 = vpop.permute.xlu0 %2360
    %v2363 = vmul.f32 %v2320, %v2361
    %2365 = vrot.lane.b32.xlu0 %v2363, 120
    %v2366 = vpop.permute.xlu0 %2365
    %2368 = vrot.lane.b32.xlu0 %v1890, 120
    %v2369 = vpop.permute.xlu0 %2368
    %v2371 = vsel %vm264, %v2366, 0
    %2373 = vmatpush.msra.mxu0 0.0
    %2374 = vmatpush.msra.mxu0 0.0
    %2375 = vmatpush.msra.mxu0 0.0
    %2376 = vmatpush.msra.mxu0 0.0
    %2377 = vmatpush.msra.mxu0 0.0
    %2378 = vmatpush.msra.mxu0 0.0
    %2379 = vmatpush.msra.mxu0 0.0
    %2380 = vmatpush.msra.mxu0 0.0
    %2381 = vmatpush.msra.mxu0 0.0
    %2382 = vmatpush.msra.mxu0 0.0
    %2383 = vmatpush.msra.mxu0 0.0
    %2384 = vmatpush.msra.mxu0 0.0
    %2385 = vmatpush.msra.mxu0 0.0
    %2386 = vmatpush.msra.mxu0 0.0
    %2387 = vmatpush.msra.mxu0 0.0
    %2388 = vmatpush.msra.mxu0 %v2369
    %2389 = vmatmul.f32.gmra.mxu0 %v2371
    %v2390 = vpop.f32.mrf.mxu0
    %v2391 = vadd.f32 0.0, %v2390
    %2392 = vdwg.mxu0
    %2393 = vrot.lane.b32.xlu0 %v2334, 16
    %v2394 = vpop.permute.xlu0 %2393
    %v2396 = vmul.f32 %v2320, %v2394
    %2398 = vrot.lane.b32.xlu0 %v2396, 112
    %v2399 = vpop.permute.xlu0 %2398
    %2400 = vrot.lane.b32.xlu0 %v1890, 112
    %v2401 = vpop.permute.xlu0 %2400
    %v2403 = vsel %vm264, %v2399, 0
    %2405 = vmatpush.msra.mxu0 0.0
    %2406 = vmatpush.msra.mxu0 0.0
    %2407 = vmatpush.msra.mxu0 0.0
    %2408 = vmatpush.msra.mxu0 0.0
    %2409 = vmatpush.msra.mxu0 0.0
    %2410 = vmatpush.msra.mxu0 0.0
    %2411 = vmatpush.msra.mxu0 0.0
    %2412 = vmatpush.msra.mxu0 0.0
    %2413 = vmatpush.msra.mxu0 0.0
    %2414 = vmatpush.msra.mxu0 0.0
    %2415 = vmatpush.msra.mxu0 0.0
    %2416 = vmatpush.msra.mxu0 0.0
    %2417 = vmatpush.msra.mxu0 0.0
    %2418 = vmatpush.msra.mxu0 0.0
    %2419 = vmatpush.msra.mxu0 0.0
    %2420 = vmatpush.msra.mxu0 %v2401
    %2421 = vmatmul.f32.gmra.mxu0 %v2403
    %v2422 = vpop.f32.mrf.mxu0
    %v2423 = vadd.f32 0.0, %v2422
    %2424 = vdwg.mxu0
    %2425 = vrot.lane.b32.xlu0 %v2334, 24
    %v2426 = vpop.permute.xlu0 %2425
    %v2428 = vmul.f32 %v2320, %v2426
    %2430 = vrot.lane.b32.xlu0 %v2428, 104
    %v2431 = vpop.permute.xlu0 %2430
    %2432 = vrot.lane.b32.xlu0 %v1890, 104
    %v2433 = vpop.permute.xlu0 %2432
    %v2435 = vsel %vm264, %v2431, 0
    %2437 = vmatpush.msra.mxu0 0.0
    %2438 = vmatpush.msra.mxu0 0.0
    %2439 = vmatpush.msra.mxu0 0.0
    %2440 = vmatpush.msra.mxu0 0.0
    %2441 = vmatpush.msra.mxu0 0.0
    %2442 = vmatpush.msra.mxu0 0.0
    %2443 = vmatpush.msra.mxu0 0.0
    %2444 = vmatpush.msra.mxu0 0.0
    %2445 = vmatpush.msra.mxu0 0.0
    %2446 = vmatpush.msra.mxu0 0.0
    %2447 = vmatpush.msra.mxu0 0.0
    %2448 = vmatpush.msra.mxu0 0.0
    %2449 = vmatpush.msra.mxu0 0.0
    %2450 = vmatpush.msra.mxu0 0.0
    %2451 = vmatpush.msra.mxu0 0.0
    %2452 = vmatpush.msra.mxu0 %v2433
    %2453 = vmatmul.f32.gmra.mxu0 %v2435
    %v2454 = vpop.f32.mrf.mxu0
    %v2455 = vadd.f32 0.0, %v2454
    %2456 = vdwg.mxu0
    %2458 = vrot.lane.b32.xlu0 %v2391, 8
    %v2459 = vpop.permute.xlu0 %2458
    %2462 = vrot.lane.b32.xlu0 %v2423, 16
    %v2463 = vpop.permute.xlu0 %2462
    %2466 = vrot.lane.b32.xlu0 %v2455, 24
    %v2467 = vpop.permute.xlu0 %2466
    %v2469 = vsel %vm264, %v2357, %v2459
    %v2470 = vsel %vm397, %v2469, %v2463
    %v2471 = vsel %vm399, %v2470, %v2467
    %v2473 = vperm.slane %v1817, 0
    %v2476 = vsel %vm183, %v2181, 0
    %v2479 = vsel %vm183, %v2471, 0
    %2481 = vmatpush.msra.mxu0 0.0
    %2482 = vmatpush.msra.mxu0 0.0
    %2483 = vmatpush.msra.mxu0 0.0
    %2484 = vmatpush.msra.mxu0 0.0
    %2485 = vmatpush.msra.mxu0 0.0
    %2486 = vmatpush.msra.mxu0 0.0
    %2487 = vmatpush.msra.mxu0 0.0
    %2488 = vmatpush.msra.mxu0 0.0
    %2489 = vmatpush.msra.mxu0 0.0
    %2490 = vmatpush.msra.mxu0 0.0
    %2491 = vmatpush.msra.mxu0 0.0
    %2492 = vmatpush.msra.mxu0 0.0
    %2493 = vmatpush.msra.mxu0 %v1815
    %2494 = vmatpush.msra.mxu0 %v1814
    %2495 = vmatpush.msra.mxu0 %v1813
    %2496 = vmatpush.msra.mxu0 %v1812
    %2497 = vmatmul.f32.gmra.mxu0 %v2476
    %v2498 = vpop.f32.mrf.mxu0
    %v2499 = vadd.f32 %v2473, %v2498
    %2500 = vmatmul.f32.gmra.mxu0 %v2479
    %v2501 = vpop.f32.mrf.mxu0
    %v2502 = vadd.f32 %v2473, %v2501
    %2503 = vdwg.mxu0
    %v2504 = vadd.f32 %v2499, %v1802
    %v2505 = vadd.f32 %v2502, %v1803
    %s2506 = scalar_lea.vmem %s7, 3
    %v2507 = vld [vmem:[%s2506] sm:$0x1]
    %s2508 = scalar_lea.vmem %s8, 3
    %v2509 = vld [vmem:[%s2508] sm:$0x1]
    %v2510 = vsel %vm183, %v2504, 0.0
    %2511 = vadd.xlane.f32.xlu0 %v2510
    %v2512 = vpop.xlane.xlu0 %2511
    %v2513 = vsel %vm183, %v2505, 0.0
    %2514 = vadd.xlane.f32.xlu0 %v2513
    %v2515 = vpop.xlane.xlu0 %2514
    %v2516 = vmul.f32 %v2512, %v892
    %v2517 = vmul.f32 %v2515, %v892
    %v2518 = vsub.f32 %v2504, %v2516
    %v2519 = vsub.f32 %v2505, %v2517
    %v2520 = vmul.f32 %v2518, %v2518
    %v2521 = vmul.f32 %v2519, %v2519
    %v2522 = vsel %vm183, %v2520, 0.0
    %2523 = vadd.xlane.f32.xlu0 %v2522
    %v2524 = vpop.xlane.xlu0 %2523
    %v2525 = vsel %vm183, %v2521, 0.0
    %2526 = vadd.xlane.f32.xlu0 %v2525
    %v2527 = vpop.xlane.xlu0 %2526
    %v2528 = vmul.f32 %v2524, %v892
    %v2529 = vmul.f32 %v2527, %v892
    %v2530 = vadd.f32 %v2528, 1e-05
    %v2531 = vadd.f32 %v2529, 1e-05
    %v2532 = vrsqrt.pop %v2530
    %v2533 = vmul.f32 %v2532, %v2530
    %v2534 = vmul.f32 %v2533, %v2532
    %v2535 = vmul.f32 0.5, %v2534
    %v2536 = vsub.f32 1.5, %v2535
    %v2537 = vmul.f32 %v2532, %v2536
    %vm2538 = vweird.f32 %v2530
    %vm2539 = vweird.f32 %v2532
    %vm2540 = vmor %vm2538, %vm2539
    %v2541 = vsel %vm2540, %v2532, %v2537
    %v2542 = vrsqrt.pop %v2531
    %v2543 = vmul.f32 %v2542, %v2531
    %v2544 = vmul.f32 %v2543, %v2542
    %v2545 = vmul.f32 0.5, %v2544
    %v2546 = vsub.f32 1.5, %v2545
    %v2547 = vmul.f32 %v2542, %v2546
    %vm2548 = vweird.f32 %v2531
    %vm2549 = vweird.f32 %v2542
    %vm2550 = vmor %vm2548, %vm2549
    %v2551 = vsel %vm2550, %v2542, %v2547
    %v2552 = vmul.f32 %v2518, %v2541
    %v2553 = vmul.f32 %v2519, %v2551
    %v2555 = vperm.slane %v2507, 0
    %v2557 = vmul.f32 %v2552, %v2555
    %v2558 = vmul.f32 %v2553, %v2555
    %v2560 = vperm.slane %v2509, 0
    %v2562 = vadd.f32 %v2557, %v2560
    %v2563 = vadd.f32 %v2558, %v2560
    %s2564 = scalar_lea.vmem %s3, 96
    %v2565 = vld [vmem:[%s2564] sm:$0xff]
    %v2566 = vld [vmem:[%s2564 + $0x8] sm:$0xff]
    %v2567 = vld [vmem:[%s2564 + $0x10] sm:$0xff]
    %v2568 = vld [vmem:[%s2564 + $0x18] sm:$0xff]
    %s2569 = scalar_lea.vmem [#allocation7], 3
    %v2570 = vld [vmem:[%s2569] sm:$0x1]
    %s2571 = scalar_lea.vmem %s5, 96
    %v2572 = vld [vmem:[%s2571] sm:$0xff]
    %v2573 = vld [vmem:[%s2571 + $0x8] sm:$0xff]
    %v2574 = vld [vmem:[%s2571 + $0x10] sm:$0xff]
    %v2575 = vld [vmem:[%s2571 + $0x18] sm:$0xff]
    %s2576 = scalar_lea.vmem [#allocation8], 3
    %v2577 = vld [vmem:[%s2576] sm:$0x1]
    %v2579 = vperm.slane %v2570, 0
    %v2582 = vsel %vm183, %v2562, 0
    %v2585 = vsel %vm183, %v2563, 0
    %2587 = vmatpush.msra.mxu0 0.0
    %2588 = vmatpush.msra.mxu0 0.0
    %2589 = vmatpush.msra.mxu0 0.0
    %2590 = vmatpush.msra.mxu0 0.0
    %2591 = vmatpush.msra.mxu0 0.0
    %2592 = vmatpush.msra.mxu0 0.0
    %2593 = vmatpush.msra.mxu0 0.0
    %2594 = vmatpush.msra.mxu0 0.0
    %2595 = vmatpush.msra.mxu0 0.0
    %2596 = vmatpush.msra.mxu0 0.0
    %2597 = vmatpush.msra.mxu0 0.0
    %2598 = vmatpush.msra.mxu0 0.0
    %2599 = vmatpush.msra.mxu0 %v2568
    %2600 = vmatpush.msra.mxu0 %v2567
    %2601 = vmatpush.msra.mxu0 %v2566
    %2602 = vmatpush.msra.mxu0 %v2565
    %2603 = vmatmul.f32.gmra.mxu0 %v2582
    %v2604 = vpop.f32.mrf.mxu0
    %v2605 = vadd.f32 %v2579, %v2604
    %2606 = vmatmul.f32.gmra.mxu0 %v2585
    %v2607 = vpop.f32.mrf.mxu0
    %v2608 = vadd.f32 %v2579, %v2607
    %2609 = vdwg.mxu0
    %2611 = vrot.lane.b32.xlu0 %v2605, 96
    %v2612 = vpop.permute.xlu0 %2611
    %v2613 = vsel %vm264, %v2605, 0
    %v2615 = vsel %vm264, %v2612, 0
    %2617 = vmatpush.xpose.msra.mxu0 0.0
    %2618 = vmatpush.xpose.msra.mxu0 0.0
    %2619 = vmatpush.xpose.msra.mxu0 0.0
    %2620 = vmatpush.xpose.msra.mxu0 0.0
    %2621 = vmatpush.xpose.msra.mxu0 0.0
    %2622 = vmatpush.xpose.msra.mxu0 0.0
    %2623 = vmatpush.xpose.msra.mxu0 0.0
    %2624 = vmatpush.xpose.msra.mxu0 0.0
    %2625 = vmatpush.xpose.msra.mxu0 0.0
    %2626 = vmatpush.xpose.msra.mxu0 0.0
    %2627 = vmatpush.xpose.msra.mxu0 0.0
    %2628 = vmatpush.xpose.msra.mxu0 0.0
    %2629 = vmatpush.xpose.msra.mxu0 0.0
    %2630 = vmatpush.xpose.msra.mxu0 0.0
    %2631 = vmatpush.xpose.msra.mxu0 0.0
    %2632 = vmatpush.xpose.msra.mxu0 %v2615
    %2633 = vmatmul.f32.gmra.mxu0 %v2613
    %v2634 = vpop.f32.mrf.mxu0
    %v2635 = vadd.f32 0.0, %v2634
    %2636 = vdwg.mxu0
    %v2637 = vmul.f32 %v2635, 0.35355338
    %2638 = vrot.lane.b32.xlu0 %v2605, 120
    %v2639 = vpop.permute.xlu0 %2638
    %2640 = vrot.lane.b32.xlu0 %v2605, 88
    %v2641 = vpop.permute.xlu0 %2640
    %v2642 = vsel %vm264, %v2639, 0
    %v2644 = vsel %vm264, %v2641, 0
    %2646 = vmatpush.xpose.msra.mxu0 0.0
    %2647 = vmatpush.xpose.msra.mxu0 0.0
    %2648 = vmatpush.xpose.msra.mxu0 0.0
    %2649 = vmatpush.xpose.msra.mxu0 0.0
    %2650 = vmatpush.xpose.msra.mxu0 0.0
    %2651 = vmatpush.xpose.msra.mxu0 0.0
    %2652 = vmatpush.xpose.msra.mxu0 0.0
    %2653 = vmatpush.xpose.msra.mxu0 0.0
    %2654 = vmatpush.xpose.msra.mxu0 0.0
    %2655 = vmatpush.xpose.msra.mxu0 0.0
    %2656 = vmatpush.xpose.msra.mxu0 0.0
    %2657 = vmatpush.xpose.msra.mxu0 0.0
    %2658 = vmatpush.xpose.msra.mxu0 0.0
    %2659 = vmatpush.xpose.msra.mxu0 0.0
    %2660 = vmatpush.xpose.msra.mxu0 0.0
    %2661 = vmatpush.xpose.msra.mxu0 %v2644
    %2662 = vmatmul.f32.gmra.mxu0 %v2642
    %v2663 = vpop.f32.mrf.mxu0
    %v2664 = vadd.f32 0.0, %v2663
    %2665 = vdwg.mxu0
    %v2666 = vmul.f32 %v2664, 0.35355338
    %2667 = vrot.lane.b32.xlu0 %v2605, 112
    %v2668 = vpop.permute.xlu0 %2667
    %2669 = vrot.lane.b32.xlu0 %v2605, 80
    %v2670 = vpop.permute.xlu0 %2669
    %v2671 = vsel %vm264, %v2668, 0
    %v2673 = vsel %vm264, %v2670, 0
    %2675 = vmatpush.xpose.msra.mxu0 0.0
    %2676 = vmatpush.xpose.msra.mxu0 0.0
    %2677 = vmatpush.xpose.msra.mxu0 0.0
    %2678 = vmatpush.xpose.msra.mxu0 0.0
    %2679 = vmatpush.xpose.msra.mxu0 0.0
    %2680 = vmatpush.xpose.msra.mxu0 0.0
    %2681 = vmatpush.xpose.msra.mxu0 0.0
    %2682 = vmatpush.xpose.msra.mxu0 0.0
    %2683 = vmatpush.xpose.msra.mxu0 0.0
    %2684 = vmatpush.xpose.msra.mxu0 0.0
    %2685 = vmatpush.xpose.msra.mxu0 0.0
    %2686 = vmatpush.xpose.msra.mxu0 0.0
    %2687 = vmatpush.xpose.msra.mxu0 0.0
    %2688 = vmatpush.xpose.msra.mxu0 0.0
    %2689 = vmatpush.xpose.msra.mxu0 0.0
    %2690 = vmatpush.xpose.msra.mxu0 %v2673
    %2691 = vmatmul.f32.gmra.mxu0 %v2671
    %v2692 = vpop.f32.mrf.mxu0
    %v2693 = vadd.f32 0.0, %v2692
    %2694 = vdwg.mxu0
    %v2695 = vmul.f32 %v2693, 0.35355338
    %2696 = vrot.lane.b32.xlu0 %v2605, 104
    %v2697 = vpop.permute.xlu0 %2696
    %2698 = vrot.lane.b32.xlu0 %v2605, 72
    %v2699 = vpop.permute.xlu0 %2698
    %v2700 = vsel %vm264, %v2697, 0
    %v2702 = vsel %vm264, %v2699, 0
    %2704 = vmatpush.xpose.msra.mxu0 0.0
    %2705 = vmatpush.xpose.msra.mxu0 0.0
    %2706 = vmatpush.xpose.msra.mxu0 0.0
    %2707 = vmatpush.xpose.msra.mxu0 0.0
    %2708 = vmatpush.xpose.msra.mxu0 0.0
    %2709 = vmatpush.xpose.msra.mxu0 0.0
    %2710 = vmatpush.xpose.msra.mxu0 0.0
    %2711 = vmatpush.xpose.msra.mxu0 0.0
    %2712 = vmatpush.xpose.msra.mxu0 0.0
    %2713 = vmatpush.xpose.msra.mxu0 0.0
    %2714 = vmatpush.xpose.msra.mxu0 0.0
    %2715 = vmatpush.xpose.msra.mxu0 0.0
    %2716 = vmatpush.xpose.msra.mxu0 0.0
    %2717 = vmatpush.xpose.msra.mxu0 0.0
    %2718 = vmatpush.xpose.msra.mxu0 0.0
    %2719 = vmatpush.xpose.msra.mxu0 %v2702
    %2720 = vmatmul.f32.gmra.mxu0 %v2700
    %v2721 = vpop.f32.mrf.mxu0
    %v2722 = vadd.f32 0.0, %v2721
    %2723 = vdwg.mxu0
    %v2724 = vmul.f32 %v2722, 0.35355338
    %v2725 = vmax.f32 %v2637, %v2666
    %v2726 = vmax.f32 %v2725, %v2695
    %v2727 = vmax.f32 %v2726, %v2724
    %v2728 = vsub.f32 %v2637, %v2727
    %v2729 = vsub.f32 %v2666, %v2727
    %v2730 = vsub.f32 %v2695, %v2727
    %v2731 = vsub.f32 %v2724, %v2727
    %2733 = vrot.lane.b32.xlu0 %v2729, 8
    %v2734 = vpop.permute.xlu0 %2733
    %2737 = vrot.lane.b32.xlu0 %v2730, 16
    %v2738 = vpop.permute.xlu0 %2737
    %2741 = vrot.lane.b32.xlu0 %v2731, 24
    %v2742 = vpop.permute.xlu0 %2741
    %v2744 = vsel %vm264, %v2728, %v2734
    %v2745 = vsel %vm397, %v2744, %v2738
    %v2746 = vsel %vm399, %v2745, %v2742
    %v2747 = vmul.f32 %v2746, 1.442695
    %v2748 = vpow.pop %v2747
    %2750 = vrot.lane.b32.xlu0 %v2748, 120
    %v2751 = vpop.permute.xlu0 %2750
    %v2753 = vadd.f32 %v2748, %v2751
    %2754 = vrot.lane.b32.xlu0 %v2748, 112
    %v2755 = vpop.permute.xlu0 %2754
    %v2757 = vadd.f32 %v2753, %v2755
    %2758 = vrot.lane.b32.xlu0 %v2748, 104
    %v2759 = vpop.permute.xlu0 %2758
    %v2761 = vadd.f32 %v2757, %v2759
    %v2762 = vrcp.pop %v2761
    %v2763 = vmul.f32 %v2748, %v2762
    %2764 = vrot.lane.b32.xlu0 %v2605, 64
    %v2765 = vpop.permute.xlu0 %2764
    %v2768 = vsel %vm264, %v2763, 0
    %2770 = vmatpush.msra.mxu0 0.0
    %2771 = vmatpush.msra.mxu0 0.0
    %2772 = vmatpush.msra.mxu0 0.0
    %2773 = vmatpush.msra.mxu0 0.0
    %2774 = vmatpush.msra.mxu0 0.0
    %2775 = vmatpush.msra.mxu0 0.0
    %2776 = vmatpush.msra.mxu0 0.0
    %2777 = vmatpush.msra.mxu0 0.0
    %2778 = vmatpush.msra.mxu0 0.0
    %2779 = vmatpush.msra.mxu0 0.0
    %2780 = vmatpush.msra.mxu0 0.0
    %2781 = vmatpush.msra.mxu0 0.0
    %2782 = vmatpush.msra.mxu0 0.0
    %2783 = vmatpush.msra.mxu0 0.0
    %2784 = vmatpush.msra.mxu0 0.0
    %2785 = vmatpush.msra.mxu0 %v2765
    %2786 = vmatmul.f32.gmra.mxu0 %v2768
    %v2787 = vpop.f32.mrf.mxu0
    %v2788 = vadd.f32 0.0, %v2787
    %2789 = vdwg.mxu0
    %2791 = vrot.lane.b32.xlu0 %v2762, 8
    %v2792 = vpop.permute.xlu0 %2791
    %v2794 = vmul.f32 %v2748, %v2792
    %2796 = vrot.lane.b32.xlu0 %v2794, 120
    %v2797 = vpop.permute.xlu0 %2796
    %2798 = vrot.lane.b32.xlu0 %v2605, 56
    %v2799 = vpop.permute.xlu0 %2798
    %v2801 = vsel %vm264, %v2797, 0
    %2803 = vmatpush.msra.mxu0 0.0
    %2804 = vmatpush.msra.mxu0 0.0
    %2805 = vmatpush.msra.mxu0 0.0
    %2806 = vmatpush.msra.mxu0 0.0
    %2807 = vmatpush.msra.mxu0 0.0
    %2808 = vmatpush.msra.mxu0 0.0
    %2809 = vmatpush.msra.mxu0 0.0
    %2810 = vmatpush.msra.mxu0 0.0
    %2811 = vmatpush.msra.mxu0 0.0
    %2812 = vmatpush.msra.mxu0 0.0
    %2813 = vmatpush.msra.mxu0 0.0
    %2814 = vmatpush.msra.mxu0 0.0
    %2815 = vmatpush.msra.mxu0 0.0
    %2816 = vmatpush.msra.mxu0 0.0
    %2817 = vmatpush.msra.mxu0 0.0
    %2818 = vmatpush.msra.mxu0 %v2799
    %2819 = vmatmul.f32.gmra.mxu0 %v2801
    %v2820 = vpop.f32.mrf.mxu0
    %v2821 = vadd.f32 0.0, %v2820
    %2822 = vdwg.mxu0
    %2823 = vrot.lane.b32.xlu0 %v2762, 16
    %v2824 = vpop.permute.xlu0 %2823
    %v2826 = vmul.f32 %v2748, %v2824
    %2828 = vrot.lane.b32.xlu0 %v2826, 112
    %v2829 = vpop.permute.xlu0 %2828
    %2830 = vrot.lane.b32.xlu0 %v2605, 48
    %v2831 = vpop.permute.xlu0 %2830
    %v2833 = vsel %vm264, %v2829, 0
    %2835 = vmatpush.msra.mxu0 0.0
    %2836 = vmatpush.msra.mxu0 0.0
    %2837 = vmatpush.msra.mxu0 0.0
    %2838 = vmatpush.msra.mxu0 0.0
    %2839 = vmatpush.msra.mxu0 0.0
    %2840 = vmatpush.msra.mxu0 0.0
    %2841 = vmatpush.msra.mxu0 0.0
    %2842 = vmatpush.msra.mxu0 0.0
    %2843 = vmatpush.msra.mxu0 0.0
    %2844 = vmatpush.msra.mxu0 0.0
    %2845 = vmatpush.msra.mxu0 0.0
    %2846 = vmatpush.msra.mxu0 0.0
    %2847 = vmatpush.msra.mxu0 0.0
    %2848 = vmatpush.msra.mxu0 0.0
    %2849 = vmatpush.msra.mxu0 0.0
    %2850 = vmatpush.msra.mxu0 %v2831
    %2851 = vmatmul.f32.gmra.mxu0 %v2833
    %v2852 = vpop.f32.mrf.mxu0
    %v2853 = vadd.f32 0.0, %v2852
    %2854 = vdwg.mxu0
    %2855 = vrot.lane.b32.xlu0 %v2762, 24
    %v2856 = vpop.permute.xlu0 %2855
    %v2858 = vmul.f32 %v2748, %v2856
    %2860 = vrot.lane.b32.xlu0 %v2858, 104
    %v2861 = vpop.permute.xlu0 %2860
    %2862 = vrot.lane.b32.xlu0 %v2605, 40
    %v2863 = vpop.permute.xlu0 %2862
    %v2865 = vsel %vm264, %v2861, 0
    %2867 = vmatpush.msra.mxu0 0.0
    %2868 = vmatpush.msra.mxu0 0.0
    %2869 = vmatpush.msra.mxu0 0.0
    %2870 = vmatpush.msra.mxu0 0.0
    %2871 = vmatpush.msra.mxu0 0.0
    %2872 = vmatpush.msra.mxu0 0.0
    %2873 = vmatpush.msra.mxu0 0.0
    %2874 = vmatpush.msra.mxu0 0.0
    %2875 = vmatpush.msra.mxu0 0.0
    %2876 = vmatpush.msra.mxu0 0.0
    %2877 = vmatpush.msra.mxu0 0.0
    %2878 = vmatpush.msra.mxu0 0.0
    %2879 = vmatpush.msra.mxu0 0.0
    %2880 = vmatpush.msra.mxu0 0.0
    %2881 = vmatpush.msra.mxu0 0.0
    %2882 = vmatpush.msra.mxu0 %v2863
    %2883 = vmatmul.f32.gmra.mxu0 %v2865
    %v2884 = vpop.f32.mrf.mxu0
    %v2885 = vadd.f32 0.0, %v2884
    %2886 = vdwg.mxu0
    %2888 = vrot.lane.b32.xlu0 %v2821, 8
    %v2889 = vpop.permute.xlu0 %2888
    %2892 = vrot.lane.b32.xlu0 %v2853, 16
    %v2893 = vpop.permute.xlu0 %2892
    %2896 = vrot.lane.b32.xlu0 %v2885, 24
    %v2897 = vpop.permute.xlu0 %2896
    %v2899 = vsel %vm264, %v2788, %v2889
    %v2900 = vsel %vm397, %v2899, %v2893
    %v2901 = vsel %vm399, %v2900, %v2897
    %2903 = vrot.lane.b32.xlu0 %v2608, 96
    %v2904 = vpop.permute.xlu0 %2903
    %v2905 = vsel %vm264, %v2608, 0
    %v2907 = vsel %vm264, %v2904, 0
    %2909 = vmatpush.xpose.msra.mxu0 0.0
    %2910 = vmatpush.xpose.msra.mxu0 0.0
    %2911 = vmatpush.xpose.msra.mxu0 0.0
    %2912 = vmatpush.xpose.msra.mxu0 0.0
    %2913 = vmatpush.xpose.msra.mxu0 0.0
    %2914 = vmatpush.xpose.msra.mxu0 0.0
    %2915 = vmatpush.xpose.msra.mxu0 0.0
    %2916 = vmatpush.xpose.msra.mxu0 0.0
    %2917 = vmatpush.xpose.msra.mxu0 0.0
    %2918 = vmatpush.xpose.msra.mxu0 0.0
    %2919 = vmatpush.xpose.msra.mxu0 0.0
    %2920 = vmatpush.xpose.msra.mxu0 0.0
    %2921 = vmatpush.xpose.msra.mxu0 0.0
    %2922 = vmatpush.xpose.msra.mxu0 0.0
    %2923 = vmatpush.xpose.msra.mxu0 0.0
    %2924 = vmatpush.xpose.msra.mxu0 %v2907
    %2925 = vmatmul.f32.gmra.mxu0 %v2905
    %v2926 = vpop.f32.mrf.mxu0
    %v2927 = vadd.f32 0.0, %v2926
    %2928 = vdwg.mxu0
    %v2929 = vmul.f32 %v2927, 0.35355338
    %2930 = vrot.lane.b32.xlu0 %v2608, 120
    %v2931 = vpop.permute.xlu0 %2930
    %2932 = vrot.lane.b32.xlu0 %v2608, 88
    %v2933 = vpop.permute.xlu0 %2932
    %v2934 = vsel %vm264, %v2931, 0
    %v2936 = vsel %vm264, %v2933, 0
    %2938 = vmatpush.xpose.msra.mxu0 0.0
    %2939 = vmatpush.xpose.msra.mxu0 0.0
    %2940 = vmatpush.xpose.msra.mxu0 0.0
    %2941 = vmatpush.xpose.msra.mxu0 0.0
    %2942 = vmatpush.xpose.msra.mxu0 0.0
    %2943 = vmatpush.xpose.msra.mxu0 0.0
    %2944 = vmatpush.xpose.msra.mxu0 0.0
    %2945 = vmatpush.xpose.msra.mxu0 0.0
    %2946 = vmatpush.xpose.msra.mxu0 0.0
    %2947 = vmatpush.xpose.msra.mxu0 0.0
    %2948 = vmatpush.xpose.msra.mxu0 0.0
    %2949 = vmatpush.xpose.msra.mxu0 0.0
    %2950 = vmatpush.xpose.msra.mxu0 0.0
    %2951 = vmatpush.xpose.msra.mxu0 0.0
    %2952 = vmatpush.xpose.msra.mxu0 0.0
    %2953 = vmatpush.xpose.msra.mxu0 %v2936
    %2954 = vmatmul.f32.gmra.mxu0 %v2934
    %v2955 = vpop.f32.mrf.mxu0
    %v2956 = vadd.f32 0.0, %v2955
    %2957 = vdwg.mxu0
    %v2958 = vmul.f32 %v2956, 0.35355338
    %2959 = vrot.lane.b32.xlu0 %v2608, 112
    %v2960 = vpop.permute.xlu0 %2959
    %2961 = vrot.lane.b32.xlu0 %v2608, 80
    %v2962 = vpop.permute.xlu0 %2961
    %v2963 = vsel %vm264, %v2960, 0
    %v2965 = vsel %vm264, %v2962, 0
    %2967 = vmatpush.xpose.msra.mxu0 0.0
    %2968 = vmatpush.xpose.msra.mxu0 0.0
    %2969 = vmatpush.xpose.msra.mxu0 0.0
    %2970 = vmatpush.xpose.msra.mxu0 0.0
    %2971 = vmatpush.xpose.msra.mxu0 0.0
    %2972 = vmatpush.xpose.msra.mxu0 0.0
    %2973 = vmatpush.xpose.msra.mxu0 0.0
    %2974 = vmatpush.xpose.msra.mxu0 0.0
    %2975 = vmatpush.xpose.msra.mxu0 0.0
    %2976 = vmatpush.xpose.msra.mxu0 0.0
    %2977 = vmatpush.xpose.msra.mxu0 0.0
    %2978 = vmatpush.xpose.msra.mxu0 0.0
    %2979 = vmatpush.xpose.msra.mxu0 0.0
    %2980 = vmatpush.xpose.msra.mxu0 0.0
    %2981 = vmatpush.xpose.msra.mxu0 0.0
    %2982 = vmatpush.xpose.msra.mxu0 %v2965
    %2983 = vmatmul.f32.gmra.mxu0 %v2963
    %v2984 = vpop.f32.mrf.mxu0
    %v2985 = vadd.f32 0.0, %v2984
    %2986 = vdwg.mxu0
    %v2987 = vmul.f32 %v2985, 0.35355338
    %2988 = vrot.lane.b32.xlu0 %v2608, 104
    %v2989 = vpop.permute.xlu0 %2988
    %2990 = vrot.lane.b32.xlu0 %v2608, 72
    %v2991 = vpop.permute.xlu0 %2990
    %v2992 = vsel %vm264, %v2989, 0
    %v2994 = vsel %vm264, %v2991, 0
    %2996 = vmatpush.xpose.msra.mxu0 0.0
    %2997 = vmatpush.xpose.msra.mxu0 0.0
    %2998 = vmatpush.xpose.msra.mxu0 0.0
    %2999 = vmatpush.xpose.msra.mxu0 0.0
    %3000 = vmatpush.xpose.msra.mxu0 0.0
    %3001 = vmatpush.xpose.msra.mxu0 0.0
    %3002 = vmatpush.xpose.msra.mxu0 0.0
    %3003 = vmatpush.xpose.msra.mxu0 0.0
    %3004 = vmatpush.xpose.msra.mxu0 0.0
    %3005 = vmatpush.xpose.msra.mxu0 0.0
    %3006 = vmatpush.xpose.msra.mxu0 0.0
    %3007 = vmatpush.xpose.msra.mxu0 0.0
    %3008 = vmatpush.xpose.msra.mxu0 0.0
    %3009 = vmatpush.xpose.msra.mxu0 0.0
    %3010 = vmatpush.xpose.msra.mxu0 0.0
    %3011 = vmatpush.xpose.msra.mxu0 %v2994
    %3012 = vmatmul.f32.gmra.mxu0 %v2992
    %v3013 = vpop.f32.mrf.mxu0
    %v3014 = vadd.f32 0.0, %v3013
    %3015 = vdwg.mxu0
    %v3016 = vmul.f32 %v3014, 0.35355338
    %v3017 = vmax.f32 %v2929, %v2958
    %v3018 = vmax.f32 %v3017, %v2987
    %v3019 = vmax.f32 %v3018, %v3016
    %v3020 = vsub.f32 %v2929, %v3019
    %v3021 = vsub.f32 %v2958, %v3019
    %v3022 = vsub.f32 %v2987, %v3019
    %v3023 = vsub.f32 %v3016, %v3019
    %3025 = vrot.lane.b32.xlu0 %v3021, 8
    %v3026 = vpop.permute.xlu0 %3025
    %3029 = vrot.lane.b32.xlu0 %v3022, 16
    %v3030 = vpop.permute.xlu0 %3029
    %3033 = vrot.lane.b32.xlu0 %v3023, 24
    %v3034 = vpop.permute.xlu0 %3033
    %v3036 = vsel %vm264, %v3020, %v3026
    %v3037 = vsel %vm397, %v3036, %v3030
    %v3038 = vsel %vm399, %v3037, %v3034
    %v3039 = vmul.f32 %v3038, 1.442695
    %v3040 = vpow.pop %v3039
    %3042 = vrot.lane.b32.xlu0 %v3040, 120
    %v3043 = vpop.permute.xlu0 %3042
    %v3045 = vadd.f32 %v3040, %v3043
    %3046 = vrot.lane.b32.xlu0 %v3040, 112
    %v3047 = vpop.permute.xlu0 %3046
    %v3049 = vadd.f32 %v3045, %v3047
    %3050 = vrot.lane.b32.xlu0 %v3040, 104
    %v3051 = vpop.permute.xlu0 %3050
    %v3053 = vadd.f32 %v3049, %v3051
    %v3054 = vrcp.pop %v3053
    %v3055 = vmul.f32 %v3040, %v3054
    %3056 = vrot.lane.b32.xlu0 %v2608, 64
    %v3057 = vpop.permute.xlu0 %3056
    %v3060 = vsel %vm264, %v3055, 0
    %3062 = vmatpush.msra.mxu0 0.0
    %3063 = vmatpush.msra.mxu0 0.0
    %3064 = vmatpush.msra.mxu0 0.0
    %3065 = vmatpush.msra.mxu0 0.0
    %3066 = vmatpush.msra.mxu0 0.0
    %3067 = vmatpush.msra.mxu0 0.0
    %3068 = vmatpush.msra.mxu0 0.0
    %3069 = vmatpush.msra.mxu0 0.0
    %3070 = vmatpush.msra.mxu0 0.0
    %3071 = vmatpush.msra.mxu0 0.0
    %3072 = vmatpush.msra.mxu0 0.0
    %3073 = vmatpush.msra.mxu0 0.0
    %3074 = vmatpush.msra.mxu0 0.0
    %3075 = vmatpush.msra.mxu0 0.0
    %3076 = vmatpush.msra.mxu0 0.0
    %3077 = vmatpush.msra.mxu0 %v3057
    %3078 = vmatmul.f32.gmra.mxu0 %v3060
    %v3079 = vpop.f32.mrf.mxu0
    %v3080 = vadd.f32 0.0, %v3079
    %3081 = vdwg.mxu0
    %3083 = vrot.lane.b32.xlu0 %v3054, 8
    %v3084 = vpop.permute.xlu0 %3083
    %v3086 = vmul.f32 %v3040, %v3084
    %3088 = vrot.lane.b32.xlu0 %v3086, 120
    %v3089 = vpop.permute.xlu0 %3088
    %3090 = vrot.lane.b32.xlu0 %v2608, 56
    %v3091 = vpop.permute.xlu0 %3090
    %v3093 = vsel %vm264, %v3089, 0
    %3095 = vmatpush.msra.mxu0 0.0
    %3096 = vmatpush.msra.mxu0 0.0
    %3097 = vmatpush.msra.mxu0 0.0
    %3098 = vmatpush.msra.mxu0 0.0
    %3099 = vmatpush.msra.mxu0 0.0
    %3100 = vmatpush.msra.mxu0 0.0
    %3101 = vmatpush.msra.mxu0 0.0
    %3102 = vmatpush.msra.mxu0 0.0
    %3103 = vmatpush.msra.mxu0 0.0
    %3104 = vmatpush.msra.mxu0 0.0
    %3105 = vmatpush.msra.mxu0 0.0
    %3106 = vmatpush.msra.mxu0 0.0
    %3107 = vmatpush.msra.mxu0 0.0
    %3108 = vmatpush.msra.mxu0 0.0
    %3109 = vmatpush.msra.mxu0 0.0
    %3110 = vmatpush.msra.mxu0 %v3091
    %3111 = vmatmul.f32.gmra.mxu0 %v3093
    %v3112 = vpop.f32.mrf.mxu0
    %v3113 = vadd.f32 0.0, %v3112
    %3114 = vdwg.mxu0
    %3115 = vrot.lane.b32.xlu0 %v3054, 16
    %v3116 = vpop.permute.xlu0 %3115
    %v3118 = vmul.f32 %v3040, %v3116
    %3120 = vrot.lane.b32.xlu0 %v3118, 112
    %v3121 = vpop.permute.xlu0 %3120
    %3122 = vrot.lane.b32.xlu0 %v2608, 48
    %v3123 = vpop.permute.xlu0 %3122
    %v3125 = vsel %vm264, %v3121, 0
    %3127 = vmatpush.msra.mxu0 0.0
    %3128 = vmatpush.msra.mxu0 0.0
    %3129 = vmatpush.msra.mxu0 0.0
    %3130 = vmatpush.msra.mxu0 0.0
    %3131 = vmatpush.msra.mxu0 0.0
    %3132 = vmatpush.msra.mxu0 0.0
    %3133 = vmatpush.msra.mxu0 0.0
    %3134 = vmatpush.msra.mxu0 0.0
    %3135 = vmatpush.msra.mxu0 0.0
    %3136 = vmatpush.msra.mxu0 0.0
    %3137 = vmatpush.msra.mxu0 0.0
    %3138 = vmatpush.msra.mxu0 0.0
    %3139 = vmatpush.msra.mxu0 0.0
    %3140 = vmatpush.msra.mxu0 0.0
    %3141 = vmatpush.msra.mxu0 0.0
    %3142 = vmatpush.msra.mxu0 %v3123
    %3143 = vmatmul.f32.gmra.mxu0 %v3125
    %v3144 = vpop.f32.mrf.mxu0
    %v3145 = vadd.f32 0.0, %v3144
    %3146 = vdwg.mxu0
    %3147 = vrot.lane.b32.xlu0 %v3054, 24
    %v3148 = vpop.permute.xlu0 %3147
    %v3150 = vmul.f32 %v3040, %v3148
    %3152 = vrot.lane.b32.xlu0 %v3150, 104
    %v3153 = vpop.permute.xlu0 %3152
    %3154 = vrot.lane.b32.xlu0 %v2608, 40
    %v3155 = vpop.permute.xlu0 %3154
    %v3157 = vsel %vm264, %v3153, 0
    %3159 = vmatpush.msra.mxu0 0.0
    %3160 = vmatpush.msra.mxu0 0.0
    %3161 = vmatpush.msra.mxu0 0.0
    %3162 = vmatpush.msra.mxu0 0.0
    %3163 = vmatpush.msra.mxu0 0.0
    %3164 = vmatpush.msra.mxu0 0.0
    %3165 = vmatpush.msra.mxu0 0.0
    %3166 = vmatpush.msra.mxu0 0.0
    %3167 = vmatpush.msra.mxu0 0.0
    %3168 = vmatpush.msra.mxu0 0.0
    %3169 = vmatpush.msra.mxu0 0.0
    %3170 = vmatpush.msra.mxu0 0.0
    %3171 = vmatpush.msra.mxu0 0.0
    %3172 = vmatpush.msra.mxu0 0.0
    %3173 = vmatpush.msra.mxu0 0.0
    %3174 = vmatpush.msra.mxu0 %v3155
    %3175 = vmatmul.f32.gmra.mxu0 %v3157
    %v3176 = vpop.f32.mrf.mxu0
    %v3177 = vadd.f32 0.0, %v3176
    %3178 = vdwg.mxu0
    %3180 = vrot.lane.b32.xlu0 %v3113, 8
    %v3181 = vpop.permute.xlu0 %3180
    %3184 = vrot.lane.b32.xlu0 %v3145, 16
    %v3185 = vpop.permute.xlu0 %3184
    %3188 = vrot.lane.b32.xlu0 %v3177, 24
    %v3189 = vpop.permute.xlu0 %3188
    %v3191 = vsel %vm264, %v3080, %v3181
    %v3192 = vsel %vm397, %v3191, %v3185
    %v3193 = vsel %vm399, %v3192, %v3189
    %v3195 = vperm.slane %v2577, 0
    %v3198 = vsel %vm183, %v2901, 0
    %v3201 = vsel %vm183, %v3193, 0
    %3203 = vmatpush.msra.mxu0 0.0
    %3204 = vmatpush.msra.mxu0 0.0
    %3205 = vmatpush.msra.mxu0 0.0
    %3206 = vmatpush.msra.mxu0 0.0
    %3207 = vmatpush.msra.mxu0 0.0
    %3208 = vmatpush.msra.mxu0 0.0
    %3209 = vmatpush.msra.mxu0 0.0
    %3210 = vmatpush.msra.mxu0 0.0
    %3211 = vmatpush.msra.mxu0 0.0
    %3212 = vmatpush.msra.mxu0 0.0
    %3213 = vmatpush.msra.mxu0 0.0
    %3214 = vmatpush.msra.mxu0 0.0
    %3215 = vmatpush.msra.mxu0 %v2575
    %3216 = vmatpush.msra.mxu0 %v2574
    %3217 = vmatpush.msra.mxu0 %v2573
    %3218 = vmatpush.msra.mxu0 %v2572
    %3219 = vmatmul.f32.gmra.mxu0 %v3198
    %v3220 = vpop.f32.mrf.mxu0
    %v3221 = vadd.f32 %v3195, %v3220
    %3222 = vmatmul.f32.gmra.mxu0 %v3201
    %v3223 = vpop.f32.mrf.mxu0
    %v3224 = vadd.f32 %v3195, %v3223
    %3225 = vdwg.mxu0
    %v3226 = vadd.f32 %v3221, %v2562
    %v3227 = vadd.f32 %v3224, %v2563
    %s3228 = scalar_lea.vmem %s7, 4
    %v3229 = vld [vmem:[%s3228] sm:$0x1]
    %s3230 = scalar_lea.vmem %s8, 4
    %v3231 = vld [vmem:[%s3230] sm:$0x1]
    %v3232 = vsel %vm183, %v3226, 0.0
    %3233 = vadd.xlane.f32.xlu0 %v3232
    %v3234 = vpop.xlane.xlu0 %3233
    %v3235 = vsel %vm183, %v3227, 0.0
    %3236 = vadd.xlane.f32.xlu0 %v3235
    %v3237 = vpop.xlane.xlu0 %3236
    %v3238 = vmul.f32 %v3234, %v892
    %v3239 = vmul.f32 %v3237, %v892
    %v3240 = vsub.f32 %v3226, %v3238
    %v3241 = vsub.f32 %v3227, %v3239
    %v3242 = vmul.f32 %v3240, %v3240
    %v3243 = vmul.f32 %v3241, %v3241
    %v3244 = vsel %vm183, %v3242, 0.0
    %3245 = vadd.xlane.f32.xlu0 %v3244
    %v3246 = vpop.xlane.xlu0 %3245
    %v3247 = vsel %vm183, %v3243, 0.0
    %3248 = vadd.xlane.f32.xlu0 %v3247
    %v3249 = vpop.xlane.xlu0 %3248
    %v3250 = vmul.f32 %v3246, %v892
    %v3251 = vmul.f32 %v3249, %v892
    %v3252 = vadd.f32 %v3250, 1e-05
    %v3253 = vadd.f32 %v3251, 1e-05
    %v3254 = vrsqrt.pop %v3252
    %v3255 = vmul.f32 %v3254, %v3252
    %v3256 = vmul.f32 %v3255, %v3254
    %v3257 = vmul.f32 0.5, %v3256
    %v3258 = vsub.f32 1.5, %v3257
    %v3259 = vmul.f32 %v3254, %v3258
    %vm3260 = vweird.f32 %v3252
    %vm3261 = vweird.f32 %v3254
    %vm3262 = vmor %vm3260, %vm3261
    %v3263 = vsel %vm3262, %v3254, %v3259
    %v3264 = vrsqrt.pop %v3253
    %v3265 = vmul.f32 %v3264, %v3253
    %v3266 = vmul.f32 %v3265, %v3264
    %v3267 = vmul.f32 0.5, %v3266
    %v3268 = vsub.f32 1.5, %v3267
    %v3269 = vmul.f32 %v3264, %v3268
    %vm3270 = vweird.f32 %v3253
    %vm3271 = vweird.f32 %v3264
    %vm3272 = vmor %vm3270, %vm3271
    %v3273 = vsel %vm3272, %v3264, %v3269
    %v3274 = vmul.f32 %v3240, %v3263
    %v3275 = vmul.f32 %v3241, %v3273
    %v3277 = vperm.slane %v3229, 0
    %v3279 = vmul.f32 %v3274, %v3277
    %v3280 = vmul.f32 %v3275, %v3277
    %v3282 = vperm.slane %v3231, 0
    %v3284 = vadd.f32 %v3279, %v3282
    %v3285 = vadd.f32 %v3280, %v3282
    %s3286 = scalar_lea.vmem [#allocation10], 32
    %v3287 = vld [vmem:[%s3286] sm:$0xff]
    %v3288 = vld [vmem:[%s3286 + $0x8] sm:$0xff]
    %v3289 = vld [vmem:[%s3286 + $0x10] sm:$0xff]
    %v3290 = vld [vmem:[%s3286 + $0x18] sm:$0xff]
    %s3291 = scalar_lea.vmem [#allocation11], 1
    %v3292 = vld [vmem:[%s3291] sm:$0x1]
    %v3294 = vperm.slane %v3292, 0
    %v3297 = vsel %vm183, %v3284, 0
    %v3300 = vsel %vm183, %v3285, 0
    %3302 = vmatpush.msra.mxu0 0.0
    %3303 = vmatpush.msra.mxu0 0.0
    %3304 = vmatpush.msra.mxu0 0.0
    %3305 = vmatpush.msra.mxu0 0.0
    %3306 = vmatpush.msra.mxu0 0.0
    %3307 = vmatpush.msra.mxu0 0.0
    %3308 = vmatpush.msra.mxu0 0.0
    %3309 = vmatpush.msra.mxu0 0.0
    %3310 = vmatpush.msra.mxu0 0.0
    %3311 = vmatpush.msra.mxu0 0.0
    %3312 = vmatpush.msra.mxu0 0.0
    %3313 = vmatpush.msra.mxu0 0.0
    %3314 = vmatpush.msra.mxu0 %v3290
    %3315 = vmatpush.msra.mxu0 %v3289
    %3316 = vmatpush.msra.mxu0 %v3288
    %3317 = vmatpush.msra.mxu0 %v3287
    %3318 = vmatmul.f32.gmra.mxu0 %v3297
    %v3319 = vpop.f32.mrf.mxu0
    %v3320 = vadd.f32 %v3294, %v3319
    %3321 = vmatmul.f32.gmra.mxu0 %v3300
    %v3322 = vpop.f32.mrf.mxu0
    %v3323 = vadd.f32 %v3294, %v3322
    %3324 = vdwg.mxu0
    %v3325 = vmax.f32 %v3320, 0.0
    %v3326 = vmax.f32 %v3323, 0.0
    %s3327 = scalar_lea.vmem %s11, 64
    %v3328 = vld [vmem:[%s3327] sm:$0xff]
    %v3329 = vld [vmem:[%s3327 + $0x8] sm:$0xff]
    %v3330 = vld [vmem:[%s3327 + $0x10] sm:$0xff]
    %v3331 = vld [vmem:[%s3327 + $0x18] sm:$0xff]
    %v3332 = vld [vmem:[%s3327 + $0x20] sm:$0xff]
    %v3333 = vld [vmem:[%s3327 + $0x28] sm:$0xff]
    %v3334 = vld [vmem:[%s3327 + $0x30] sm:$0xff]
    %v3335 = vld [vmem:[%s3327 + $0x38] sm:$0xff]
    %s3336 = scalar_lea.vmem [#allocation13], 1
    %v3337 = vld [vmem:[%s3336] sm:$0x1]
    %v3339 = vperm.slane %v3337, 0
    %v3342 = vsel %vm1714, %v3325, 0
    %v3345 = vsel %vm1714, %v3326, 0
    %3347 = vmatpush.msra.mxu0 0.0
    %3348 = vmatpush.msra.mxu0 0.0
    %3349 = vmatpush.msra.mxu0 0.0
    %3350 = vmatpush.msra.mxu0 0.0
    %3351 = vmatpush.msra.mxu0 0.0
    %3352 = vmatpush.msra.mxu0 0.0
    %3353 = vmatpush.msra.mxu0 0.0
    %3354 = vmatpush.msra.mxu0 0.0
    %3355 = vmatpush.msra.mxu0 %v3335
    %3356 = vmatpush.msra.mxu0 %v3334
    %3357 = vmatpush.msra.mxu0 %v3333
    %3358 = vmatpush.msra.mxu0 %v3332
    %3359 = vmatpush.msra.mxu0 %v3331
    %3360 = vmatpush.msra.mxu0 %v3330
    %3361 = vmatpush.msra.mxu0 %v3329
    %3362 = vmatpush.msra.mxu0 %v3328
    %3363 = vmatmul.f32.gmra.mxu0 %v3342
    %v3364 = vpop.f32.mrf.mxu0
    %v3365 = vadd.f32 %v3339, %v3364
    %3366 = vmatmul.f32.gmra.mxu0 %v3345
    %v3367 = vpop.f32.mrf.mxu0
    %v3368 = vadd.f32 %v3339, %v3367
    %3369 = vdwg.mxu0
    %v3370 = vadd.f32 %v3365, %v3284
    %v3371 = vadd.f32 %v3368, %v3285
    %s3372 = scalar_lea.vmem %s7, 5
    %v3373 = vld [vmem:[%s3372] sm:$0x1]
    %s3374 = scalar_lea.vmem %s8, 5
    %v3375 = vld [vmem:[%s3374] sm:$0x1]
    %v3376 = vsel %vm183, %v3370, 0.0
    %3377 = vadd.xlane.f32.xlu0 %v3376
    %v3378 = vpop.xlane.xlu0 %3377
    %v3379 = vsel %vm183, %v3371, 0.0
    %3380 = vadd.xlane.f32.xlu0 %v3379
    %v3381 = vpop.xlane.xlu0 %3380
    %v3382 = vmul.f32 %v3378, %v892
    %v3383 = vmul.f32 %v3381, %v892
    %v3384 = vsub.f32 %v3370, %v3382
    %v3385 = vsub.f32 %v3371, %v3383
    %v3386 = vmul.f32 %v3384, %v3384
    %v3387 = vmul.f32 %v3385, %v3385
    %v3388 = vsel %vm183, %v3386, 0.0
    %3389 = vadd.xlane.f32.xlu0 %v3388
    %v3390 = vpop.xlane.xlu0 %3389
    %v3391 = vsel %vm183, %v3387, 0.0
    %3392 = vadd.xlane.f32.xlu0 %v3391
    %v3393 = vpop.xlane.xlu0 %3392
    %v3394 = vmul.f32 %v3390, %v892
    %v3395 = vmul.f32 %v3393, %v892
    %v3396 = vadd.f32 %v3394, 1e-05
    %v3397 = vadd.f32 %v3395, 1e-05
    %v3398 = vrsqrt.pop %v3396
    %v3399 = vmul.f32 %v3398, %v3396
    %v3400 = vmul.f32 %v3399, %v3398
    %v3401 = vmul.f32 0.5, %v3400
    %v3402 = vsub.f32 1.5, %v3401
    %v3403 = vmul.f32 %v3398, %v3402
    %vm3404 = vweird.f32 %v3396
    %vm3405 = vweird.f32 %v3398
    %vm3406 = vmor %vm3404, %vm3405
    %v3407 = vsel %vm3406, %v3398, %v3403
    %v3408 = vrsqrt.pop %v3397
    %v3409 = vmul.f32 %v3408, %v3397
    %v3410 = vmul.f32 %v3409, %v3408
    %v3411 = vmul.f32 0.5, %v3410
    %v3412 = vsub.f32 1.5, %v3411
    %v3413 = vmul.f32 %v3408, %v3412
    %vm3414 = vweird.f32 %v3397
    %vm3415 = vweird.f32 %v3408
    %vm3416 = vmor %vm3414, %vm3415
    %v3417 = vsel %vm3416, %v3408, %v3413
    %v3418 = vmul.f32 %v3384, %v3407
    %v3419 = vmul.f32 %v3385, %v3417
    %v3421 = vperm.slane %v3373, 0
    %v3423 = vmul.f32 %v3418, %v3421
    %v3424 = vmul.f32 %v3419, %v3421
    %v3426 = vperm.slane %v3375, 0
    %v3428 = vadd.f32 %v3423, %v3426
    %v3429 = vadd.f32 %v3424, %v3426
    %v3430 = vld [vmem:[%s13] sm:$0xff]
    %v3431 = vld [vmem:[%s13 + $0x8] sm:$0xff]
    %v3432 = vld [vmem:[%s13 + $0x10] sm:$0xff]
    %v3433 = vld [vmem:[%s13 + $0x18] sm:$0xff]
    %v3434 = vld [vmem:[%s14] sm:$0x1]
    %v3436 = vperm.slane %v3434, 0
    %v3439 = vsel %vm183, %v3428, 0
    %v3442 = vsel %vm183, %v3429, 0
    %3444 = vmatpush.msra.mxu0 0.0
    %3445 = vmatpush.msra.mxu0 0.0
    %3446 = vmatpush.msra.mxu0 0.0
    %3447 = vmatpush.msra.mxu0 0.0
    %3448 = vmatpush.msra.mxu0 0.0
    %3449 = vmatpush.msra.mxu0 0.0
    %3450 = vmatpush.msra.mxu0 0.0
    %3451 = vmatpush.msra.mxu0 0.0
    %3452 = vmatpush.msra.mxu0 0.0
    %3453 = vmatpush.msra.mxu0 0.0
    %3454 = vmatpush.msra.mxu0 0.0
    %3455 = vmatpush.msra.mxu0 0.0
    %3456 = vmatpush.msra.mxu0 %v3433
    %3457 = vmatpush.msra.mxu0 %v3432
    %3458 = vmatpush.msra.mxu0 %v3431
    %3459 = vmatpush.msra.mxu0 %v3430
    %3460 = vmatmul.f32.gmra.mxu0 %v3439
    %v3461 = vpop.f32.mrf.mxu0
    %v3462 = vadd.f32 %v3436, %v3461
    %3463 = vmatmul.f32.gmra.mxu0 %v3442
    %v3464 = vpop.f32.mrf.mxu0
    %v3465 = vadd.f32 %v3436, %v3464
    %3466 = vdwg.mxu0
    %3467 = vst.msk [vmem:[#allocation14] sm:$0xff] %vm183, %v3462
    %3468 = vst.msk [vmem:[#allocation14 + $0x8] sm:$0xff] %vm183, %v3465
    // Predicated region
    $region90: #{decoder_forward_pallas.1} parent=1 // pred_check
      _
    $region91: #{decoder_forward_pallas.1} parent=1 // pred_check_branch
      %3470 = sbr.rel (0) target = $region93
    $region92: #{decoder_forward_pallas.1} parent=1 // pred_region
      %3472 = vsyncadd [#allocation4], 0
      %s3473 = sshll.u32 [#allocation14], 4
      %s3474 = int_to_ptr.vmem [resolvable:$true] %s3473
      %s3475 = sshll.u32 %s15, 4
      %s3476 = int_to_ptr.hbm [resolvable:$true] %s3475
      %3481 = dma.vmem_to_hbm [thread:$0]  %s3474, 256, %s3476, [#allocation4], 128, 128, 8
    $region93: #{decoder_forward_pallas.1} parent=1 // pred_fallthru
      _
    // Predicated region
    $region94: #{decoder_forward_pallas.1} parent=1 // pred_check
      _
    $region95: #{decoder_forward_pallas.1} parent=1 // pred_check_branch
      %3483 = sbr.rel (0) target = $region97
    $region96: #{decoder_forward_pallas.1} parent=1 // pred_region
      %3485 = dma.done [#allocation4], 256
    $region97: #{decoder_forward_pallas.1} parent=1 // pred_fallthru
      _
    %3486 = vsyncpa [#allocation3], 1
    %3487 = vsyncpa [#allocation6], 1
    %3488 = vsyncpa [#allocation9], 1
    %3489 = vsyncpa [#allocation12], 1
    %3490 = vsyncpa [#allocation4], 1

</llo_original>
